<compile_context>
chip_gen: v7x
topology: tpu7x:2x2x1
jax: 0.10.0
libtpu: 0.0.40
codegen_flags: <defaults>
</compile_context>

<pallas_src>
import jax
import jax.numpy as jnp
from jax import lax
from jax.experimental import pallas as pl
from jax.experimental.pallas import tpu as pltpu

_C = 128            # every channel axis zero-padded to one full lane tile
_NCLASS = 10
_B_TILE = 8         # images per grid step (multiple of 8 -> unmasked (8,128) stores)

# conv1: 16x16 interior; input = zero-padded 18x18 image flattened row-major
# (row stride 18, interior origin 19).  Flat output row of pixel (h,w) is 18h + w.
_S1, _A1, _H1, _W1 = 18, 19, 16, 16
_L1 = (_H1 - 1) * _S1 + _W1            # 286 conv-output rows actually consumed
_CH1 = 96                              # conv1 row chunk (bounds the acc live range)
_NCH1 = -(-_L1 // _CH1)                # 3 chunks
_L1P = _NCH1 * _CH1                    # 288 rows computed (over-compute, never read)
_XROWS = 328                           # >= max tap start (38) + _L1P, multiple of 8

# conv2: 8x8 interior in a zero-padded flat buffer, stride 16, origin 24 (8-aligned).
_S2, _A2, _H2, _W2 = 16, 24, 8, 8
_L2 = (_H2 - 1) * _S2 + _W2            # 120
_SZ2 = _A2 + _H2 * _S2 + _W2 + 1       # 161

# conv3: 4x4 interior, stride 8, origin 16.
_S3, _A3, _H3, _W3 = 8, 16, 4, 4
_L3 = (_H3 - 1) * _S3 + _W3            # 28
_SZ3 = _A3 + _H3 * _S3 + _W3 + 1       # 53


# ------------------------------ fused kernel -------------------------------- #

def _fused_forward_kernel(x_ref, w1, s1, b1, w2, s2, b2, w3, s3, b3, fcw, fcb,
                          out_ref, pad2, pad3, y1sc, y2sc, gap_sc):
    f32 = jnp.float32
    bf16 = jnp.bfloat16

    # Halo rows of the padded conv inputs stay zero for the whole step; the
    # interior rows are fully rewritten for every image by the pool epilogue.
    pad2[...] = jnp.zeros_like(pad2)
    pad3[...] = jnp.zeros_like(pad3)

    # Hoisted loop-invariant per-channel vectors / conv1 tap rows.
    w1r = [w1[k:k + 1, :] for k in range(9)]          # nine (1, 128) f32 rows
    s1v, b1v = s1[...], b1[...]
    s2v, b2v = s2[...], b2[...]
    s3v, b3v = s3[...], b3[...]

    def conv_mxu(src_ref, w_ref, sv, bv, S, A, L):
        # 3x3 SAME conv = 9 shifted contiguous-window MXU matmuls (bf16 operands,
        # f32 accumulate), then folded-BN + ReLU epilogue in f32.
        acc = jnp.zeros((L, _C), f32)
        for kh in range(3):
            for kw in range(3):
                start = A + (kh - 1) * S + (kw - 1)
                acc = acc + jnp.dot(src_ref[start:start + L, :], w_ref[kh, kw],
                                    preferred_element_type=f32)
        return jnp.maximum(acc * sv + bv, 0.0)         # (L, 128) f32

    def maxpool_into(src_ref, S_src, dst_ref, S_dst, A_dst, H_dst, W_dst):
        # 2x2 stride-2 max pool (src row index = h*S_src + w), written straight
        # into the next layer's zero-padded flat input buffer (cast to its dtype).
        for p in range(H_dst):
            cand = [src_ref[pl.ds((2 * p + a) * S_src + b, W_dst, 2), :]
                    for a in range(2) for b in range(2)]
            row = jnp.maximum(jnp.maximum(cand[0], cand[1]),
                              jnp.maximum(cand[2], cand[3]))
            r0 = A_dst + p * S_dst                     # multiple of 8
            dst_ref[r0:r0 + W_dst, :] = row.astype(dst_ref.dtype)

    @pl.loop(0, _B_TILE)
    def _per_image(img):
        # ---- conv1 (cin=1) on the VPU: 9 broadcast MACs, row-chunked ----
        @pl.loop(0, _NCH1)
        def _chunk(c):
            r0 = pl.multiple_of(c * _CH1, 32)
            acc = jnp.zeros((_CH1, _C), f32)
            for kh in range(3):
                for kw in range(3):
                    start = _A1 + (kh - 1) * _S1 + (kw - 1)
                    col = x_ref[img, pl.ds(start + r0, _CH1), :]   # (_CH1, 1) f32
                    acc = acc + col * w1r[kh * 3 + kw]             # outer product
            y1sc[pl.ds(r0, _CH1), :] = jnp.maximum(acc * s1v + b1v, 0.0)

        maxpool_into(y1sc, _S1, pad2, _S2, _A2, _H2, _W2)

        # ---- conv2 (20->32) on the MXU + 2x2 pool ----
        y2sc[...] = conv_mxu(pad2, w2, s2v, b2v, _S2, _A2, _L2)
        maxpool_into(y2sc, _S2, pad3, _S3, _A3, _H3, _W3)

        # ---- conv3 (32->40) on the MXU; GAP straight from the register acc ----
        y3 = conv_mxu(pad3, w3, s3v, b3v, _S3, _A3, _L3)           # (28, 128) f32
        tot = y3[0:_W3, :]
        for h in range(1, _H3):
            tot = tot + y3[h * _S3:h * _S3 + _W3, :]
        gap = jnp.sum(tot, axis=0, keepdims=True) * (1.0 / (_H3 * _W3))
        gap_sc[pl.ds(img, 1), :] = gap

    # ---- batched FC + log_softmax for the whole image tile ----
    logits = jnp.dot(gap_sc[...].astype(bf16), fcw[...],
                     preferred_element_type=f32) + fcb[...]        # (B_TILE, 128)
    m = jnp.max(logits, axis=-1, keepdims=True)
    z = logits - m
    lse = jnp.log(jnp.sum(jnp.exp(z), axis=-1, keepdims=True))
    out_ref[...] = z - lse                                         # log_softmax


# --------------------------------- wrapper ----------------------------------- #

def _fold_bn(p, eps=1e-5):
    scale = p["gamma"] / jnp.sqrt(p["var"] + eps)
    shift = (p["bias"] - p["mean"]) * scale + p["beta"]
    return scale, shift


def _conv_mxu_args(p):
    cin, cout = p["w"].shape[2], p["w"].shape[3]
    w = jnp.zeros((3, 3, _C, _C), jnp.float32).at[:, :, :cin, :cout].set(p["w"])
    scale, shift = _fold_bn(p)
    s = jnp.zeros((1, _C), jnp.float32).at[0, :cout].set(scale)
    b = jnp.zeros((1, _C), jnp.float32).at[0, :cout].set(shift)
    return w.astype(jnp.bfloat16), s, b


def _conv1_args(p):
    cout = p["w"].shape[3]                                     # (3, 3, 1, cout)
    w = jnp.zeros((9, _C), jnp.float32).at[:, :cout].set(p["w"].reshape(9, cout))
    scale, shift = _fold_bn(p)
    s = jnp.zeros((1, _C), jnp.float32).at[0, :cout].set(scale)
    b = jnp.zeros((1, _C), jnp.float32).at[0, :cout].set(shift)
    return w, s, b                                             # f32 (VPU path)


def _build_conv1_input(x_nchw):
    """(N,1,16,16) NCHW -> zero-padded 18x18 rows, flattened: (N, _XROWS, 1) f32."""
    x = x_nchw[:, 0].astype(jnp.float32)                       # (N, 16, 16)
    x = jnp.pad(x, ((0, 0), (1, 1), (1, 1)))                   # (N, 18, 18) halo
    x = x.reshape(x.shape[0], (_H1 + 2) * _S1)                 # (N, 324), origin 19
    x = jnp.pad(x, ((0, 0), (0, _XROWS - x.shape[1])))         # chunk over-compute pad
    return x[:, :, None]                                       # (N, 328, 1)


@jax.jit
def mnistnet_forward(x_nchw, params):
    assert x_nchw.shape[1:] == (1, 16, 16), x_nchw.shape
    N = x_nchw.shape[0]
    n_pad = (-N) % _B_TILE
    x = _build_conv1_input(x_nchw)
    if n_pad:
        x = jnp.pad(x, ((0, n_pad), (0, 0), (0, 0)))
    Np = N + n_pad

    w1, s1, b1 = _conv1_args(params["conv1"])
    w2, s2, b2 = _conv_mxu_args(params["conv2"])
    w3, s3, b3 = _conv_mxu_args(params["conv3"])
    fcw = jnp.zeros((_C, _C), jnp.float32).at[:40, :_NCLASS].set(
        params["fc"]["w"]).astype(jnp.bfloat16)
    # -1e30 bias on padded class lanes keeps them out of the softmax;
    # the wrapper's [:, :10] slice below is load-bearing.
    fcb = jnp.full((1, _C), -1e30, jnp.float32).at[0, :_NCLASS].set(params["fc"]["b"])

    def _whole(*shape):
        return pl.BlockSpec(shape, lambda n: (0,) * len(shape))

    out = pl.pallas_call(
        _fused_forward_kernel,
        out_shape=jax.ShapeDtypeStruct((Np, _C), jnp.float32),
        grid=(Np // _B_TILE,),
        in_specs=[
            pl.BlockSpec((_B_TILE, _XROWS, 1), lambda n: (n, 0, 0)),
            _whole(9, _C), _whole(1, _C), _whole(1, _C),
            _whole(3, 3, _C, _C), _whole(1, _C), _whole(1, _C),
            _whole(3, 3, _C, _C), _whole(1, _C), _whole(1, _C),
            _whole(_C, _C), _whole(1, _C),
        ],
        out_specs=pl.BlockSpec((_B_TILE, _C), lambda n: (n, 0)),
        scratch_shapes=[
            pltpu.VMEM((_SZ2, _C), jnp.bfloat16),     # conv2 padded flat input
            pltpu.VMEM((_SZ3, _C), jnp.bfloat16),     # conv3 padded flat input
            pltpu.VMEM((_L1P, _C), jnp.float32),      # conv1 output rows
            pltpu.VMEM((_L2, _C), jnp.float32),       # conv2 output rows
            pltpu.VMEM((_B_TILE, _C), jnp.float32),   # per-image GAP rows
        ],
        compiler_params=pltpu.CompilerParams(
            dimension_semantics=("parallel",)),
    )(x, w1, s1, b1, w2, s2, b2, w3, s3, b3, fcw, fcb)
    return out[:N, :_NCLASS]


# ------------------------- pure-JAX reference (check) ----------------------- #

def reference_forward(x_nchw, params, eps=1e-5):
    x = jnp.transpose(x_nchw, (0, 2, 3, 1)).astype(jnp.float32)

    def block(x, p):
        y = lax.conv_general_dilated(
            x, p["w"], window_strides=(1, 1), padding="SAME",
            dimension_numbers=("NHWC", "HWIO", "NHWC"))
        y = y + p["bias"]
        y = p["gamma"] * (y - p["mean"]) / jnp.sqrt(p["var"] + eps) + p["beta"]
        return jnp.maximum(y, 0.0)

    def pool(x):
        return lax.reduce_window(x, -jnp.inf, lax.max, (1, 2, 2, 1), (1, 2, 2, 1), "VALID")

    x = pool(block(x, params["conv1"]))
    x = pool(block(x, params["conv2"]))
    x = block(x, params["conv3"])
    g = jnp.mean(x, axis=(1, 2))                        # GAP -> (N, 40)
    logits = g @ params["fc"]["w"] + params["fc"]["b"]
    return jax.nn.log_softmax(logits, axis=1)


# --------------------------------- main ------------------------------------- #

def make_params(key):
    def conv_params(key, cin, cout):
        ks = jax.random.split(key, 6)
        return {
            "w": 0.1 * jax.random.normal(ks[0], (3, 3, cin, cout), jnp.float32),
            "bias": 0.1 * jax.random.normal(ks[1], (cout,), jnp.float32),
            "gamma": 1.0 + 0.1 * jax.random.normal(ks[2], (cout,), jnp.float32),
            "beta": 0.1 * jax.random.normal(ks[3], (cout,), jnp.float32),
            "mean": 0.1 * jax.random.normal(ks[4], (cout,), jnp.float32),
            "var": 0.5 + jnp.abs(jax.random.normal(ks[5], (cout,), jnp.float32)),
        }

    k1, k2, k3, k4, k5 = jax.random.split(key, 5)
    return {
        "conv1": conv_params(k1, 1, 20),
        "conv2": conv_params(k2, 20, 32),
        "conv3": conv_params(k3, 32, 40),
        "fc": {
            "w": 0.1 * jax.random.normal(k4, (40, 10), jnp.float32),
            "b": 0.1 * jax.random.normal(k5, (10,), jnp.float32),
        },
    }


if __name__ == "__main__":
    key = jax.random.PRNGKey(0)
    kx, kp = jax.random.split(key)

    # batch=16 (2 grid steps of 8 images, keeps both v7x TensorCores busy),
    # 1 channel, 16x16 spatial (NCHW).
    x = jax.random.normal(kx, (16, 1, 16, 16), jnp.float32)
    params = make_params(kp)

    out = jax.block_until_ready(mnistnet_forward(x, params))
    ref = reference_forward(x, params)

    assert out.shape == (16, 10), out.shape
    err = float(jnp.max(jnp.abs(out - ref)))
    # bf16 MXU operands for conv2/conv3/FC (f32 accumulate / epilogues) -> ~1e-2 slack.
    assert err < 3e-2, f"mismatch: max abs err {err}"

    print("KERNEL_OK")
</pallas_src>

<mosaic_0001>
module attributes {stable_mosaic.version = 11 : i64} {
  func.func @_fused_forward_kernel(%arg0: i32, %arg1: memref<8x328x1xf32, #tpu.memory_space<vmem>>, %arg2: memref<9x128xf32, #tpu.memory_space<vmem>>, %arg3: memref<1x128xf32, #tpu.memory_space<vmem>>, %arg4: memref<1x128xf32, #tpu.memory_space<vmem>>, %arg5: memref<3x3x128x128xbf16, #tpu.memory_space<vmem>>, %arg6: memref<1x128xf32, #tpu.memory_space<vmem>>, %arg7: memref<1x128xf32, #tpu.memory_space<vmem>>, %arg8: memref<3x3x128x128xbf16, #tpu.memory_space<vmem>>, %arg9: memref<1x128xf32, #tpu.memory_space<vmem>>, %arg10: memref<1x128xf32, #tpu.memory_space<vmem>>, %arg11: memref<128x128xbf16, #tpu.memory_space<vmem>>, %arg12: memref<1x128xf32, #tpu.memory_space<vmem>>, %arg13: memref<8x128xf32, #tpu.memory_space<vmem>>, %arg14: memref<161x128xbf16, #tpu.memory_space<vmem>>, %arg15: memref<53x128xbf16, #tpu.memory_space<vmem>>, %arg16: memref<288x128xf32, #tpu.memory_space<vmem>>, %arg17: memref<120x128xf32, #tpu.memory_space<vmem>>, %arg18: memref<8x128xf32, #tpu.memory_space<vmem>>) attributes {dimension_semantics = [#tpu.dimension_semantics<parallel>], iteration_bounds = array<i64: 2>, scalar_prefetch = 0 : i64, scratch_operands = 5 : i64, tpu.core_type = #tpu.core_type<tc>, window_params = [{transform_indices = @transform_0, window_bounds = array<i64: 8, 328, 1>}, {pipeline_mode = #tpu.pipeline_mode<synchronous>, transform_indices = @transform_1, window_bounds = array<i64: 9, 128>}, {pipeline_mode = #tpu.pipeline_mode<synchronous>, transform_indices = @transform_2, window_bounds = array<i64: 1, 128>}, {pipeline_mode = #tpu.pipeline_mode<synchronous>, transform_indices = @transform_3, window_bounds = array<i64: 1, 128>}, {pipeline_mode = #tpu.pipeline_mode<synchronous>, transform_indices = @transform_4, window_bounds = array<i64: 3, 3, 128, 128>}, {pipeline_mode = #tpu.pipeline_mode<synchronous>, transform_indices = @transform_5, window_bounds = array<i64: 1, 128>}, {pipeline_mode = #tpu.pipeline_mode<synchronous>, transform_indices = @transform_6, window_bounds = array<i64: 1, 128>}, {pipeline_mode = #tpu.pipeline_mode<synchronous>, transform_indices = @transform_7, window_bounds = array<i64: 3, 3, 128, 128>}, {pipeline_mode = #tpu.pipeline_mode<synchronous>, transform_indices = @transform_8, window_bounds = array<i64: 1, 128>}, {pipeline_mode = #tpu.pipeline_mode<synchronous>, transform_indices = @transform_9, window_bounds = array<i64: 1, 128>}, {pipeline_mode = #tpu.pipeline_mode<synchronous>, transform_indices = @transform_10, window_bounds = array<i64: 128, 128>}, {pipeline_mode = #tpu.pipeline_mode<synchronous>, transform_indices = @transform_11, window_bounds = array<i64: 1, 128>}, {transform_indices = @transform_12, window_bounds = array<i64: 8, 128>}]} {
    %cst = arith.constant 0.000000e+00 : bf16
    %0 = vector.broadcast %cst : bf16 to vector<161x128xbf16>
    %c0 = arith.constant 0 : index
    %c0_0 = arith.constant 0 : index
    %1 = vector.load %arg14[%c0, %c0_0] : memref<161x128xbf16, #tpu.memory_space<vmem>>, vector<161x128xbf16>
    tpu.vector_store %arg14[%c0, %c0_0], %0 {strides = array<i32>} : memref<161x128xbf16, #tpu.memory_space<vmem>>, vector<161x128xbf16>,
    %cst_1 = arith.constant 0.000000e+00 : bf16
    %2 = vector.broadcast %cst_1 : bf16 to vector<53x128xbf16>
    %c0_2 = arith.constant 0 : index
    %c0_3 = arith.constant 0 : index
    %3 = vector.load %arg15[%c0_2, %c0_3] : memref<53x128xbf16, #tpu.memory_space<vmem>>, vector<53x128xbf16>
    tpu.vector_store %arg15[%c0_2, %c0_3], %2 {strides = array<i32>} : memref<53x128xbf16, #tpu.memory_space<vmem>>, vector<53x128xbf16>,
    %c0_4 = arith.constant 0 : index
    %c0_5 = arith.constant 0 : index
    %4 = vector.load %arg2[%c0_4, %c0_5] : memref<9x128xf32, #tpu.memory_space<vmem>>, vector<1x128xf32>
    %c1 = arith.constant 1 : index
    %c0_6 = arith.constant 0 : index
    %5 = vector.load %arg2[%c1, %c0_6] : memref<9x128xf32, #tpu.memory_space<vmem>>, vector<1x128xf32>
    %c2 = arith.constant 2 : index
    %c0_7 = arith.constant 0 : index
    %6 = vector.load %arg2[%c2, %c0_7] : memref<9x128xf32, #tpu.memory_space<vmem>>, vector<1x128xf32>
    %c3 = arith.constant 3 : index
    %c0_8 = arith.constant 0 : index
    %7 = vector.load %arg2[%c3, %c0_8] : memref<9x128xf32, #tpu.memory_space<vmem>>, vector<1x128xf32>
    %c4 = arith.constant 4 : index
    %c0_9 = arith.constant 0 : index
    %8 = vector.load %arg2[%c4, %c0_9] : memref<9x128xf32, #tpu.memory_space<vmem>>, vector<1x128xf32>
    %c5 = arith.constant 5 : index
    %c0_10 = arith.constant 0 : index
    %9 = vector.load %arg2[%c5, %c0_10] : memref<9x128xf32, #tpu.memory_space<vmem>>, vector<1x128xf32>
    %c6 = arith.constant 6 : index
    %c0_11 = arith.constant 0 : index
    %10 = vector.load %arg2[%c6, %c0_11] : memref<9x128xf32, #tpu.memory_space<vmem>>, vector<1x128xf32>
    %c7 = arith.constant 7 : index
    %c0_12 = arith.constant 0 : index
    %11 = vector.load %arg2[%c7, %c0_12] : memref<9x128xf32, #tpu.memory_space<vmem>>, vector<1x128xf32>
    %c8 = arith.constant 8 : index
    %c0_13 = arith.constant 0 : index
    %12 = vector.load %arg2[%c8, %c0_13] : memref<9x128xf32, #tpu.memory_space<vmem>>, vector<1x128xf32>
    %c0_14 = arith.constant 0 : index
    %c0_15 = arith.constant 0 : index
    %13 = vector.load %arg3[%c0_14, %c0_15] : memref<1x128xf32, #tpu.memory_space<vmem>>, vector<1x128xf32>
    %c0_16 = arith.constant 0 : index
    %c0_17 = arith.constant 0 : index
    %14 = vector.load %arg4[%c0_16, %c0_17] : memref<1x128xf32, #tpu.memory_space<vmem>>, vector<1x128xf32>
    %c0_18 = arith.constant 0 : index
    %c0_19 = arith.constant 0 : index
    %15 = vector.load %arg6[%c0_18, %c0_19] : memref<1x128xf32, #tpu.memory_space<vmem>>, vector<1x128xf32>
    %c0_20 = arith.constant 0 : index
    %c0_21 = arith.constant 0 : index
    %16 = vector.load %arg7[%c0_20, %c0_21] : memref<1x128xf32, #tpu.memory_space<vmem>>, vector<1x128xf32>
    %c0_22 = arith.constant 0 : index
    %c0_23 = arith.constant 0 : index
    %17 = vector.load %arg9[%c0_22, %c0_23] : memref<1x128xf32, #tpu.memory_space<vmem>>, vector<1x128xf32>
    %c0_24 = arith.constant 0 : index
    %c0_25 = arith.constant 0 : index
    %18 = vector.load %arg10[%c0_24, %c0_25] : memref<1x128xf32, #tpu.memory_space<vmem>>, vector<1x128xf32>
    %c0_i32 = arith.constant 0 : i32
    %c8_i32 = arith.constant 8 : i32
    %19 = arith.addi %c0_i32, %c8_i32 : i32
    %c1_i32 = arith.constant 1 : i32
    scf.for %arg19 = %c0_i32 to %19 step %c1_i32  : i32 {
      %c1_i32_38 = arith.constant 1 : i32
      %38 = arith.muli %arg19, %c1_i32_38 : i32
      %c0_i32_39 = arith.constant 0 : i32
      %39 = arith.addi %c0_i32_39, %38 : i32
      %c0_i32_40 = arith.constant 0 : i32
      %c3_i32 = arith.constant 3 : i32
      %40 = arith.addi %c0_i32_40, %c3_i32 : i32
      %c1_i32_41 = arith.constant 1 : i32
      scf.for %arg20 = %c0_i32_40 to %40 step %c1_i32_41  : i32 {
        %c1_i32_241 = arith.constant 1 : i32
        %267 = arith.muli %arg20, %c1_i32_241 : i32
        %c0_i32_242 = arith.constant 0 : i32
        %268 = arith.addi %c0_i32_242, %267 : i32
        %c96_i32 = arith.constant 96 : i32
        %269 = arith.muli %268, %c96_i32 : i32
        %270 = tpu.assume_multiple %269, 32 : i32
        %cst_243 = arith.constant 0.000000e+00 : f32
        %271 = vector.broadcast %cst_243 : f32 to vector<96x128xf32>
        %c0_i32_244 = arith.constant 0 : i32
        %272 = arith.addi %c0_i32_244, %270 : i32
        %273 = arith.index_cast %39 : i32 to index
        %274 = arith.index_cast %272 : i32 to index
        %c0_245 = arith.constant 0 : index
        %275 = vector.load %arg1[%273, %274, %c0_245] : memref<8x328x1xf32, #tpu.memory_space<vmem>>, vector<1x96x1xf32>
        %276 = vector.shape_cast %275 : vector<1x96x1xf32> to vector<96x1xf32>
        %277 = vector.broadcast %276 : vector<96x1xf32> to vector<96x128xf32>
        %278 = vector.broadcast %4 : vector<1x128xf32> to vector<96x128xf32>
        %279 = arith.mulf %277, %278 : vector<96x128xf32>
        %280 = arith.addf %271, %279 : vector<96x128xf32>
        %c1_i32_246 = arith.constant 1 : i32
        %281 = arith.addi %c1_i32_246, %270 : i32
        %282 = arith.index_cast %39 : i32 to index
        %283 = arith.index_cast %281 : i32 to index
        %c0_247 = arith.constant 0 : index
        %284 = vector.load %arg1[%282, %283, %c0_247] : memref<8x328x1xf32, #tpu.memory_space<vmem>>, vector<1x96x1xf32>
        %285 = vector.shape_cast %284 : vector<1x96x1xf32> to vector<96x1xf32>
        %286 = vector.broadcast %285 : vector<96x1xf32> to vector<96x128xf32>
        %287 = vector.broadcast %5 : vector<1x128xf32> to vector<96x128xf32>
        %288 = arith.mulf %286, %287 : vector<96x128xf32>
        %289 = arith.addf %280, %288 : vector<96x128xf32>
        %c2_i32 = arith.constant 2 : i32
        %290 = arith.addi %c2_i32, %270 : i32
        %291 = arith.index_cast %39 : i32 to index
        %292 = arith.index_cast %290 : i32 to index
        %c0_248 = arith.constant 0 : index
        %293 = vector.load %arg1[%291, %292, %c0_248] : memref<8x328x1xf32, #tpu.memory_space<vmem>>, vector<1x96x1xf32>
        %294 = vector.shape_cast %293 : vector<1x96x1xf32> to vector<96x1xf32>
        %295 = vector.broadcast %294 : vector<96x1xf32> to vector<96x128xf32>
        %296 = vector.broadcast %6 : vector<1x128xf32> to vector<96x128xf32>
        %297 = arith.mulf %295, %296 : vector<96x128xf32>
        %298 = arith.addf %289, %297 : vector<96x128xf32>
        %c18_i32 = arith.constant 18 : i32
        %299 = arith.addi %c18_i32, %270 : i32
        %300 = arith.index_cast %39 : i32 to index
        %301 = arith.index_cast %299 : i32 to index
        %c0_249 = arith.constant 0 : index
        %302 = vector.load %arg1[%300, %301, %c0_249] : memref<8x328x1xf32, #tpu.memory_space<vmem>>, vector<1x96x1xf32>
        %303 = vector.shape_cast %302 : vector<1x96x1xf32> to vector<96x1xf32>
        %304 = vector.broadcast %303 : vector<96x1xf32> to vector<96x128xf32>
        %305 = vector.broadcast %7 : vector<1x128xf32> to vector<96x128xf32>
        %306 = arith.mulf %304, %305 : vector<96x128xf32>
        %307 = arith.addf %298, %306 : vector<96x128xf32>
        %c19_i32 = arith.constant 19 : i32
        %308 = arith.addi %c19_i32, %270 : i32
        %309 = arith.index_cast %39 : i32 to index
        %310 = arith.index_cast %308 : i32 to index
        %c0_250 = arith.constant 0 : index
        %311 = vector.load %arg1[%309, %310, %c0_250] : memref<8x328x1xf32, #tpu.memory_space<vmem>>, vector<1x96x1xf32>
        %312 = vector.shape_cast %311 : vector<1x96x1xf32> to vector<96x1xf32>
        %313 = vector.broadcast %312 : vector<96x1xf32> to vector<96x128xf32>
        %314 = vector.broadcast %8 : vector<1x128xf32> to vector<96x128xf32>
        %315 = arith.mulf %313, %314 : vector<96x128xf32>
        %316 = arith.addf %307, %315 : vector<96x128xf32>
        %c20_i32 = arith.constant 20 : i32
        %317 = arith.addi %c20_i32, %270 : i32
        %318 = arith.index_cast %39 : i32 to index
        %319 = arith.index_cast %317 : i32 to index
        %c0_251 = arith.constant 0 : index
        %320 = vector.load %arg1[%318, %319, %c0_251] : memref<8x328x1xf32, #tpu.memory_space<vmem>>, vector<1x96x1xf32>
        %321 = vector.shape_cast %320 : vector<1x96x1xf32> to vector<96x1xf32>
        %322 = vector.broadcast %321 : vector<96x1xf32> to vector<96x128xf32>
        %323 = vector.broadcast %9 : vector<1x128xf32> to vector<96x128xf32>
        %324 = arith.mulf %322, %323 : vector<96x128xf32>
        %325 = arith.addf %316, %324 : vector<96x128xf32>
        %c36_i32 = arith.constant 36 : i32
        %326 = arith.addi %c36_i32, %270 : i32
        %327 = arith.index_cast %39 : i32 to index
        %328 = arith.index_cast %326 : i32 to index
        %c0_252 = arith.constant 0 : index
        %329 = vector.load %arg1[%327, %328, %c0_252] : memref<8x328x1xf32, #tpu.memory_space<vmem>>, vector<1x96x1xf32>
        %330 = vector.shape_cast %329 : vector<1x96x1xf32> to vector<96x1xf32>
        %331 = vector.broadcast %330 : vector<96x1xf32> to vector<96x128xf32>
        %332 = vector.broadcast %10 : vector<1x128xf32> to vector<96x128xf32>
        %333 = arith.mulf %331, %332 : vector<96x128xf32>
        %334 = arith.addf %325, %333 : vector<96x128xf32>
        %c37_i32 = arith.constant 37 : i32
        %335 = arith.addi %c37_i32, %270 : i32
        %336 = arith.index_cast %39 : i32 to index
        %337 = arith.index_cast %335 : i32 to index
        %c0_253 = arith.constant 0 : index
        %338 = vector.load %arg1[%336, %337, %c0_253] : memref<8x328x1xf32, #tpu.memory_space<vmem>>, vector<1x96x1xf32>
        %339 = vector.shape_cast %338 : vector<1x96x1xf32> to vector<96x1xf32>
        %340 = vector.broadcast %339 : vector<96x1xf32> to vector<96x128xf32>
        %341 = vector.broadcast %11 : vector<1x128xf32> to vector<96x128xf32>
        %342 = arith.mulf %340, %341 : vector<96x128xf32>
        %343 = arith.addf %334, %342 : vector<96x128xf32>
        %c38_i32 = arith.constant 38 : i32
        %344 = arith.addi %c38_i32, %270 : i32
        %345 = arith.index_cast %39 : i32 to index
        %346 = arith.index_cast %344 : i32 to index
        %c0_254 = arith.constant 0 : index
        %347 = vector.load %arg1[%345, %346, %c0_254] : memref<8x328x1xf32, #tpu.memory_space<vmem>>, vector<1x96x1xf32>
        %348 = vector.shape_cast %347 : vector<1x96x1xf32> to vector<96x1xf32>
        %349 = vector.broadcast %348 : vector<96x1xf32> to vector<96x128xf32>
        %350 = vector.broadcast %12 : vector<1x128xf32> to vector<96x128xf32>
        %351 = arith.mulf %349, %350 : vector<96x128xf32>
        %352 = arith.addf %343, %351 : vector<96x128xf32>
        %353 = vector.broadcast %13 : vector<1x128xf32> to vector<96x128xf32>
        %354 = arith.mulf %352, %353 : vector<96x128xf32>
        %355 = vector.broadcast %14 : vector<1x128xf32> to vector<96x128xf32>
        %356 = arith.addf %354, %355 : vector<96x128xf32>
        %cst_255 = arith.constant 0.000000e+00 : f32
        %357 = vector.broadcast %cst_255 : f32 to vector<96x128xf32>
        %358 = arith.maximumf %356, %357 : vector<96x128xf32>
        %359 = arith.index_cast %270 : i32 to index
        %c0_256 = arith.constant 0 : index
        %360 = vector.load %arg16[%359, %c0_256] : memref<288x128xf32, #tpu.memory_space<vmem>>, vector<96x128xf32>
        tpu.vector_store %arg16[%359, %c0_256], %358 {strides = array<i32>} : memref<288x128xf32, #tpu.memory_space<vmem>>, vector<96x128xf32>,
      }
      %c3_i32_42 = arith.constant 3 : i32
      %c0_43 = arith.constant 0 : index
      %c0_44 = arith.constant 0 : index
      %41 = tpu.strided_load %arg16[%c0_43, %c0_44] {strides = array<i32: 2, 1>} : memref<288x128xf32, #tpu.memory_space<vmem>>, vector<8x128xf32>
      %c1_45 = arith.constant 1 : index
      %c0_46 = arith.constant 0 : index
      %42 = tpu.strided_load %arg16[%c1_45, %c0_46] {strides = array<i32: 2, 1>} : memref<288x128xf32, #tpu.memory_space<vmem>>, vector<8x128xf32>
      %c18 = arith.constant 18 : index
      %c0_47 = arith.constant 0 : index
      %43 = tpu.strided_load %arg16[%c18, %c0_47] {strides = array<i32: 2, 1>} : memref<288x128xf32, #tpu.memory_space<vmem>>, vector<8x128xf32>
      %c19 = arith.constant 19 : index
      %c0_48 = arith.constant 0 : index
      %44 = tpu.strided_load %arg16[%c19, %c0_48] {strides = array<i32: 2, 1>} : memref<288x128xf32, #tpu.memory_space<vmem>>, vector<8x128xf32>
      %45 = arith.maximumf %41, %42 : vector<8x128xf32>
      %46 = arith.maximumf %43, %44 : vector<8x128xf32>
      %47 = arith.maximumf %45, %46 : vector<8x128xf32>
      %48 = arith.truncf %47 : vector<8x128xf32> to vector<8x128xbf16>
      %c24 = arith.constant 24 : index
      %c0_49 = arith.constant 0 : index
      %49 = vector.load %arg14[%c24, %c0_49] : memref<161x128xbf16, #tpu.memory_space<vmem>>, vector<8x128xbf16>
      tpu.vector_store %arg14[%c24, %c0_49], %48 {strides = array<i32>} : memref<161x128xbf16, #tpu.memory_space<vmem>>, vector<8x128xbf16>,
      %c36 = arith.constant 36 : index
      %c0_50 = arith.constant 0 : index
      %50 = tpu.strided_load %arg16[%c36, %c0_50] {strides = array<i32: 2, 1>} : memref<288x128xf32, #tpu.memory_space<vmem>>, vector<8x128xf32>
      %c37 = arith.constant 37 : index
      %c0_51 = arith.constant 0 : index
      %51 = tpu.strided_load %arg16[%c37, %c0_51] {strides = array<i32: 2, 1>} : memref<288x128xf32, #tpu.memory_space<vmem>>, vector<8x128xf32>
      %c54 = arith.constant 54 : index
      %c0_52 = arith.constant 0 : index
      %52 = tpu.strided_load %arg16[%c54, %c0_52] {strides = array<i32: 2, 1>} : memref<288x128xf32, #tpu.memory_space<vmem>>, vector<8x128xf32>
      %c55 = arith.constant 55 : index
      %c0_53 = arith.constant 0 : index
      %53 = tpu.strided_load %arg16[%c55, %c0_53] {strides = array<i32: 2, 1>} : memref<288x128xf32, #tpu.memory_space<vmem>>, vector<8x128xf32>
      %54 = arith.maximumf %50, %51 : vector<8x128xf32>
      %55 = arith.maximumf %52, %53 : vector<8x128xf32>
      %56 = arith.maximumf %54, %55 : vector<8x128xf32>
      %57 = arith.truncf %56 : vector<8x128xf32> to vector<8x128xbf16>
      %c40 = arith.constant 40 : index
      %c0_54 = arith.constant 0 : index
      %58 = vector.load %arg14[%c40, %c0_54] : memref<161x128xbf16, #tpu.memory_space<vmem>>, vector<8x128xbf16>
      tpu.vector_store %arg14[%c40, %c0_54], %57 {strides = array<i32>} : memref<161x128xbf16, #tpu.memory_space<vmem>>, vector<8x128xbf16>,
      %c72 = arith.constant 72 : index
      %c0_55 = arith.constant 0 : index
      %59 = tpu.strided_load %arg16[%c72, %c0_55] {strides = array<i32: 2, 1>} : memref<288x128xf32, #tpu.memory_space<vmem>>, vector<8x128xf32>
      %c73 = arith.constant 73 : index
      %c0_56 = arith.constant 0 : index
      %60 = tpu.strided_load %arg16[%c73, %c0_56] {strides = array<i32: 2, 1>} : memref<288x128xf32, #tpu.memory_space<vmem>>, vector<8x128xf32>
      %c90 = arith.constant 90 : index
      %c0_57 = arith.constant 0 : index
      %61 = tpu.strided_load %arg16[%c90, %c0_57] {strides = array<i32: 2, 1>} : memref<288x128xf32, #tpu.memory_space<vmem>>, vector<8x128xf32>
      %c91 = arith.constant 91 : index
      %c0_58 = arith.constant 0 : index
      %62 = tpu.strided_load %arg16[%c91, %c0_58] {strides = array<i32: 2, 1>} : memref<288x128xf32, #tpu.memory_space<vmem>>, vector<8x128xf32>
      %63 = arith.maximumf %59, %60 : vector<8x128xf32>
      %64 = arith.maximumf %61, %62 : vector<8x128xf32>
      %65 = arith.maximumf %63, %64 : vector<8x128xf32>
      %66 = arith.truncf %65 : vector<8x128xf32> to vector<8x128xbf16>
      %c56 = arith.constant 56 : index
      %c0_59 = arith.constant 0 : index
      %67 = vector.load %arg14[%c56, %c0_59] : memref<161x128xbf16, #tpu.memory_space<vmem>>, vector<8x128xbf16>
      tpu.vector_store %arg14[%c56, %c0_59], %66 {strides = array<i32>} : memref<161x128xbf16, #tpu.memory_space<vmem>>, vector<8x128xbf16>,
      %c108 = arith.constant 108 : index
      %c0_60 = arith.constant 0 : index
      %68 = tpu.strided_load %arg16[%c108, %c0_60] {strides = array<i32: 2, 1>} : memref<288x128xf32, #tpu.memory_space<vmem>>, vector<8x128xf32>
      %c109 = arith.constant 109 : index
      %c0_61 = arith.constant 0 : index
      %69 = tpu.strided_load %arg16[%c109, %c0_61] {strides = array<i32: 2, 1>} : memref<288x128xf32, #tpu.memory_space<vmem>>, vector<8x128xf32>
      %c126 = arith.constant 126 : index
      %c0_62 = arith.constant 0 : index
      %70 = tpu.strided_load %arg16[%c126, %c0_62] {strides = array<i32: 2, 1>} : memref<288x128xf32, #tpu.memory_space<vmem>>, vector<8x128xf32>
      %c127 = arith.constant 127 : index
      %c0_63 = arith.constant 0 : index
      %71 = tpu.strided_load %arg16[%c127, %c0_63] {strides = array<i32: 2, 1>} : memref<288x128xf32, #tpu.memory_space<vmem>>, vector<8x128xf32>
      %72 = arith.maximumf %68, %69 : vector<8x128xf32>
      %73 = arith.maximumf %70, %71 : vector<8x128xf32>
      %74 = arith.maximumf %72, %73 : vector<8x128xf32>
      %75 = arith.truncf %74 : vector<8x128xf32> to vector<8x128xbf16>
      %c72_64 = arith.constant 72 : index
      %c0_65 = arith.constant 0 : index
      %76 = vector.load %arg14[%c72_64, %c0_65] : memref<161x128xbf16, #tpu.memory_space<vmem>>, vector<8x128xbf16>
      tpu.vector_store %arg14[%c72_64, %c0_65], %75 {strides = array<i32>} : memref<161x128xbf16, #tpu.memory_space<vmem>>, vector<8x128xbf16>,
      %c144 = arith.constant 144 : index
      %c0_66 = arith.constant 0 : index
      %77 = tpu.strided_load %arg16[%c144, %c0_66] {strides = array<i32: 2, 1>} : memref<288x128xf32, #tpu.memory_space<vmem>>, vector<8x128xf32>
      %c145 = arith.constant 145 : index
      %c0_67 = arith.constant 0 : index
      %78 = tpu.strided_load %arg16[%c145, %c0_67] {strides = array<i32: 2, 1>} : memref<288x128xf32, #tpu.memory_space<vmem>>, vector<8x128xf32>
      %c162 = arith.constant 162 : index
      %c0_68 = arith.constant 0 : index
      %79 = tpu.strided_load %arg16[%c162, %c0_68] {strides = array<i32: 2, 1>} : memref<288x128xf32, #tpu.memory_space<vmem>>, vector<8x128xf32>
      %c163 = arith.constant 163 : index
      %c0_69 = arith.constant 0 : index
      %80 = tpu.strided_load %arg16[%c163, %c0_69] {strides = array<i32: 2, 1>} : memref<288x128xf32, #tpu.memory_space<vmem>>, vector<8x128xf32>
      %81 = arith.maximumf %77, %78 : vector<8x128xf32>
      %82 = arith.maximumf %79, %80 : vector<8x128xf32>
      %83 = arith.maximumf %81, %82 : vector<8x128xf32>
      %84 = arith.truncf %83 : vector<8x128xf32> to vector<8x128xbf16>
      %c88 = arith.constant 88 : index
      %c0_70 = arith.constant 0 : index
      %85 = vector.load %arg14[%c88, %c0_70] : memref<161x128xbf16, #tpu.memory_space<vmem>>, vector<8x128xbf16>
      tpu.vector_store %arg14[%c88, %c0_70], %84 {strides = array<i32>} : memref<161x128xbf16, #tpu.memory_space<vmem>>, vector<8x128xbf16>,
      %c180 = arith.constant 180 : index
      %c0_71 = arith.constant 0 : index
      %86 = tpu.strided_load %arg16[%c180, %c0_71] {strides = array<i32: 2, 1>} : memref<288x128xf32, #tpu.memory_space<vmem>>, vector<8x128xf32>
      %c181 = arith.constant 181 : index
      %c0_72 = arith.constant 0 : index
      %87 = tpu.strided_load %arg16[%c181, %c0_72] {strides = array<i32: 2, 1>} : memref<288x128xf32, #tpu.memory_space<vmem>>, vector<8x128xf32>
      %c198 = arith.constant 198 : index
      %c0_73 = arith.constant 0 : index
      %88 = tpu.strided_load %arg16[%c198, %c0_73] {strides = array<i32: 2, 1>} : memref<288x128xf32, #tpu.memory_space<vmem>>, vector<8x128xf32>
      %c199 = arith.constant 199 : index
      %c0_74 = arith.constant 0 : index
      %89 = tpu.strided_load %arg16[%c199, %c0_74] {strides = array<i32: 2, 1>} : memref<288x128xf32, #tpu.memory_space<vmem>>, vector<8x128xf32>
      %90 = arith.maximumf %86, %87 : vector<8x128xf32>
      %91 = arith.maximumf %88, %89 : vector<8x128xf32>
      %92 = arith.maximumf %90, %91 : vector<8x128xf32>
      %93 = arith.truncf %92 : vector<8x128xf32> to vector<8x128xbf16>
      %c104 = arith.constant 104 : index
      %c0_75 = arith.constant 0 : index
      %94 = vector.load %arg14[%c104, %c0_75] : memref<161x128xbf16, #tpu.memory_space<vmem>>, vector<8x128xbf16>
      tpu.vector_store %arg14[%c104, %c0_75], %93 {strides = array<i32>} : memref<161x128xbf16, #tpu.memory_space<vmem>>, vector<8x128xbf16>,
      %c216 = arith.constant 216 : index
      %c0_76 = arith.constant 0 : index
      %95 = tpu.strided_load %arg16[%c216, %c0_76] {strides = array<i32: 2, 1>} : memref<288x128xf32, #tpu.memory_space<vmem>>, vector<8x128xf32>
      %c217 = arith.constant 217 : index
      %c0_77 = arith.constant 0 : index
      %96 = tpu.strided_load %arg16[%c217, %c0_77] {strides = array<i32: 2, 1>} : memref<288x128xf32, #tpu.memory_space<vmem>>, vector<8x128xf32>
      %c234 = arith.constant 234 : index
      %c0_78 = arith.constant 0 : index
      %97 = tpu.strided_load %arg16[%c234, %c0_78] {strides = array<i32: 2, 1>} : memref<288x128xf32, #tpu.memory_space<vmem>>, vector<8x128xf32>
      %c235 = arith.constant 235 : index
      %c0_79 = arith.constant 0 : index
      %98 = tpu.strided_load %arg16[%c235, %c0_79] {strides = array<i32: 2, 1>} : memref<288x128xf32, #tpu.memory_space<vmem>>, vector<8x128xf32>
      %99 = arith.maximumf %95, %96 : vector<8x128xf32>
      %100 = arith.maximumf %97, %98 : vector<8x128xf32>
      %101 = arith.maximumf %99, %100 : vector<8x128xf32>
      %102 = arith.truncf %101 : vector<8x128xf32> to vector<8x128xbf16>
      %c120 = arith.constant 120 : index
      %c0_80 = arith.constant 0 : index
      %103 = vector.load %arg14[%c120, %c0_80] : memref<161x128xbf16, #tpu.memory_space<vmem>>, vector<8x128xbf16>
      tpu.vector_store %arg14[%c120, %c0_80], %102 {strides = array<i32>} : memref<161x128xbf16, #tpu.memory_space<vmem>>, vector<8x128xbf16>,
      %c252 = arith.constant 252 : index
      %c0_81 = arith.constant 0 : index
      %104 = tpu.strided_load %arg16[%c252, %c0_81] {strides = array<i32: 2, 1>} : memref<288x128xf32, #tpu.memory_space<vmem>>, vector<8x128xf32>
      %c253 = arith.constant 253 : index
      %c0_82 = arith.constant 0 : index
      %105 = tpu.strided_load %arg16[%c253, %c0_82] {strides = array<i32: 2, 1>} : memref<288x128xf32, #tpu.memory_space<vmem>>, vector<8x128xf32>
      %c270 = arith.constant 270 : index
      %c0_83 = arith.constant 0 : index
      %106 = tpu.strided_load %arg16[%c270, %c0_83] {strides = array<i32: 2, 1>} : memref<288x128xf32, #tpu.memory_space<vmem>>, vector<8x128xf32>
      %c271 = arith.constant 271 : index
      %c0_84 = arith.constant 0 : index
      %107 = tpu.strided_load %arg16[%c271, %c0_84] {strides = array<i32: 2, 1>} : memref<288x128xf32, #tpu.memory_space<vmem>>, vector<8x128xf32>
      %108 = arith.maximumf %104, %105 : vector<8x128xf32>
      %109 = arith.maximumf %106, %107 : vector<8x128xf32>
      %110 = arith.maximumf %108, %109 : vector<8x128xf32>
      %111 = arith.truncf %110 : vector<8x128xf32> to vector<8x128xbf16>
      %c136 = arith.constant 136 : index
      %c0_85 = arith.constant 0 : index
      %112 = vector.load %arg14[%c136, %c0_85] : memref<161x128xbf16, #tpu.memory_space<vmem>>, vector<8x128xbf16>
      tpu.vector_store %arg14[%c136, %c0_85], %111 {strides = array<i32>} : memref<161x128xbf16, #tpu.memory_space<vmem>>, vector<8x128xbf16>,
      %cst_86 = arith.constant 0.000000e+00 : f32
      %113 = vector.broadcast %cst_86 : f32 to vector<120x128xf32>
      %c7_87 = arith.constant 7 : index
      %c0_88 = arith.constant 0 : index
      %114 = vector.load %arg14[%c7_87, %c0_88] : memref<161x128xbf16, #tpu.memory_space<vmem>>, vector<120x128xbf16>
      %c0_89 = arith.constant 0 : index
      %c0_90 = arith.constant 0 : index
      %c0_91 = arith.constant 0 : index
      %c0_92 = arith.constant 0 : index
      %115 = vector.load %arg5[%c0_89, %c0_90, %c0_91, %c0_92] : memref<3x3x128x128xbf16, #tpu.memory_space<vmem>>, vector<1x1x128x128xbf16>
      %116 = vector.shape_cast %115 : vector<1x1x128x128xbf16> to vector<128x128xbf16>
      %cst_93 = arith.constant dense<0.000000e+00> : vector<120x128xf32>
      %117 = tpu.matmul %114, %116, %cst_93 {dimension_numbers = #tpu.dot_dimension_numbers<[1], [0], [0], [1], [0, 0, 1, 1], [], []>} : vector<120x128xbf16>, vector<128x128xbf16>, vector<120x128xf32> -> vector<120x128xf32>
      %118 = arith.addf %113, %117 : vector<120x128xf32>
      %c8_94 = arith.constant 8 : index
      %c0_95 = arith.constant 0 : index
      %119 = vector.load %arg14[%c8_94, %c0_95] : memref<161x128xbf16, #tpu.memory_space<vmem>>, vector<120x128xbf16>
      %c0_96 = arith.constant 0 : index
      %c1_97 = arith.constant 1 : index
      %c0_98 = arith.constant 0 : index
      %c0_99 = arith.constant 0 : index
      %120 = vector.load %arg5[%c0_96, %c1_97, %c0_98, %c0_99] : memref<3x3x128x128xbf16, #tpu.memory_space<vmem>>, vector<1x1x128x128xbf16>
      %121 = vector.shape_cast %120 : vector<1x1x128x128xbf16> to vector<128x128xbf16>
      %cst_100 = arith.constant dense<0.000000e+00> : vector<120x128xf32>
      %122 = tpu.matmul %119, %121, %cst_100 {dimension_numbers = #tpu.dot_dimension_numbers<[1], [0], [0], [1], [0, 0, 1, 1], [], []>} : vector<120x128xbf16>, vector<128x128xbf16>, vector<120x128xf32> -> vector<120x128xf32>
      %123 = arith.addf %118, %122 : vector<120x128xf32>
      %c9 = arith.constant 9 : index
      %c0_101 = arith.constant 0 : index
      %124 = vector.load %arg14[%c9, %c0_101] : memref<161x128xbf16, #tpu.memory_space<vmem>>, vector<120x128xbf16>
      %c0_102 = arith.constant 0 : index
      %c2_103 = arith.constant 2 : index
      %c0_104 = arith.constant 0 : index
      %c0_105 = arith.constant 0 : index
      %125 = vector.load %arg5[%c0_102, %c2_103, %c0_104, %c0_105] : memref<3x3x128x128xbf16, #tpu.memory_space<vmem>>, vector<1x1x128x128xbf16>
      %126 = vector.shape_cast %125 : vector<1x1x128x128xbf16> to vector<128x128xbf16>
      %cst_106 = arith.constant dense<0.000000e+00> : vector<120x128xf32>
      %127 = tpu.matmul %124, %126, %cst_106 {dimension_numbers = #tpu.dot_dimension_numbers<[1], [0], [0], [1], [0, 0, 1, 1], [], []>} : vector<120x128xbf16>, vector<128x128xbf16>, vector<120x128xf32> -> vector<120x128xf32>
      %128 = arith.addf %123, %127 : vector<120x128xf32>
      %c23 = arith.constant 23 : index
      %c0_107 = arith.constant 0 : index
      %129 = vector.load %arg14[%c23, %c0_107] : memref<161x128xbf16, #tpu.memory_space<vmem>>, vector<120x128xbf16>
      %c1_108 = arith.constant 1 : index
      %c0_109 = arith.constant 0 : index
      %c0_110 = arith.constant 0 : index
      %c0_111 = arith.constant 0 : index
      %130 = vector.load %arg5[%c1_108, %c0_109, %c0_110, %c0_111] : memref<3x3x128x128xbf16, #tpu.memory_space<vmem>>, vector<1x1x128x128xbf16>
      %131 = vector.shape_cast %130 : vector<1x1x128x128xbf16> to vector<128x128xbf16>
      %cst_112 = arith.constant dense<0.000000e+00> : vector<120x128xf32>
      %132 = tpu.matmul %129, %131, %cst_112 {dimension_numbers = #tpu.dot_dimension_numbers<[1], [0], [0], [1], [0, 0, 1, 1], [], []>} : vector<120x128xbf16>, vector<128x128xbf16>, vector<120x128xf32> -> vector<120x128xf32>
      %133 = arith.addf %128, %132 : vector<120x128xf32>
      %c24_113 = arith.constant 24 : index
      %c0_114 = arith.constant 0 : index
      %134 = vector.load %arg14[%c24_113, %c0_114] : memref<161x128xbf16, #tpu.memory_space<vmem>>, vector<120x128xbf16>
      %c1_115 = arith.constant 1 : index
      %c1_116 = arith.constant 1 : index
      %c0_117 = arith.constant 0 : index
      %c0_118 = arith.constant 0 : index
      %135 = vector.load %arg5[%c1_115, %c1_116, %c0_117, %c0_118] : memref<3x3x128x128xbf16, #tpu.memory_space<vmem>>, vector<1x1x128x128xbf16>
      %136 = vector.shape_cast %135 : vector<1x1x128x128xbf16> to vector<128x128xbf16>
      %cst_119 = arith.constant dense<0.000000e+00> : vector<120x128xf32>
      %137 = tpu.matmul %134, %136, %cst_119 {dimension_numbers = #tpu.dot_dimension_numbers<[1], [0], [0], [1], [0, 0, 1, 1], [], []>} : vector<120x128xbf16>, vector<128x128xbf16>, vector<120x128xf32> -> vector<120x128xf32>
      %138 = arith.addf %133, %137 : vector<120x128xf32>
      %c25 = arith.constant 25 : index
      %c0_120 = arith.constant 0 : index
      %139 = vector.load %arg14[%c25, %c0_120] : memref<161x128xbf16, #tpu.memory_space<vmem>>, vector<120x128xbf16>
      %c1_121 = arith.constant 1 : index
      %c2_122 = arith.constant 2 : index
      %c0_123 = arith.constant 0 : index
      %c0_124 = arith.constant 0 : index
      %140 = vector.load %arg5[%c1_121, %c2_122, %c0_123, %c0_124] : memref<3x3x128x128xbf16, #tpu.memory_space<vmem>>, vector<1x1x128x128xbf16>
      %141 = vector.shape_cast %140 : vector<1x1x128x128xbf16> to vector<128x128xbf16>
      %cst_125 = arith.constant dense<0.000000e+00> : vector<120x128xf32>
      %142 = tpu.matmul %139, %141, %cst_125 {dimension_numbers = #tpu.dot_dimension_numbers<[1], [0], [0], [1], [0, 0, 1, 1], [], []>} : vector<120x128xbf16>, vector<128x128xbf16>, vector<120x128xf32> -> vector<120x128xf32>
      %143 = arith.addf %138, %142 : vector<120x128xf32>
      %c39 = arith.constant 39 : index
      %c0_126 = arith.constant 0 : index
      %144 = vector.load %arg14[%c39, %c0_126] : memref<161x128xbf16, #tpu.memory_space<vmem>>, vector<120x128xbf16>
      %c2_127 = arith.constant 2 : index
      %c0_128 = arith.constant 0 : index
      %c0_129 = arith.constant 0 : index
      %c0_130 = arith.constant 0 : index
      %145 = vector.load %arg5[%c2_127, %c0_128, %c0_129, %c0_130] : memref<3x3x128x128xbf16, #tpu.memory_space<vmem>>, vector<1x1x128x128xbf16>
      %146 = vector.shape_cast %145 : vector<1x1x128x128xbf16> to vector<128x128xbf16>
      %cst_131 = arith.constant dense<0.000000e+00> : vector<120x128xf32>
      %147 = tpu.matmul %144, %146, %cst_131 {dimension_numbers = #tpu.dot_dimension_numbers<[1], [0], [0], [1], [0, 0, 1, 1], [], []>} : vector<120x128xbf16>, vector<128x128xbf16>, vector<120x128xf32> -> vector<120x128xf32>
      %148 = arith.addf %143, %147 : vector<120x128xf32>
      %c40_132 = arith.constant 40 : index
      %c0_133 = arith.constant 0 : index
      %149 = vector.load %arg14[%c40_132, %c0_133] : memref<161x128xbf16, #tpu.memory_space<vmem>>, vector<120x128xbf16>
      %c2_134 = arith.constant 2 : index
      %c1_135 = arith.constant 1 : index
      %c0_136 = arith.constant 0 : index
      %c0_137 = arith.constant 0 : index
      %150 = vector.load %arg5[%c2_134, %c1_135, %c0_136, %c0_137] : memref<3x3x128x128xbf16, #tpu.memory_space<vmem>>, vector<1x1x128x128xbf16>
      %151 = vector.shape_cast %150 : vector<1x1x128x128xbf16> to vector<128x128xbf16>
      %cst_138 = arith.constant dense<0.000000e+00> : vector<120x128xf32>
      %152 = tpu.matmul %149, %151, %cst_138 {dimension_numbers = #tpu.dot_dimension_numbers<[1], [0], [0], [1], [0, 0, 1, 1], [], []>} : vector<120x128xbf16>, vector<128x128xbf16>, vector<120x128xf32> -> vector<120x128xf32>
      %153 = arith.addf %148, %152 : vector<120x128xf32>
      %c41 = arith.constant 41 : index
      %c0_139 = arith.constant 0 : index
      %154 = vector.load %arg14[%c41, %c0_139] : memref<161x128xbf16, #tpu.memory_space<vmem>>, vector<120x128xbf16>
      %c2_140 = arith.constant 2 : index
      %c2_141 = arith.constant 2 : index
      %c0_142 = arith.constant 0 : index
      %c0_143 = arith.constant 0 : index
      %155 = vector.load %arg5[%c2_140, %c2_141, %c0_142, %c0_143] : memref<3x3x128x128xbf16, #tpu.memory_space<vmem>>, vector<1x1x128x128xbf16>
      %156 = vector.shape_cast %155 : vector<1x1x128x128xbf16> to vector<128x128xbf16>
      %cst_144 = arith.constant dense<0.000000e+00> : vector<120x128xf32>
      %157 = tpu.matmul %154, %156, %cst_144 {dimension_numbers = #tpu.dot_dimension_numbers<[1], [0], [0], [1], [0, 0, 1, 1], [], []>} : vector<120x128xbf16>, vector<128x128xbf16>, vector<120x128xf32> -> vector<120x128xf32>
      %158 = arith.addf %153, %157 : vector<120x128xf32>
      %159 = vector.broadcast %15 : vector<1x128xf32> to vector<120x128xf32>
      %160 = arith.mulf %158, %159 : vector<120x128xf32>
      %161 = vector.broadcast %16 : vector<1x128xf32> to vector<120x128xf32>
      %162 = arith.addf %160, %161 : vector<120x128xf32>
      %cst_145 = arith.constant 0.000000e+00 : f32
      %163 = vector.broadcast %cst_145 : f32 to vector<120x128xf32>
      %164 = arith.maximumf %162, %163 : vector<120x128xf32>
      %c0_146 = arith.constant 0 : index
      %c0_147 = arith.constant 0 : index
      %165 = vector.load %arg17[%c0_146, %c0_147] : memref<120x128xf32, #tpu.memory_space<vmem>>, vector<120x128xf32>
      tpu.vector_store %arg17[%c0_146, %c0_147], %164 {strides = array<i32>} : memref<120x128xf32, #tpu.memory_space<vmem>>, vector<120x128xf32>,
      %c0_148 = arith.constant 0 : index
      %c0_149 = arith.constant 0 : index
      %166 = tpu.strided_load %arg17[%c0_148, %c0_149] {strides = array<i32: 2, 1>} : memref<120x128xf32, #tpu.memory_space<vmem>>, vector<4x128xf32>
      %c1_150 = arith.constant 1 : index
      %c0_151 = arith.constant 0 : index
      %167 = tpu.strided_load %arg17[%c1_150, %c0_151] {strides = array<i32: 2, 1>} : memref<120x128xf32, #tpu.memory_space<vmem>>, vector<4x128xf32>
      %c16 = arith.constant 16 : index
      %c0_152 = arith.constant 0 : index
      %168 = tpu.strided_load %arg17[%c16, %c0_152] {strides = array<i32: 2, 1>} : memref<120x128xf32, #tpu.memory_space<vmem>>, vector<4x128xf32>
      %c17 = arith.constant 17 : index
      %c0_153 = arith.constant 0 : index
      %169 = tpu.strided_load %arg17[%c17, %c0_153] {strides = array<i32: 2, 1>} : memref<120x128xf32, #tpu.memory_space<vmem>>, vector<4x128xf32>
      %170 = arith.maximumf %166, %167 : vector<4x128xf32>
      %171 = arith.maximumf %168, %169 : vector<4x128xf32>
      %172 = arith.maximumf %170, %171 : vector<4x128xf32>
      %173 = arith.truncf %172 : vector<4x128xf32> to vector<4x128xbf16>
      %c16_154 = arith.constant 16 : index
      %c0_155 = arith.constant 0 : index
      %174 = vector.load %arg15[%c16_154, %c0_155] : memref<53x128xbf16, #tpu.memory_space<vmem>>, vector<4x128xbf16>
      tpu.vector_store %arg15[%c16_154, %c0_155], %173 {strides = array<i32>} : memref<53x128xbf16, #tpu.memory_space<vmem>>, vector<4x128xbf16>,
      %c32 = arith.constant 32 : index
      %c0_156 = arith.constant 0 : index
      %175 = tpu.strided_load %arg17[%c32, %c0_156] {strides = array<i32: 2, 1>} : memref<120x128xf32, #tpu.memory_space<vmem>>, vector<4x128xf32>
      %c33 = arith.constant 33 : index
      %c0_157 = arith.constant 0 : index
      %176 = tpu.strided_load %arg17[%c33, %c0_157] {strides = array<i32: 2, 1>} : memref<120x128xf32, #tpu.memory_space<vmem>>, vector<4x128xf32>
      %c48 = arith.constant 48 : index
      %c0_158 = arith.constant 0 : index
      %177 = tpu.strided_load %arg17[%c48, %c0_158] {strides = array<i32: 2, 1>} : memref<120x128xf32, #tpu.memory_space<vmem>>, vector<4x128xf32>
      %c49 = arith.constant 49 : index
      %c0_159 = arith.constant 0 : index
      %178 = tpu.strided_load %arg17[%c49, %c0_159] {strides = array<i32: 2, 1>} : memref<120x128xf32, #tpu.memory_space<vmem>>, vector<4x128xf32>
      %179 = arith.maximumf %175, %176 : vector<4x128xf32>
      %180 = arith.maximumf %177, %178 : vector<4x128xf32>
      %181 = arith.maximumf %179, %180 : vector<4x128xf32>
      %182 = arith.truncf %181 : vector<4x128xf32> to vector<4x128xbf16>
      %c24_160 = arith.constant 24 : index
      %c0_161 = arith.constant 0 : index
      %183 = vector.load %arg15[%c24_160, %c0_161] : memref<53x128xbf16, #tpu.memory_space<vmem>>, vector<4x128xbf16>
      tpu.vector_store %arg15[%c24_160, %c0_161], %182 {strides = array<i32>} : memref<53x128xbf16, #tpu.memory_space<vmem>>, vector<4x128xbf16>,
      %c64 = arith.constant 64 : index
      %c0_162 = arith.constant 0 : index
      %184 = tpu.strided_load %arg17[%c64, %c0_162] {strides = array<i32: 2, 1>} : memref<120x128xf32, #tpu.memory_space<vmem>>, vector<4x128xf32>
      %c65 = arith.constant 65 : index
      %c0_163 = arith.constant 0 : index
      %185 = tpu.strided_load %arg17[%c65, %c0_163] {strides = array<i32: 2, 1>} : memref<120x128xf32, #tpu.memory_space<vmem>>, vector<4x128xf32>
      %c80 = arith.constant 80 : index
      %c0_164 = arith.constant 0 : index
      %186 = tpu.strided_load %arg17[%c80, %c0_164] {strides = array<i32: 2, 1>} : memref<120x128xf32, #tpu.memory_space<vmem>>, vector<4x128xf32>
      %c81 = arith.constant 81 : index
      %c0_165 = arith.constant 0 : index
      %187 = tpu.strided_load %arg17[%c81, %c0_165] {strides = array<i32: 2, 1>} : memref<120x128xf32, #tpu.memory_space<vmem>>, vector<4x128xf32>
      %188 = arith.maximumf %184, %185 : vector<4x128xf32>
      %189 = arith.maximumf %186, %187 : vector<4x128xf32>
      %190 = arith.maximumf %188, %189 : vector<4x128xf32>
      %191 = arith.truncf %190 : vector<4x128xf32> to vector<4x128xbf16>
      %c32_166 = arith.constant 32 : index
      %c0_167 = arith.constant 0 : index
      %192 = vector.load %arg15[%c32_166, %c0_167] : memref<53x128xbf16, #tpu.memory_space<vmem>>, vector<4x128xbf16>
      tpu.vector_store %arg15[%c32_166, %c0_167], %191 {strides = array<i32>} : memref<53x128xbf16, #tpu.memory_space<vmem>>, vector<4x128xbf16>,
      %c96 = arith.constant 96 : index
      %c0_168 = arith.constant 0 : index
      %193 = tpu.strided_load %arg17[%c96, %c0_168] {strides = array<i32: 2, 1>} : memref<120x128xf32, #tpu.memory_space<vmem>>, vector<4x128xf32>
      %c97 = arith.constant 97 : index
      %c0_169 = arith.constant 0 : index
      %194 = tpu.strided_load %arg17[%c97, %c0_169] {strides = array<i32: 2, 1>} : memref<120x128xf32, #tpu.memory_space<vmem>>, vector<4x128xf32>
      %c112 = arith.constant 112 : index
      %c0_170 = arith.constant 0 : index
      %195 = tpu.strided_load %arg17[%c112, %c0_170] {strides = array<i32: 2, 1>} : memref<120x128xf32, #tpu.memory_space<vmem>>, vector<4x128xf32>
      %c113 = arith.constant 113 : index
      %c0_171 = arith.constant 0 : index
      %196 = tpu.strided_load %arg17[%c113, %c0_171] {strides = array<i32: 2, 1>} : memref<120x128xf32, #tpu.memory_space<vmem>>, vector<4x128xf32>
      %197 = arith.maximumf %193, %194 : vector<4x128xf32>
      %198 = arith.maximumf %195, %196 : vector<4x128xf32>
      %199 = arith.maximumf %197, %198 : vector<4x128xf32>
      %200 = arith.truncf %199 : vector<4x128xf32> to vector<4x128xbf16>
      %c40_172 = arith.constant 40 : index
      %c0_173 = arith.constant 0 : index
      %201 = vector.load %arg15[%c40_172, %c0_173] : memref<53x128xbf16, #tpu.memory_space<vmem>>, vector<4x128xbf16>
      tpu.vector_store %arg15[%c40_172, %c0_173], %200 {strides = array<i32>} : memref<53x128xbf16, #tpu.memory_space<vmem>>, vector<4x128xbf16>,
      %cst_174 = arith.constant 0.000000e+00 : f32
      %202 = vector.broadcast %cst_174 : f32 to vector<28x128xf32>
      %c7_175 = arith.constant 7 : index
      %c0_176 = arith.constant 0 : index
      %203 = vector.load %arg15[%c7_175, %c0_176] : memref<53x128xbf16, #tpu.memory_space<vmem>>, vector<28x128xbf16>
      %c0_177 = arith.constant 0 : index
      %c0_178 = arith.constant 0 : index
      %c0_179 = arith.constant 0 : index
      %c0_180 = arith.constant 0 : index
      %204 = vector.load %arg8[%c0_177, %c0_178, %c0_179, %c0_180] : memref<3x3x128x128xbf16, #tpu.memory_space<vmem>>, vector<1x1x128x128xbf16>
      %205 = vector.shape_cast %204 : vector<1x1x128x128xbf16> to vector<128x128xbf16>
      %cst_181 = arith.constant dense<0.000000e+00> : vector<28x128xf32>
      %206 = tpu.matmul %203, %205, %cst_181 {dimension_numbers = #tpu.dot_dimension_numbers<[1], [0], [0], [1], [0, 0, 1, 1], [], []>} : vector<28x128xbf16>, vector<128x128xbf16>, vector<28x128xf32> -> vector<28x128xf32>
      %207 = arith.addf %202, %206 : vector<28x128xf32>
      %c8_182 = arith.constant 8 : index
      %c0_183 = arith.constant 0 : index
      %208 = vector.load %arg15[%c8_182, %c0_183] : memref<53x128xbf16, #tpu.memory_space<vmem>>, vector<28x128xbf16>
      %c0_184 = arith.constant 0 : index
      %c1_185 = arith.constant 1 : index
      %c0_186 = arith.constant 0 : index
      %c0_187 = arith.constant 0 : index
      %209 = vector.load %arg8[%c0_184, %c1_185, %c0_186, %c0_187] : memref<3x3x128x128xbf16, #tpu.memory_space<vmem>>, vector<1x1x128x128xbf16>
      %210 = vector.shape_cast %209 : vector<1x1x128x128xbf16> to vector<128x128xbf16>
      %cst_188 = arith.constant dense<0.000000e+00> : vector<28x128xf32>
      %211 = tpu.matmul %208, %210, %cst_188 {dimension_numbers = #tpu.dot_dimension_numbers<[1], [0], [0], [1], [0, 0, 1, 1], [], []>} : vector<28x128xbf16>, vector<128x128xbf16>, vector<28x128xf32> -> vector<28x128xf32>
      %212 = arith.addf %207, %211 : vector<28x128xf32>
      %c9_189 = arith.constant 9 : index
      %c0_190 = arith.constant 0 : index
      %213 = vector.load %arg15[%c9_189, %c0_190] : memref<53x128xbf16, #tpu.memory_space<vmem>>, vector<28x128xbf16>
      %c0_191 = arith.constant 0 : index
      %c2_192 = arith.constant 2 : index
      %c0_193 = arith.constant 0 : index
      %c0_194 = arith.constant 0 : index
      %214 = vector.load %arg8[%c0_191, %c2_192, %c0_193, %c0_194] : memref<3x3x128x128xbf16, #tpu.memory_space<vmem>>, vector<1x1x128x128xbf16>
      %215 = vector.shape_cast %214 : vector<1x1x128x128xbf16> to vector<128x128xbf16>
      %cst_195 = arith.constant dense<0.000000e+00> : vector<28x128xf32>
      %216 = tpu.matmul %213, %215, %cst_195 {dimension_numbers = #tpu.dot_dimension_numbers<[1], [0], [0], [1], [0, 0, 1, 1], [], []>} : vector<28x128xbf16>, vector<128x128xbf16>, vector<28x128xf32> -> vector<28x128xf32>
      %217 = arith.addf %212, %216 : vector<28x128xf32>
      %c15 = arith.constant 15 : index
      %c0_196 = arith.constant 0 : index
      %218 = vector.load %arg15[%c15, %c0_196] : memref<53x128xbf16, #tpu.memory_space<vmem>>, vector<28x128xbf16>
      %c1_197 = arith.constant 1 : index
      %c0_198 = arith.constant 0 : index
      %c0_199 = arith.constant 0 : index
      %c0_200 = arith.constant 0 : index
      %219 = vector.load %arg8[%c1_197, %c0_198, %c0_199, %c0_200] : memref<3x3x128x128xbf16, #tpu.memory_space<vmem>>, vector<1x1x128x128xbf16>
      %220 = vector.shape_cast %219 : vector<1x1x128x128xbf16> to vector<128x128xbf16>
      %cst_201 = arith.constant dense<0.000000e+00> : vector<28x128xf32>
      %221 = tpu.matmul %218, %220, %cst_201 {dimension_numbers = #tpu.dot_dimension_numbers<[1], [0], [0], [1], [0, 0, 1, 1], [], []>} : vector<28x128xbf16>, vector<128x128xbf16>, vector<28x128xf32> -> vector<28x128xf32>
      %222 = arith.addf %217, %221 : vector<28x128xf32>
      %c16_202 = arith.constant 16 : index
      %c0_203 = arith.constant 0 : index
      %223 = vector.load %arg15[%c16_202, %c0_203] : memref<53x128xbf16, #tpu.memory_space<vmem>>, vector<28x128xbf16>
      %c1_204 = arith.constant 1 : index
      %c1_205 = arith.constant 1 : index
      %c0_206 = arith.constant 0 : index
      %c0_207 = arith.constant 0 : index
      %224 = vector.load %arg8[%c1_204, %c1_205, %c0_206, %c0_207] : memref<3x3x128x128xbf16, #tpu.memory_space<vmem>>, vector<1x1x128x128xbf16>
      %225 = vector.shape_cast %224 : vector<1x1x128x128xbf16> to vector<128x128xbf16>
      %cst_208 = arith.constant dense<0.000000e+00> : vector<28x128xf32>
      %226 = tpu.matmul %223, %225, %cst_208 {dimension_numbers = #tpu.dot_dimension_numbers<[1], [0], [0], [1], [0, 0, 1, 1], [], []>} : vector<28x128xbf16>, vector<128x128xbf16>, vector<28x128xf32> -> vector<28x128xf32>
      %227 = arith.addf %222, %226 : vector<28x128xf32>
      %c17_209 = arith.constant 17 : index
      %c0_210 = arith.constant 0 : index
      %228 = vector.load %arg15[%c17_209, %c0_210] : memref<53x128xbf16, #tpu.memory_space<vmem>>, vector<28x128xbf16>
      %c1_211 = arith.constant 1 : index
      %c2_212 = arith.constant 2 : index
      %c0_213 = arith.constant 0 : index
      %c0_214 = arith.constant 0 : index
      %229 = vector.load %arg8[%c1_211, %c2_212, %c0_213, %c0_214] : memref<3x3x128x128xbf16, #tpu.memory_space<vmem>>, vector<1x1x128x128xbf16>
      %230 = vector.shape_cast %229 : vector<1x1x128x128xbf16> to vector<128x128xbf16>
      %cst_215 = arith.constant dense<0.000000e+00> : vector<28x128xf32>
      %231 = tpu.matmul %228, %230, %cst_215 {dimension_numbers = #tpu.dot_dimension_numbers<[1], [0], [0], [1], [0, 0, 1, 1], [], []>} : vector<28x128xbf16>, vector<128x128xbf16>, vector<28x128xf32> -> vector<28x128xf32>
      %232 = arith.addf %227, %231 : vector<28x128xf32>
      %c23_216 = arith.constant 23 : index
      %c0_217 = arith.constant 0 : index
      %233 = vector.load %arg15[%c23_216, %c0_217] : memref<53x128xbf16, #tpu.memory_space<vmem>>, vector<28x128xbf16>
      %c2_218 = arith.constant 2 : index
      %c0_219 = arith.constant 0 : index
      %c0_220 = arith.constant 0 : index
      %c0_221 = arith.constant 0 : index
      %234 = vector.load %arg8[%c2_218, %c0_219, %c0_220, %c0_221] : memref<3x3x128x128xbf16, #tpu.memory_space<vmem>>, vector<1x1x128x128xbf16>
      %235 = vector.shape_cast %234 : vector<1x1x128x128xbf16> to vector<128x128xbf16>
      %cst_222 = arith.constant dense<0.000000e+00> : vector<28x128xf32>
      %236 = tpu.matmul %233, %235, %cst_222 {dimension_numbers = #tpu.dot_dimension_numbers<[1], [0], [0], [1], [0, 0, 1, 1], [], []>} : vector<28x128xbf16>, vector<128x128xbf16>, vector<28x128xf32> -> vector<28x128xf32>
      %237 = arith.addf %232, %236 : vector<28x128xf32>
      %c24_223 = arith.constant 24 : index
      %c0_224 = arith.constant 0 : index
      %238 = vector.load %arg15[%c24_223, %c0_224] : memref<53x128xbf16, #tpu.memory_space<vmem>>, vector<28x128xbf16>
      %c2_225 = arith.constant 2 : index
      %c1_226 = arith.constant 1 : index
      %c0_227 = arith.constant 0 : index
      %c0_228 = arith.constant 0 : index
      %239 = vector.load %arg8[%c2_225, %c1_226, %c0_227, %c0_228] : memref<3x3x128x128xbf16, #tpu.memory_space<vmem>>, vector<1x1x128x128xbf16>
      %240 = vector.shape_cast %239 : vector<1x1x128x128xbf16> to vector<128x128xbf16>
      %cst_229 = arith.constant dense<0.000000e+00> : vector<28x128xf32>
      %241 = tpu.matmul %238, %240, %cst_229 {dimension_numbers = #tpu.dot_dimension_numbers<[1], [0], [0], [1], [0, 0, 1, 1], [], []>} : vector<28x128xbf16>, vector<128x128xbf16>, vector<28x128xf32> -> vector<28x128xf32>
      %242 = arith.addf %237, %241 : vector<28x128xf32>
      %c25_230 = arith.constant 25 : index
      %c0_231 = arith.constant 0 : index
      %243 = vector.load %arg15[%c25_230, %c0_231] : memref<53x128xbf16, #tpu.memory_space<vmem>>, vector<28x128xbf16>
      %c2_232 = arith.constant 2 : index
      %c2_233 = arith.constant 2 : index
      %c0_234 = arith.constant 0 : index
      %c0_235 = arith.constant 0 : index
      %244 = vector.load %arg8[%c2_232, %c2_233, %c0_234, %c0_235] : memref<3x3x128x128xbf16, #tpu.memory_space<vmem>>, vector<1x1x128x128xbf16>
      %245 = vector.shape_cast %244 : vector<1x1x128x128xbf16> to vector<128x128xbf16>
      %cst_236 = arith.constant dense<0.000000e+00> : vector<28x128xf32>
      %246 = tpu.matmul %243, %245, %cst_236 {dimension_numbers = #tpu.dot_dimension_numbers<[1], [0], [0], [1], [0, 0, 1, 1], [], []>} : vector<28x128xbf16>, vector<128x128xbf16>, vector<28x128xf32> -> vector<28x128xf32>
      %247 = arith.addf %242, %246 : vector<28x128xf32>
      %248 = vector.broadcast %17 : vector<1x128xf32> to vector<28x128xf32>
      %249 = arith.mulf %247, %248 : vector<28x128xf32>
      %250 = vector.broadcast %18 : vector<1x128xf32> to vector<28x128xf32>
      %251 = arith.addf %249, %250 : vector<28x128xf32>
      %cst_237 = arith.constant 0.000000e+00 : f32
      %252 = vector.broadcast %cst_237 : f32 to vector<28x128xf32>
      %253 = arith.maximumf %251, %252 : vector<28x128xf32>
      %254 = vector.extract_strided_slice %253 {offsets = [0, 0], sizes = [4, 128], strides = [1, 1]} : vector<28x128xf32> to vector<4x128xf32>
      %255 = vector.extract_strided_slice %253 {offsets = [8, 0], sizes = [4, 128], strides = [1, 1]} : vector<28x128xf32> to vector<4x128xf32>
      %256 = arith.addf %254, %255 : vector<4x128xf32>
      %257 = vector.extract_strided_slice %253 {offsets = [16, 0], sizes = [4, 128], strides = [1, 1]} : vector<28x128xf32> to vector<4x128xf32>
      %258 = arith.addf %256, %257 : vector<4x128xf32>
      %259 = vector.extract_strided_slice %253 {offsets = [24, 0], sizes = [4, 128], strides = [1, 1]} : vector<28x128xf32> to vector<4x128xf32>
      %260 = arith.addf %258, %259 : vector<4x128xf32>
      %cst_238 = arith.constant dense<0.000000e+00> : vector<128xf32>
      %261 = vector.multi_reduction <add>, %260, %cst_238 [0] : vector<4x128xf32> to vector<128xf32>
      %262 = vector.shape_cast %261 : vector<128xf32> to vector<1x128xf32>
      %cst_239 = arith.constant 6.250000e-02 : f32
      %263 = vector.broadcast %cst_239 : f32 to vector<1x128xf32>
      %264 = arith.mulf %262, %263 : vector<1x128xf32>
      %265 = arith.index_cast %39 : i32 to index
      %c0_240 = arith.constant 0 : index
      %266 = vector.load %arg18[%265, %c0_240] : memref<8x128xf32, #tpu.memory_space<vmem>>, vector<1x128xf32>
      tpu.vector_store %arg18[%265, %c0_240], %264 {strides = array<i32>} : memref<8x128xf32, #tpu.memory_space<vmem>>, vector<1x128xf32>,
    }
    %c8_i32_26 = arith.constant 8 : i32
    %c0_27 = arith.constant 0 : index
    %c0_28 = arith.constant 0 : index
    %20 = vector.load %arg18[%c0_27, %c0_28] : memref<8x128xf32, #tpu.memory_space<vmem>>, vector<8x128xf32>
    %21 = arith.truncf %20 : vector<8x128xf32> to vector<8x128xbf16>
    %c0_29 = arith.constant 0 : index
    %c0_30 = arith.constant 0 : index
    %22 = vector.load %arg11[%c0_29, %c0_30] : memref<128x128xbf16, #tpu.memory_space<vmem>>, vector<128x128xbf16>
    %cst_31 = arith.constant dense<0.000000e+00> : vector<8x128xf32>
    %23 = tpu.matmul %21, %22, %cst_31 {dimension_numbers = #tpu.dot_dimension_numbers<[1], [0], [0], [1], [0, 0, 1, 1], [], []>} : vector<8x128xbf16>, vector<128x128xbf16>, vector<8x128xf32> -> vector<8x128xf32>
    %c0_32 = arith.constant 0 : index
    %c0_33 = arith.constant 0 : index
    %24 = vector.load %arg12[%c0_32, %c0_33] : memref<1x128xf32, #tpu.memory_space<vmem>>, vector<1x128xf32>
    %25 = vector.broadcast %24 : vector<1x128xf32> to vector<8x128xf32>
    %26 = arith.addf %23, %25 : vector<8x128xf32>
    %cst_34 = arith.constant dense<0xFF800000> : vector<8xf32>
    %27 = vector.multi_reduction <maximumf>, %26, %cst_34 [1] : vector<8x128xf32> to vector<8xf32>
    %28 = vector.shape_cast %27 : vector<8xf32> to vector<8x1xf32>
    %29 = vector.broadcast %28 : vector<8x1xf32> to vector<8x128xf32>
    %30 = arith.subf %26, %29 : vector<8x128xf32>
    %31 = math.exp %30 : vector<8x128xf32>
    %cst_35 = arith.constant dense<0.000000e+00> : vector<8xf32>
    %32 = vector.multi_reduction <add>, %31, %cst_35 [1] : vector<8x128xf32> to vector<8xf32>
    %33 = vector.shape_cast %32 : vector<8xf32> to vector<8x1xf32>
    %34 = math.log %33 : vector<8x1xf32>
    %35 = vector.broadcast %34 : vector<8x1xf32> to vector<8x128xf32>
    %36 = arith.subf %30, %35 : vector<8x128xf32>
    %c0_36 = arith.constant 0 : index
    %c0_37 = arith.constant 0 : index
    %37 = vector.load %arg13[%c0_36, %c0_37] : memref<8x128xf32, #tpu.memory_space<vmem>>, vector<8x128xf32>
    tpu.vector_store %arg13[%c0_36, %c0_37], %36 {strides = array<i32>} : memref<8x128xf32, #tpu.memory_space<vmem>>, vector<8x128xf32>,
    return
  }
  func.func @transform_0(%arg0: i32) -> (i32, i32, i32) {
    %c0_i32 = arith.constant 0 : i32
    %c0_i32_0 = arith.constant 0 : i32
    %c0_i32_1 = arith.constant 0 : i32
    return %arg0, %c0_i32, %c0_i32_0 : i32, i32, i32
  }
  func.func @transform_1(%arg0: i32) -> (i32, i32) {
    %c0_i32 = arith.constant 0 : i32
    %c0_i32_0 = arith.constant 0 : i32
    %c0_i32_1 = arith.constant 0 : i32
    return %c0_i32, %c0_i32_0 : i32, i32
  }
  func.func @transform_2(%arg0: i32) -> (i32, i32) {
    %c0_i32 = arith.constant 0 : i32
    %c0_i32_0 = arith.constant 0 : i32
    %c0_i32_1 = arith.constant 0 : i32
    return %c0_i32, %c0_i32_0 : i32, i32
  }
  func.func @transform_3(%arg0: i32) -> (i32, i32) {
    %c0_i32 = arith.constant 0 : i32
    %c0_i32_0 = arith.constant 0 : i32
    %c0_i32_1 = arith.constant 0 : i32
    return %c0_i32, %c0_i32_0 : i32, i32
  }
  func.func @transform_4(%arg0: i32) -> (i32, i32, i32, i32) {
    %c0_i32 = arith.constant 0 : i32
    %c0_i32_0 = arith.constant 0 : i32
    %c0_i32_1 = arith.constant 0 : i32
    %c0_i32_2 = arith.constant 0 : i32
    %c0_i32_3 = arith.constant 0 : i32
    return %c0_i32, %c0_i32_0, %c0_i32_1, %c0_i32_2 : i32, i32, i32, i32
  }
  func.func @transform_5(%arg0: i32) -> (i32, i32) {
    %c0_i32 = arith.constant 0 : i32
    %c0_i32_0 = arith.constant 0 : i32
    %c0_i32_1 = arith.constant 0 : i32
    return %c0_i32, %c0_i32_0 : i32, i32
  }
  func.func @transform_6(%arg0: i32) -> (i32, i32) {
    %c0_i32 = arith.constant 0 : i32
    %c0_i32_0 = arith.constant 0 : i32
    %c0_i32_1 = arith.constant 0 : i32
    return %c0_i32, %c0_i32_0 : i32, i32
  }
  func.func @transform_7(%arg0: i32) -> (i32, i32, i32, i32) {
    %c0_i32 = arith.constant 0 : i32
    %c0_i32_0 = arith.constant 0 : i32
    %c0_i32_1 = arith.constant 0 : i32
    %c0_i32_2 = arith.constant 0 : i32
    %c0_i32_3 = arith.constant 0 : i32
    return %c0_i32, %c0_i32_0, %c0_i32_1, %c0_i32_2 : i32, i32, i32, i32
  }
  func.func @transform_8(%arg0: i32) -> (i32, i32) {
    %c0_i32 = arith.constant 0 : i32
    %c0_i32_0 = arith.constant 0 : i32
    %c0_i32_1 = arith.constant 0 : i32
    return %c0_i32, %c0_i32_0 : i32, i32
  }
  func.func @transform_9(%arg0: i32) -> (i32, i32) {
    %c0_i32 = arith.constant 0 : i32
    %c0_i32_0 = arith.constant 0 : i32
    %c0_i32_1 = arith.constant 0 : i32
    return %c0_i32, %c0_i32_0 : i32, i32
  }
  func.func @transform_10(%arg0: i32) -> (i32, i32) {
    %c0_i32 = arith.constant 0 : i32
    %c0_i32_0 = arith.constant 0 : i32
    %c0_i32_1 = arith.constant 0 : i32
    return %c0_i32, %c0_i32_0 : i32, i32
  }
  func.func @transform_11(%arg0: i32) -> (i32, i32) {
    %c0_i32 = arith.constant 0 : i32
    %c0_i32_0 = arith.constant 0 : i32
    %c0_i32_1 = arith.constant 0 : i32
    return %c0_i32, %c0_i32_0 : i32, i32
  }
  func.func @transform_12(%arg0: i32) -> (i32, i32) {
    %c0_i32 = arith.constant 0 : i32
    %c0_i32_0 = arith.constant 0 : i32
    return %arg0, %c0_i32 : i32, i32
  }
}

</mosaic_0001>

<llo_original>
// kernel: mnistnet_forward.1
$region0: #{mnistnet_forward.1}
  #allocation0 [shape = 'u32[]', space=smem, size = 0x4, offset = 0x4, fixed_abs, tag = 'smem constant byte address 0x4 - core index']
  #allocation1 [shape = 'u32[144,128]{1,0:T(1,128)}', space=vmem, size = 0x12000, scoped, tag = 'internal scratch']
  #allocation2 [shape = 'bf16[161,128]{1,0:T(8,128)(2,1)}', space=vmem, size = 0xa800, scoped, tag = 'scratch operand']
  #allocation3 [shape = 'bf16[53,128]{1,0:T(8,128)(2,1)}', space=vmem, size = 0x3800, scoped, tag = 'scratch operand']
  #allocation4 [shape = 'f32[288,128]{1,0:T(8,128)}', space=vmem, size = 0x24000, scoped, tag = 'scratch operand']
  #allocation5 [shape = 'f32[120,128]{1,0:T(8,128)}', space=vmem, size = 0xf000, scoped, tag = 'scratch operand']
  #allocation6 [shape = 'f32[8,128]{1,0:T(8,128)}', space=vmem, size = 0x1000, scoped, tag = 'scratch operand']
  %s0 = inlined_call_operand.vmem [shape: f32[16,328,1], index: 0, kind: input, shape index: {}]
  %s1 = inlined_call_operand.vmem [shape: f32[9,128], index: 1, kind: input, shape index: {}]
  %s2 = inlined_call_operand.vmem [shape: f32[1,128], index: 2, kind: input, shape index: {}]
  %s3 = inlined_call_operand.vmem [shape: f32[1,128], index: 3, kind: input, shape index: {}]
  %s4 = inlined_call_operand.vmem [shape: bf16[3,3,128,128], index: 4, kind: input, shape index: {}]
  %s5 = inlined_call_operand.vmem [shape: f32[1,128], index: 5, kind: input, shape index: {}]
  %s6 = inlined_call_operand.vmem [shape: f32[1,128], index: 6, kind: input, shape index: {}]
  %s7 = inlined_call_operand.vmem [shape: bf16[3,3,128,128], index: 7, kind: input, shape index: {}]
  %s8 = inlined_call_operand.vmem [shape: f32[1,128], index: 8, kind: input, shape index: {}]
  %s9 = inlined_call_operand.vmem [shape: f32[1,128], index: 9, kind: input, shape index: {}]
  %s10 = inlined_call_operand.vmem [shape: bf16[128,128], index: 10, kind: input, shape index: {}]
  %s11 = inlined_call_operand.vmem [shape: f32[1,128], index: 11, kind: input, shape index: {}]
  %s12 = inlined_call_operand.hbm [shape: f32[16,128], index: 12, kind: output, shape index: {}]
  %s13 = sld [smem:[#allocation0]]
  $region95: #{mnistnet_forward.1} parent=0
    _
  %s15 = ssub.s32 1, %s13
  %s16 = scalar_select 0, %s15, %s13
  $region1: #{mnistnet_forward.1} parent=0
    #allocation7 [shape = 'u8[8192]{0}', space=vmem, size = 0x2000, scoped, tag = 'output window, operand 0']
    #allocation8 [shape = 's32[2]{0}', space=sflag, size = 0x8, scoped, tag = 'scoped memory for mnistnet_forward.1']
    %17 = vsyncpa [#allocation8], 0
    %s18 = scalar_lea.sflag [#allocation8], 1
    %19 = vsyncpa %s18, 0
    loop: start=0, step=1, limit=4
    $region2: #{mnistnet_forward.1} parent=1 // loop_pre_header
      _
    $region3: #{mnistnet_forward.1} parent=1 // loop_header
      %s21 = sphi 0, %s25
      %p22 = scmp.ge.s32.totalorder %s21, 4
      %s31 = sphi 0, %s33
      %s34 = sphi 0, %s31
      %s35 = sphi 0, %s34
      %s51 = sphi 0, %s35
      %s55 = sphi 0, %s55
      %s57 = sphi 0, %s55
      %s58 = sphi 0, %s57
      %s72 = sphi 0, %s58
      %s76 = sphi 0, %s76
      %s78 = sphi 0, %s76
      %s79 = sphi 0, %s78
      %s93 = sphi 0, %s79
      %s97 = sphi 0, %s97
      %s99 = sphi 0, %s97
      %s100 = sphi 0, %s99
      %s114 = sphi 0, %s100
      %s118 = sphi 0, %s118
      %s120 = sphi 0, %s118
      %s121 = sphi 0, %s120
      %s135 = sphi 0, %s121
      %s139 = sphi 0, %s139
      %s141 = sphi 0, %s139
      %s142 = sphi 0, %s141
      %s156 = sphi 0, %s142
      %s160 = sphi 0, %s160
      %s162 = sphi 0, %s160
      %s163 = sphi 0, %s162
      %s177 = sphi 0, %s163
      %s181 = sphi 0, %s181
      %s183 = sphi 0, %s181
      %s184 = sphi 0, %s183
      %s198 = sphi 0, %s184
      %s202 = sphi 0, %s202
      %s204 = sphi 0, %s202
      %s205 = sphi 0, %s204
      %s219 = sphi 0, %s205
      %s223 = sphi 0, %s223
      %s225 = sphi 0, %s223
      %s226 = sphi 0, %s225
      %s240 = sphi 0, %s226
      %s244 = sphi 0, %s244
      %s246 = sphi 0, %s244
      %s247 = sphi 0, %s246
      %s261 = sphi 0, %s247
      %s265 = sphi 0, %s265
      %s267 = sphi 0, %s265
      %s268 = sphi 0, %s267
      %s282 = sphi 0, %s268
      %s288 = sphi 0, %s290
      %s291 = sphi 0, %s288
      %s292 = sphi 0, %s291
      %s308 = sphi 0, %s292
    $region4: #{mnistnet_forward.1} parent=1 // loop_header_branch
      %24 = sbr.rel (%p22) target = $region8
    $region5: #{mnistnet_forward.1} parent=1 // loop_body
      %s26 = ssub.s32 %s21, 1
      %s27 = ssub.s32 %s21, 2
      %s28 = sadd.s32 %s21, 1
      %s29 = ssub.s32 %s21, %s28
      %p30 = scmp.eq.s32.totalorder %s29, 0
      %s32 = sadd.s32 %s31, 1
      %s33 = scalar_select %p30, %s31, %s32
      %p36 = pneg %p30
      %p37 = scmp.eq.s32.totalorder %s21, 1
      %p38 = por %p36, %p37
      %p39 = scmp.ne.s32.totalorder %s31, %s34
      %p40 = scmp.eq.s32.totalorder %s21, 0
      %p41 = por %p39, %p40
      %p42 = scmp.ne.s32.totalorder %s31, %s34
      %p43 = scmp.eq.s32.totalorder %s26, 1
      %p44 = por %p42, %p43
      %p45 = scmp.ne.s32.totalorder %s34, %s35
      %p46 = scmp.eq.s32.totalorder %s26, 0
      %p47 = por %p45, %p46
      %p48 = scmp.ne.s32.totalorder %s34, %s35
      %p49 = scmp.eq.s32.totalorder %s27, 1
      %p50 = por %p48, %p49
      %p52 = scmp.ne.s32.totalorder %s35, %s51
      %p53 = scmp.eq.s32.totalorder %s27, 0
      %p54 = por %p52, %p53
      %s56 = sadd.s32 %s55, 1
      %p59 = scmp.eq.s32.totalorder %s21, 1
      %p60 = scmp.ne.s32.totalorder %s55, %s57
      %p61 = scmp.eq.s32.totalorder %s21, 0
      %p62 = por %p60, %p61
      %p63 = scmp.ne.s32.totalorder %s55, %s57
      %p64 = scmp.eq.s32.totalorder %s26, 1
      %p65 = por %p63, %p64
      %p66 = scmp.ne.s32.totalorder %s57, %s58
      %p67 = scmp.eq.s32.totalorder %s26, 0
      %p68 = por %p66, %p67
      %p69 = scmp.ne.s32.totalorder %s57, %s58
      %p70 = scmp.eq.s32.totalorder %s27, 1
      %p71 = por %p69, %p70
      %p73 = scmp.ne.s32.totalorder %s58, %s72
      %p74 = scmp.eq.s32.totalorder %s27, 0
      %p75 = por %p73, %p74
      %s77 = sadd.s32 %s76, 1
      %p80 = scmp.eq.s32.totalorder %s21, 1
      %p81 = scmp.ne.s32.totalorder %s76, %s78
      %p82 = scmp.eq.s32.totalorder %s21, 0
      %p83 = por %p81, %p82
      %p84 = scmp.ne.s32.totalorder %s76, %s78
      %p85 = scmp.eq.s32.totalorder %s26, 1
      %p86 = por %p84, %p85
      %p87 = scmp.ne.s32.totalorder %s78, %s79
      %p88 = scmp.eq.s32.totalorder %s26, 0
      %p89 = por %p87, %p88
      %p90 = scmp.ne.s32.totalorder %s78, %s79
      %p91 = scmp.eq.s32.totalorder %s27, 1
      %p92 = por %p90, %p91
      %p94 = scmp.ne.s32.totalorder %s79, %s93
      %p95 = scmp.eq.s32.totalorder %s27, 0
      %p96 = por %p94, %p95
      %s98 = sadd.s32 %s97, 1
      %p101 = scmp.eq.s32.totalorder %s21, 1
      %p102 = scmp.ne.s32.totalorder %s97, %s99
      %p103 = scmp.eq.s32.totalorder %s21, 0
      %p104 = por %p102, %p103
      %p105 = scmp.ne.s32.totalorder %s97, %s99
      %p106 = scmp.eq.s32.totalorder %s26, 1
      %p107 = por %p105, %p106
      %p108 = scmp.ne.s32.totalorder %s99, %s100
      %p109 = scmp.eq.s32.totalorder %s26, 0
      %p110 = por %p108, %p109
      %p111 = scmp.ne.s32.totalorder %s99, %s100
      %p112 = scmp.eq.s32.totalorder %s27, 1
      %p113 = por %p111, %p112
      %p115 = scmp.ne.s32.totalorder %s100, %s114
      %p116 = scmp.eq.s32.totalorder %s27, 0
      %p117 = por %p115, %p116
      %s119 = sadd.s32 %s118, 1
      %p122 = scmp.eq.s32.totalorder %s21, 1
      %p123 = scmp.ne.s32.totalorder %s118, %s120
      %p124 = scmp.eq.s32.totalorder %s21, 0
      %p125 = por %p123, %p124
      %p126 = scmp.ne.s32.totalorder %s118, %s120
      %p127 = scmp.eq.s32.totalorder %s26, 1
      %p128 = por %p126, %p127
      %p129 = scmp.ne.s32.totalorder %s120, %s121
      %p130 = scmp.eq.s32.totalorder %s26, 0
      %p131 = por %p129, %p130
      %p132 = scmp.ne.s32.totalorder %s120, %s121
      %p133 = scmp.eq.s32.totalorder %s27, 1
      %p134 = por %p132, %p133
      %p136 = scmp.ne.s32.totalorder %s121, %s135
      %p137 = scmp.eq.s32.totalorder %s27, 0
      %p138 = por %p136, %p137
      %s140 = sadd.s32 %s139, 1
      %p143 = scmp.eq.s32.totalorder %s21, 1
      %p144 = scmp.ne.s32.totalorder %s139, %s141
      %p145 = scmp.eq.s32.totalorder %s21, 0
      %p146 = por %p144, %p145
      %p147 = scmp.ne.s32.totalorder %s139, %s141
      %p148 = scmp.eq.s32.totalorder %s26, 1
      %p149 = por %p147, %p148
      %p150 = scmp.ne.s32.totalorder %s141, %s142
      %p151 = scmp.eq.s32.totalorder %s26, 0
      %p152 = por %p150, %p151
      %p153 = scmp.ne.s32.totalorder %s141, %s142
      %p154 = scmp.eq.s32.totalorder %s27, 1
      %p155 = por %p153, %p154
      %p157 = scmp.ne.s32.totalorder %s142, %s156
      %p158 = scmp.eq.s32.totalorder %s27, 0
      %p159 = por %p157, %p158
      %s161 = sadd.s32 %s160, 1
      %p164 = scmp.eq.s32.totalorder %s21, 1
      %p165 = scmp.ne.s32.totalorder %s160, %s162
      %p166 = scmp.eq.s32.totalorder %s21, 0
      %p167 = por %p165, %p166
      %p168 = scmp.ne.s32.totalorder %s160, %s162
      %p169 = scmp.eq.s32.totalorder %s26, 1
      %p170 = por %p168, %p169
      %p171 = scmp.ne.s32.totalorder %s162, %s163
      %p172 = scmp.eq.s32.totalorder %s26, 0
      %p173 = por %p171, %p172
      %p174 = scmp.ne.s32.totalorder %s162, %s163
      %p175 = scmp.eq.s32.totalorder %s27, 1
      %p176 = por %p174, %p175
      %p178 = scmp.ne.s32.totalorder %s163, %s177
      %p179 = scmp.eq.s32.totalorder %s27, 0
      %p180 = por %p178, %p179
      %s182 = sadd.s32 %s181, 1
      %p185 = scmp.eq.s32.totalorder %s21, 1
      %p186 = scmp.ne.s32.totalorder %s181, %s183
      %p187 = scmp.eq.s32.totalorder %s21, 0
      %p188 = por %p186, %p187
      %p189 = scmp.ne.s32.totalorder %s181, %s183
      %p190 = scmp.eq.s32.totalorder %s26, 1
      %p191 = por %p189, %p190
      %p192 = scmp.ne.s32.totalorder %s183, %s184
      %p193 = scmp.eq.s32.totalorder %s26, 0
      %p194 = por %p192, %p193
      %p195 = scmp.ne.s32.totalorder %s183, %s184
      %p196 = scmp.eq.s32.totalorder %s27, 1
      %p197 = por %p195, %p196
      %p199 = scmp.ne.s32.totalorder %s184, %s198
      %p200 = scmp.eq.s32.totalorder %s27, 0
      %p201 = por %p199, %p200
      %s203 = sadd.s32 %s202, 1
      %p206 = scmp.eq.s32.totalorder %s21, 1
      %p207 = scmp.ne.s32.totalorder %s202, %s204
      %p208 = scmp.eq.s32.totalorder %s21, 0
      %p209 = por %p207, %p208
      %p210 = scmp.ne.s32.totalorder %s202, %s204
      %p211 = scmp.eq.s32.totalorder %s26, 1
      %p212 = por %p210, %p211
      %p213 = scmp.ne.s32.totalorder %s204, %s205
      %p214 = scmp.eq.s32.totalorder %s26, 0
      %p215 = por %p213, %p214
      %p216 = scmp.ne.s32.totalorder %s204, %s205
      %p217 = scmp.eq.s32.totalorder %s27, 1
      %p218 = por %p216, %p217
      %p220 = scmp.ne.s32.totalorder %s205, %s219
      %p221 = scmp.eq.s32.totalorder %s27, 0
      %p222 = por %p220, %p221
      %s224 = sadd.s32 %s223, 1
      %p227 = scmp.eq.s32.totalorder %s21, 1
      %p228 = scmp.ne.s32.totalorder %s223, %s225
      %p229 = scmp.eq.s32.totalorder %s21, 0
      %p230 = por %p228, %p229
      %p231 = scmp.ne.s32.totalorder %s223, %s225
      %p232 = scmp.eq.s32.totalorder %s26, 1
      %p233 = por %p231, %p232
      %p234 = scmp.ne.s32.totalorder %s225, %s226
      %p235 = scmp.eq.s32.totalorder %s26, 0
      %p236 = por %p234, %p235
      %p237 = scmp.ne.s32.totalorder %s225, %s226
      %p238 = scmp.eq.s32.totalorder %s27, 1
      %p239 = por %p237, %p238
      %p241 = scmp.ne.s32.totalorder %s226, %s240
      %p242 = scmp.eq.s32.totalorder %s27, 0
      %p243 = por %p241, %p242
      %s245 = sadd.s32 %s244, 1
      %p248 = scmp.eq.s32.totalorder %s21, 1
      %p249 = scmp.ne.s32.totalorder %s244, %s246
      %p250 = scmp.eq.s32.totalorder %s21, 0
      %p251 = por %p249, %p250
      %p252 = scmp.ne.s32.totalorder %s244, %s246
      %p253 = scmp.eq.s32.totalorder %s26, 1
      %p254 = por %p252, %p253
      %p255 = scmp.ne.s32.totalorder %s246, %s247
      %p256 = scmp.eq.s32.totalorder %s26, 0
      %p257 = por %p255, %p256
      %p258 = scmp.ne.s32.totalorder %s246, %s247
      %p259 = scmp.eq.s32.totalorder %s27, 1
      %p260 = por %p258, %p259
      %p262 = scmp.ne.s32.totalorder %s247, %s261
      %p263 = scmp.eq.s32.totalorder %s27, 0
      %p264 = por %p262, %p263
      %s266 = sadd.s32 %s265, 1
      %p269 = scmp.eq.s32.totalorder %s21, 1
      %p270 = scmp.ne.s32.totalorder %s265, %s267
      %p271 = scmp.eq.s32.totalorder %s21, 0
      %p272 = por %p270, %p271
      %p273 = scmp.ne.s32.totalorder %s265, %s267
      %p274 = scmp.eq.s32.totalorder %s26, 1
      %p275 = por %p273, %p274
      %p276 = scmp.ne.s32.totalorder %s267, %s268
      %p277 = scmp.eq.s32.totalorder %s26, 0
      %p278 = por %p276, %p277
      %p279 = scmp.ne.s32.totalorder %s267, %s268
      %p280 = scmp.eq.s32.totalorder %s27, 1
      %p281 = por %p279, %p280
      %p283 = scmp.ne.s32.totalorder %s268, %s282
      %p284 = scmp.eq.s32.totalorder %s27, 0
      %p285 = por %p283, %p284
      %s286 = ssub.s32 %s21, %s28
      %p287 = scmp.eq.s32.totalorder %s286, 0
      %s289 = sadd.s32 %s288, 1
      %s290 = scalar_select %p287, %s288, %s289
      %p293 = pneg %p287
      %p294 = scmp.eq.s32.totalorder %s21, 1
      %p295 = por %p293, %p294
      %p296 = scmp.ne.s32.totalorder %s288, %s291
      %p297 = scmp.eq.s32.totalorder %s21, 0
      %p298 = por %p296, %p297
      %p299 = scmp.ne.s32.totalorder %s288, %s291
      %p300 = scmp.eq.s32.totalorder %s26, 1
      %p301 = por %p299, %p300
      %p302 = scmp.ne.s32.totalorder %s291, %s292
      %p303 = scmp.eq.s32.totalorder %s26, 0
      %p304 = por %p302, %p303
      %p305 = scmp.ne.s32.totalorder %s291, %s292
      %p306 = scmp.eq.s32.totalorder %s27, 1
      %p307 = por %p305, %p306
      %p309 = scmp.ne.s32.totalorder %s292, %s308
      %p310 = scmp.eq.s32.totalorder %s27, 0
      %p311 = por %p309, %p310
      %p312 = scmp.le.s32.totalorder 1, %s21
      %p313 = scmp.lt.s32.totalorder %s21, 3
      %p314 = pnand %p312, %p313
      %p315 = pneg %p314
      // Predicated region
      $region9: #{mnistnet_forward.1} parent=5 // pred_check
        _
      $region10: #{mnistnet_forward.1} parent=5 // pred_check_branch
        %317 = sbr.rel (%p314) target = $region12
      $region11: #{mnistnet_forward.1} parent=5 // pred_region
        %s318 = ssub.s32 %s21, 1
        // Predicated region
        $region13: #{mnistnet_forward.1} parent=11 // pred_check
          %p319 = pneg %p68
        $region14: #{mnistnet_forward.1} parent=11 // pred_check_branch
          %321 = sbr.rel (%p319) target = $region16
        $region15: #{mnistnet_forward.1} parent=11 // pred_region
          _
        $region16: #{mnistnet_forward.1} parent=11 // pred_fallthru
          _
        // Predicated region
        $region17: #{mnistnet_forward.1} parent=11 // pred_check
          %p322 = pneg %p89
        $region18: #{mnistnet_forward.1} parent=11 // pred_check_branch
          %324 = sbr.rel (%p322) target = $region20
        $region19: #{mnistnet_forward.1} parent=11 // pred_region
          _
        $region20: #{mnistnet_forward.1} parent=11 // pred_fallthru
          _
        // Predicated region
        $region21: #{mnistnet_forward.1} parent=11 // pred_check
          %p325 = pneg %p110
        $region22: #{mnistnet_forward.1} parent=11 // pred_check_branch
          %327 = sbr.rel (%p325) target = $region24
        $region23: #{mnistnet_forward.1} parent=11 // pred_region
          _
        $region24: #{mnistnet_forward.1} parent=11 // pred_fallthru
          _
        // Predicated region
        $region25: #{mnistnet_forward.1} parent=11 // pred_check
          %p328 = pneg %p131
        $region26: #{mnistnet_forward.1} parent=11 // pred_check_branch
          %330 = sbr.rel (%p328) target = $region28
        $region27: #{mnistnet_forward.1} parent=11 // pred_region
          _
        $region28: #{mnistnet_forward.1} parent=11 // pred_fallthru
          _
        // Predicated region
        $region29: #{mnistnet_forward.1} parent=11 // pred_check
          %p331 = pneg %p152
        $region30: #{mnistnet_forward.1} parent=11 // pred_check_branch
          %333 = sbr.rel (%p331) target = $region32
        $region31: #{mnistnet_forward.1} parent=11 // pred_region
          _
        $region32: #{mnistnet_forward.1} parent=11 // pred_fallthru
          _
        // Predicated region
        $region33: #{mnistnet_forward.1} parent=11 // pred_check
          %p334 = pneg %p173
        $region34: #{mnistnet_forward.1} parent=11 // pred_check_branch
          %336 = sbr.rel (%p334) target = $region36
        $region35: #{mnistnet_forward.1} parent=11 // pred_region
          _
        $region36: #{mnistnet_forward.1} parent=11 // pred_fallthru
          _
        // Predicated region
        $region37: #{mnistnet_forward.1} parent=11 // pred_check
          %p337 = pneg %p194
        $region38: #{mnistnet_forward.1} parent=11 // pred_check_branch
          %339 = sbr.rel (%p337) target = $region40
        $region39: #{mnistnet_forward.1} parent=11 // pred_region
          _
        $region40: #{mnistnet_forward.1} parent=11 // pred_fallthru
          _
        // Predicated region
        $region41: #{mnistnet_forward.1} parent=11 // pred_check
          %p340 = pneg %p215
        $region42: #{mnistnet_forward.1} parent=11 // pred_check_branch
          %342 = sbr.rel (%p340) target = $region44
        $region43: #{mnistnet_forward.1} parent=11 // pred_region
          _
        $region44: #{mnistnet_forward.1} parent=11 // pred_fallthru
          _
        // Predicated region
        $region45: #{mnistnet_forward.1} parent=11 // pred_check
          %p343 = pneg %p236
        $region46: #{mnistnet_forward.1} parent=11 // pred_check_branch
          %345 = sbr.rel (%p343) target = $region48
        $region47: #{mnistnet_forward.1} parent=11 // pred_region
          _
        $region48: #{mnistnet_forward.1} parent=11 // pred_fallthru
          _
        // Predicated region
        $region49: #{mnistnet_forward.1} parent=11 // pred_check
          %p346 = pneg %p257
        $region50: #{mnistnet_forward.1} parent=11 // pred_check_branch
          %348 = sbr.rel (%p346) target = $region52
        $region51: #{mnistnet_forward.1} parent=11 // pred_region
          _
        $region52: #{mnistnet_forward.1} parent=11 // pred_fallthru
          _
        // Predicated region
        $region53: #{mnistnet_forward.1} parent=11 // pred_check
          %p349 = pneg %p278
        $region54: #{mnistnet_forward.1} parent=11 // pred_check_branch
          %351 = sbr.rel (%p349) target = $region56
        $region55: #{mnistnet_forward.1} parent=11 // pred_region
          _
        $region56: #{mnistnet_forward.1} parent=11 // pred_fallthru
          _
      $region12: #{mnistnet_forward.1} parent=5 // pred_fallthru
        _
      %p352 = scmp.lt.s32.totalorder %s21, 2
      // Predicated region
      $region57: #{mnistnet_forward.1} parent=5 // pred_check
        %p353 = pneg %p352
      $region58: #{mnistnet_forward.1} parent=5 // pred_check_branch
        %355 = sbr.rel (%p353) target = $region60
      $region59: #{mnistnet_forward.1} parent=5 // pred_region
        // Predicated region
        $region61: #{mnistnet_forward.1} parent=59 // pred_check
          %p356 = pneg %p41
        $region62: #{mnistnet_forward.1} parent=59 // pred_check_branch
          %358 = sbr.rel (%p356) target = $region64
        $region63: #{mnistnet_forward.1} parent=59 // pred_region
          %s359 = smul.u32 8, %s21
          %p360 = scmp.lt.s32.totalorder %s359, 15
          %s361 = scalar_select %p360, %s359, 15
          %s362 = smul.addr %s361, 41
          %s363 = smul.addr %s362, 8
          %s364 = scalar_lea.vmem %s0, %s363
          %s365 = smul.u32 8, %s21
        $region64: #{mnistnet_forward.1} parent=59 // pred_fallthru
          _
      $region60: #{mnistnet_forward.1} parent=5 // pred_fallthru
        _
      %p366 = scmp.le.s32.totalorder 1, %s21
      %p367 = scmp.lt.s32.totalorder %s21, 3
      %p368 = pnand %p366, %p367
      %p369 = pneg %p368
      // Predicated region
      $region65: #{mnistnet_forward.1} parent=5 // pred_check
        _
      $region66: #{mnistnet_forward.1} parent=5 // pred_check_branch
        %371 = sbr.rel (%p368) target = $region68
      $region67: #{mnistnet_forward.1} parent=5 // pred_region
        %s372 = ssub.s32 %s21, 1
        %s373 = smul.u32 8, %s26
        %p374 = scmp.lt.s32.totalorder %s373, 15
        %s375 = scalar_select %p374, %s373, 15
        %s376 = smul.addr %s375, 41
        %s377 = smul.addr %s376, 8
        %s378 = scalar_lea.vmem %s0, %s377
        %p379 = pneg %p47
        %p380 = pneg %p44
        %p381 = pneg %p68
        %p382 = pneg %p65
        %p383 = pneg %p89
        %p384 = pneg %p86
        %p385 = pneg %p110
        %p386 = pneg %p107
        %p387 = pneg %p131
        %p388 = pneg %p128
        %p389 = pneg %p152
        %p390 = pneg %p149
        %p391 = pneg %p173
        %p392 = pneg %p170
        %p393 = pneg %p194
        %p394 = pneg %p191
        %p395 = pneg %p215
        %p396 = pneg %p212
        %p397 = pneg %p236
        %p398 = pneg %p233
        %p399 = pneg %p257
        %p400 = pneg %p254
        %p401 = pneg %p278
        %p402 = pneg %p275
        %p403 = pneg %p304
        %p404 = pneg %p301
        %s405 = sand.u32 %s291, 1
        %s406 = scalar_lea.sflag [#allocation8], %s405
        %s407 = sand.u32 %s291, 1
        %s408 = smul.addr %s407, 8
        %s409 = scalar_lea.vmem [#allocation7], %s408
        %s410 = smul.u32 8, %s26
        %p411 = scmp.lt.s32.totalorder %s410, 15
        %s412 = scalar_select %p411, %s410, 15
        %s413 = smul.addr %s412, 41
        %s414 = smul.addr %s413, 8
        %s415 = scalar_lea.vmem %s0, %s414
        %s416 = smul.u32 8, %s26
        %418 = vst [vmem:[#allocation2] sm:$0xf] 0
        %419 = vst [vmem:[#allocation2 + $0x4] sm:$0xf] 0
        %420 = vst [vmem:[#allocation2 + $0x8] sm:$0xf] 0
        %421 = vst [vmem:[#allocation2 + $0xc] sm:$0xf] 0
        %422 = vst [vmem:[#allocation2 + $0x10] sm:$0xf] 0
        %423 = vst [vmem:[#allocation2 + $0x14] sm:$0xf] 0
        %424 = vst [vmem:[#allocation2 + $0x18] sm:$0xf] 0
        %425 = vst [vmem:[#allocation2 + $0x1c] sm:$0xf] 0
        %426 = vst [vmem:[#allocation2 + $0x20] sm:$0xf] 0
        %427 = vst [vmem:[#allocation2 + $0x24] sm:$0xf] 0
        %428 = vst [vmem:[#allocation2 + $0x28] sm:$0xf] 0
        %429 = vst [vmem:[#allocation2 + $0x2c] sm:$0xf] 0
        %430 = vst [vmem:[#allocation2 + $0x30] sm:$0xf] 0
        %431 = vst [vmem:[#allocation2 + $0x34] sm:$0xf] 0
        %432 = vst [vmem:[#allocation2 + $0x38] sm:$0xf] 0
        %433 = vst [vmem:[#allocation2 + $0x3c] sm:$0xf] 0
        %434 = vst [vmem:[#allocation2 + $0x40] sm:$0xf] 0
        %435 = vst [vmem:[#allocation2 + $0x44] sm:$0xf] 0
        %436 = vst [vmem:[#allocation2 + $0x48] sm:$0xf] 0
        %437 = vst [vmem:[#allocation2 + $0x4c] sm:$0xf] 0
        %vm438 = vcmask 1040384
        %vm439 = vsmask.f32 256
        %vm440 = vmand %vm438, %vm439
        %v441 = vld [vmem:[#allocation2 + $0x50] sm:$0x1]
        %v442 = vsel %vm440, 0, %v441
        %443 = vst [vmem:[#allocation2 + $0x50] sm:$0x1] %v442
        %444 = vst [vmem:[#allocation3] sm:$0xf] 0
        %445 = vst [vmem:[#allocation3 + $0x4] sm:$0xf] 0
        %446 = vst [vmem:[#allocation3 + $0x8] sm:$0xf] 0
        %447 = vst [vmem:[#allocation3 + $0xc] sm:$0xf] 0
        %448 = vst [vmem:[#allocation3 + $0x10] sm:$0xf] 0
        %449 = vst [vmem:[#allocation3 + $0x14] sm:$0xf] 0
        %vm450 = vcmask 1042432
        %vm451 = vsmask.f32 2304
        %vm452 = vmand %vm450, %vm451
        %v453 = vld [vmem:[#allocation3 + $0x18] sm:$0x7]
        %v454 = vsel %vm452, 0, %v453
        %455 = vst [vmem:[#allocation3 + $0x18] sm:$0x7] %v454
        %v456 = vld [vmem:[%s1] sm:$0x1]
        %v457 = vld [vmem:[%s1 + $0x1] sm:$0x1]
        %v458 = vld [vmem:[%s1 + $0x2] sm:$0x1]
        %v459 = vld [vmem:[%s1 + $0x3] sm:$0x1]
        %v460 = vld [vmem:[%s1 + $0x4] sm:$0x1]
        %v461 = vld [vmem:[%s1 + $0x5] sm:$0x1]
        %v462 = vld [vmem:[%s1 + $0x6] sm:$0x1]
        %v463 = vld [vmem:[%s1 + $0x7] sm:$0x1]
        %v464 = vld [vmem:[%s1 + $0x8] sm:$0x1]
        %v465 = vld [vmem:[%s2] sm:$0x1]
        %v466 = vld [vmem:[%s3] sm:$0x1]
        %v467 = vld [vmem:[%s5] sm:$0x1]
        %v468 = vld [vmem:[%s6] sm:$0x1]
        %v469 = vld [vmem:[%s8] sm:$0x1]
        %v470 = vld [vmem:[%s9] sm:$0x1]
        loop: start=0, step=1, limit=8
        $region69: #{mnistnet_forward.1} parent=67 // loop_pre_header
          _
        $region70: #{mnistnet_forward.1} parent=67 // loop_header
          %s472 = sphi 0, %s476
          %p473 = scmp.ge.s32.totalorder %s472, 8
        $region71: #{mnistnet_forward.1} parent=67 // loop_header_branch
          %475 = sbr.rel (%p473) target = $region75
        $region72: #{mnistnet_forward.1} parent=67 // loop_body
          loop: start=0, step=1, limit=3
          $region76: #{mnistnet_forward.1} parent=72 // loop_pre_header
            _
          $region77: #{mnistnet_forward.1} parent=72 // loop_header
            %s478 = sphi 0, %s482
            %p479 = scmp.ge.s32.totalorder %s478, 3
          $region78: #{mnistnet_forward.1} parent=72 // loop_header_branch
            %481 = sbr.rel (%p479) target = $region82
          $region79: #{mnistnet_forward.1} parent=72 // loop_body
            %s483 = smul.u32 %s478, 96
            %s484 = smul.u32 %s472, 328
            %s485 = sadd.s32 %s483, %s484
            %s486 = scalar_lea.vmem %s415, %s485
            %v487 = vld [vmem:[%s486] sm:$0xff]
            %v488 = vld [vmem:[%s486 + $0x8] sm:$0xff]
            %v489 = vld [vmem:[%s486 + $0x10] sm:$0xff]
            %v490 = vld [vmem:[%s486 + $0x18] sm:$0xff]
            %v491 = vld [vmem:[%s486 + $0x20] sm:$0xff]
            %v492 = vld [vmem:[%s486 + $0x28] sm:$0xff]
            %v493 = vld [vmem:[%s486 + $0x30] sm:$0xff]
            %v494 = vld [vmem:[%s486 + $0x38] sm:$0xff]
            %v495 = vld [vmem:[%s486 + $0x40] sm:$0xff]
            %v496 = vld [vmem:[%s486 + $0x48] sm:$0xff]
            %v497 = vld [vmem:[%s486 + $0x50] sm:$0xff]
            %v498 = vld [vmem:[%s486 + $0x58] sm:$0xff]
            %500 = vset.pattern.permute.xlu0 0
            %501 = vperm.xlu0 %500, %v487
            %v502 = vpop.permute.xlu0 %501
            %505 = vset.pattern.permute.xlu0 0
            %506 = vperm.xlu0 %505, %v488
            %v507 = vpop.permute.xlu0 %506
            %510 = vset.pattern.permute.xlu0 0
            %511 = vperm.xlu0 %510, %v489
            %v512 = vpop.permute.xlu0 %511
            %515 = vset.pattern.permute.xlu0 0
            %516 = vperm.xlu0 %515, %v490
            %v517 = vpop.permute.xlu0 %516
            %520 = vset.pattern.permute.xlu0 0
            %521 = vperm.xlu0 %520, %v491
            %v522 = vpop.permute.xlu0 %521
            %525 = vset.pattern.permute.xlu0 0
            %526 = vperm.xlu0 %525, %v492
            %v527 = vpop.permute.xlu0 %526
            %530 = vset.pattern.permute.xlu0 0
            %531 = vperm.xlu0 %530, %v493
            %v532 = vpop.permute.xlu0 %531
            %535 = vset.pattern.permute.xlu0 0
            %536 = vperm.xlu0 %535, %v494
            %v537 = vpop.permute.xlu0 %536
            %540 = vset.pattern.permute.xlu0 0
            %541 = vperm.xlu0 %540, %v495
            %v542 = vpop.permute.xlu0 %541
            %545 = vset.pattern.permute.xlu0 0
            %546 = vperm.xlu0 %545, %v496
            %v547 = vpop.permute.xlu0 %546
            %550 = vset.pattern.permute.xlu0 0
            %551 = vperm.xlu0 %550, %v497
            %v552 = vpop.permute.xlu0 %551
            %555 = vset.pattern.permute.xlu0 0
            %556 = vperm.xlu0 %555, %v498
            %v557 = vpop.permute.xlu0 %556
            %v559 = vlaneseq
            %v560 = vshrl.u32 %v559, 7
            %v561 = vsub.s32 0, %v560
            %v562 = vrot.slane %v456, %v561
            %v563 = vmul.f32 %v502, %v562
            %v564 = vmul.f32 %v507, %v562
            %v565 = vmul.f32 %v512, %v562
            %v566 = vmul.f32 %v517, %v562
            %v567 = vmul.f32 %v522, %v562
            %v568 = vmul.f32 %v527, %v562
            %v569 = vmul.f32 %v532, %v562
            %v570 = vmul.f32 %v537, %v562
            %v571 = vmul.f32 %v542, %v562
            %v572 = vmul.f32 %v547, %v562
            %v573 = vmul.f32 %v552, %v562
            %v574 = vmul.f32 %v557, %v562
            %v575 = vadd.f32 %v563, 0.0
            %v576 = vadd.f32 %v564, 0.0
            %v577 = vadd.f32 %v565, 0.0
            %v578 = vadd.f32 %v566, 0.0
            %v579 = vadd.f32 %v567, 0.0
            %v580 = vadd.f32 %v568, 0.0
            %v581 = vadd.f32 %v569, 0.0
            %v582 = vadd.f32 %v570, 0.0
            %v583 = vadd.f32 %v571, 0.0
            %v584 = vadd.f32 %v572, 0.0
            %v585 = vadd.f32 %v573, 0.0
            %v586 = vadd.f32 %v574, 0.0
            %s587 = sadd.s32 %s483, 1
            %s588 = sadd.s32 %s587, %s484
            %s589 = scalar_lea.vmem %s415, %s588
            %v590 = vld [vmem:[%s589] sm:$0xff]
            %v591 = vld [vmem:[%s589 + $0x8] sm:$0xff]
            %v592 = vld [vmem:[%s589 + $0x10] sm:$0xff]
            %v593 = vld [vmem:[%s589 + $0x18] sm:$0xff]
            %v594 = vld [vmem:[%s589 + $0x20] sm:$0xff]
            %v595 = vld [vmem:[%s589 + $0x28] sm:$0xff]
            %v596 = vld [vmem:[%s589 + $0x30] sm:$0xff]
            %v597 = vld [vmem:[%s589 + $0x38] sm:$0xff]
            %v598 = vld [vmem:[%s589 + $0x40] sm:$0xff]
            %v599 = vld [vmem:[%s589 + $0x48] sm:$0xff]
            %v600 = vld [vmem:[%s589 + $0x50] sm:$0xff]
            %v601 = vld [vmem:[%s589 + $0x58] sm:$0xff]
            %603 = vset.pattern.permute.xlu0 0
            %604 = vperm.xlu0 %603, %v590
            %v605 = vpop.permute.xlu0 %604
            %608 = vset.pattern.permute.xlu0 0
            %609 = vperm.xlu0 %608, %v591
            %v610 = vpop.permute.xlu0 %609
            %613 = vset.pattern.permute.xlu0 0
            %614 = vperm.xlu0 %613, %v592
            %v615 = vpop.permute.xlu0 %614
            %618 = vset.pattern.permute.xlu0 0
            %619 = vperm.xlu0 %618, %v593
            %v620 = vpop.permute.xlu0 %619
            %623 = vset.pattern.permute.xlu0 0
            %624 = vperm.xlu0 %623, %v594
            %v625 = vpop.permute.xlu0 %624
            %628 = vset.pattern.permute.xlu0 0
            %629 = vperm.xlu0 %628, %v595
            %v630 = vpop.permute.xlu0 %629
            %633 = vset.pattern.permute.xlu0 0
            %634 = vperm.xlu0 %633, %v596
            %v635 = vpop.permute.xlu0 %634
            %638 = vset.pattern.permute.xlu0 0
            %639 = vperm.xlu0 %638, %v597
            %v640 = vpop.permute.xlu0 %639
            %643 = vset.pattern.permute.xlu0 0
            %644 = vperm.xlu0 %643, %v598
            %v645 = vpop.permute.xlu0 %644
            %648 = vset.pattern.permute.xlu0 0
            %649 = vperm.xlu0 %648, %v599
            %v650 = vpop.permute.xlu0 %649
            %653 = vset.pattern.permute.xlu0 0
            %654 = vperm.xlu0 %653, %v600
            %v655 = vpop.permute.xlu0 %654
            %658 = vset.pattern.permute.xlu0 0
            %659 = vperm.xlu0 %658, %v601
            %v660 = vpop.permute.xlu0 %659
            %v662 = vlaneseq
            %v663 = vshrl.u32 %v662, 7
            %v664 = vsub.s32 0, %v663
            %v665 = vrot.slane %v457, %v664
            %v666 = vmul.f32 %v605, %v665
            %v667 = vmul.f32 %v610, %v665
            %v668 = vmul.f32 %v615, %v665
            %v669 = vmul.f32 %v620, %v665
            %v670 = vmul.f32 %v625, %v665
            %v671 = vmul.f32 %v630, %v665
            %v672 = vmul.f32 %v635, %v665
            %v673 = vmul.f32 %v640, %v665
            %v674 = vmul.f32 %v645, %v665
            %v675 = vmul.f32 %v650, %v665
            %v676 = vmul.f32 %v655, %v665
            %v677 = vmul.f32 %v660, %v665
            %v678 = vadd.f32 %v575, %v666
            %v679 = vadd.f32 %v576, %v667
            %v680 = vadd.f32 %v577, %v668
            %v681 = vadd.f32 %v578, %v669
            %v682 = vadd.f32 %v579, %v670
            %v683 = vadd.f32 %v580, %v671
            %v684 = vadd.f32 %v581, %v672
            %v685 = vadd.f32 %v582, %v673
            %v686 = vadd.f32 %v583, %v674
            %v687 = vadd.f32 %v584, %v675
            %v688 = vadd.f32 %v585, %v676
            %v689 = vadd.f32 %v586, %v677
            %s690 = sadd.s32 %s483, 2
            %s691 = sadd.s32 %s690, %s484
            %s692 = scalar_lea.vmem %s415, %s691
            %v693 = vld [vmem:[%s692] sm:$0xff]
            %v694 = vld [vmem:[%s692 + $0x8] sm:$0xff]
            %v695 = vld [vmem:[%s692 + $0x10] sm:$0xff]
            %v696 = vld [vmem:[%s692 + $0x18] sm:$0xff]
            %v697 = vld [vmem:[%s692 + $0x20] sm:$0xff]
            %v698 = vld [vmem:[%s692 + $0x28] sm:$0xff]
            %v699 = vld [vmem:[%s692 + $0x30] sm:$0xff]
            %v700 = vld [vmem:[%s692 + $0x38] sm:$0xff]
            %v701 = vld [vmem:[%s692 + $0x40] sm:$0xff]
            %v702 = vld [vmem:[%s692 + $0x48] sm:$0xff]
            %v703 = vld [vmem:[%s692 + $0x50] sm:$0xff]
            %v704 = vld [vmem:[%s692 + $0x58] sm:$0xff]
            %706 = vset.pattern.permute.xlu0 0
            %707 = vperm.xlu0 %706, %v693
            %v708 = vpop.permute.xlu0 %707
            %711 = vset.pattern.permute.xlu0 0
            %712 = vperm.xlu0 %711, %v694
            %v713 = vpop.permute.xlu0 %712
            %716 = vset.pattern.permute.xlu0 0
            %717 = vperm.xlu0 %716, %v695
            %v718 = vpop.permute.xlu0 %717
            %721 = vset.pattern.permute.xlu0 0
            %722 = vperm.xlu0 %721, %v696
            %v723 = vpop.permute.xlu0 %722
            %726 = vset.pattern.permute.xlu0 0
            %727 = vperm.xlu0 %726, %v697
            %v728 = vpop.permute.xlu0 %727
            %731 = vset.pattern.permute.xlu0 0
            %732 = vperm.xlu0 %731, %v698
            %v733 = vpop.permute.xlu0 %732
            %736 = vset.pattern.permute.xlu0 0
            %737 = vperm.xlu0 %736, %v699
            %v738 = vpop.permute.xlu0 %737
            %741 = vset.pattern.permute.xlu0 0
            %742 = vperm.xlu0 %741, %v700
            %v743 = vpop.permute.xlu0 %742
            %746 = vset.pattern.permute.xlu0 0
            %747 = vperm.xlu0 %746, %v701
            %v748 = vpop.permute.xlu0 %747
            %751 = vset.pattern.permute.xlu0 0
            %752 = vperm.xlu0 %751, %v702
            %v753 = vpop.permute.xlu0 %752
            %756 = vset.pattern.permute.xlu0 0
            %757 = vperm.xlu0 %756, %v703
            %v758 = vpop.permute.xlu0 %757
            %761 = vset.pattern.permute.xlu0 0
            %762 = vperm.xlu0 %761, %v704
            %v763 = vpop.permute.xlu0 %762
            %v765 = vlaneseq
            %v766 = vshrl.u32 %v765, 7
            %v767 = vsub.s32 0, %v766
            %v768 = vrot.slane %v458, %v767
            %v769 = vmul.f32 %v708, %v768
            %v770 = vmul.f32 %v713, %v768
            %v771 = vmul.f32 %v718, %v768
            %v772 = vmul.f32 %v723, %v768
            %v773 = vmul.f32 %v728, %v768
            %v774 = vmul.f32 %v733, %v768
            %v775 = vmul.f32 %v738, %v768
            %v776 = vmul.f32 %v743, %v768
            %v777 = vmul.f32 %v748, %v768
            %v778 = vmul.f32 %v753, %v768
            %v779 = vmul.f32 %v758, %v768
            %v780 = vmul.f32 %v763, %v768
            %v781 = vadd.f32 %v678, %v769
            %v782 = vadd.f32 %v679, %v770
            %v783 = vadd.f32 %v680, %v771
            %v784 = vadd.f32 %v681, %v772
            %v785 = vadd.f32 %v682, %v773
            %v786 = vadd.f32 %v683, %v774
            %v787 = vadd.f32 %v684, %v775
            %v788 = vadd.f32 %v685, %v776
            %v789 = vadd.f32 %v686, %v777
            %v790 = vadd.f32 %v687, %v778
            %v791 = vadd.f32 %v688, %v779
            %v792 = vadd.f32 %v689, %v780
            %s793 = sadd.s32 %s483, 18
            %s794 = sadd.s32 %s793, %s484
            %s795 = scalar_lea.vmem %s415, %s794
            %v796 = vld [vmem:[%s795] sm:$0xff]
            %v797 = vld [vmem:[%s795 + $0x8] sm:$0xff]
            %v798 = vld [vmem:[%s795 + $0x10] sm:$0xff]
            %v799 = vld [vmem:[%s795 + $0x18] sm:$0xff]
            %v800 = vld [vmem:[%s795 + $0x20] sm:$0xff]
            %v801 = vld [vmem:[%s795 + $0x28] sm:$0xff]
            %v802 = vld [vmem:[%s795 + $0x30] sm:$0xff]
            %v803 = vld [vmem:[%s795 + $0x38] sm:$0xff]
            %v804 = vld [vmem:[%s795 + $0x40] sm:$0xff]
            %v805 = vld [vmem:[%s795 + $0x48] sm:$0xff]
            %v806 = vld [vmem:[%s795 + $0x50] sm:$0xff]
            %v807 = vld [vmem:[%s795 + $0x58] sm:$0xff]
            %809 = vset.pattern.permute.xlu0 0
            %810 = vperm.xlu0 %809, %v796
            %v811 = vpop.permute.xlu0 %810
            %814 = vset.pattern.permute.xlu0 0
            %815 = vperm.xlu0 %814, %v797
            %v816 = vpop.permute.xlu0 %815
            %819 = vset.pattern.permute.xlu0 0
            %820 = vperm.xlu0 %819, %v798
            %v821 = vpop.permute.xlu0 %820
            %824 = vset.pattern.permute.xlu0 0
            %825 = vperm.xlu0 %824, %v799
            %v826 = vpop.permute.xlu0 %825
            %829 = vset.pattern.permute.xlu0 0
            %830 = vperm.xlu0 %829, %v800
            %v831 = vpop.permute.xlu0 %830
            %834 = vset.pattern.permute.xlu0 0
            %835 = vperm.xlu0 %834, %v801
            %v836 = vpop.permute.xlu0 %835
            %839 = vset.pattern.permute.xlu0 0
            %840 = vperm.xlu0 %839, %v802
            %v841 = vpop.permute.xlu0 %840
            %844 = vset.pattern.permute.xlu0 0
            %845 = vperm.xlu0 %844, %v803
            %v846 = vpop.permute.xlu0 %845
            %849 = vset.pattern.permute.xlu0 0
            %850 = vperm.xlu0 %849, %v804
            %v851 = vpop.permute.xlu0 %850
            %854 = vset.pattern.permute.xlu0 0
            %855 = vperm.xlu0 %854, %v805
            %v856 = vpop.permute.xlu0 %855
            %859 = vset.pattern.permute.xlu0 0
            %860 = vperm.xlu0 %859, %v806
            %v861 = vpop.permute.xlu0 %860
            %864 = vset.pattern.permute.xlu0 0
            %865 = vperm.xlu0 %864, %v807
            %v866 = vpop.permute.xlu0 %865
            %v868 = vlaneseq
            %v869 = vshrl.u32 %v868, 7
            %v870 = vsub.s32 0, %v869
            %v871 = vrot.slane %v459, %v870
            %v872 = vmul.f32 %v811, %v871
            %v873 = vmul.f32 %v816, %v871
            %v874 = vmul.f32 %v821, %v871
            %v875 = vmul.f32 %v826, %v871
            %v876 = vmul.f32 %v831, %v871
            %v877 = vmul.f32 %v836, %v871
            %v878 = vmul.f32 %v841, %v871
            %v879 = vmul.f32 %v846, %v871
            %v880 = vmul.f32 %v851, %v871
            %v881 = vmul.f32 %v856, %v871
            %v882 = vmul.f32 %v861, %v871
            %v883 = vmul.f32 %v866, %v871
            %v884 = vadd.f32 %v781, %v872
            %v885 = vadd.f32 %v782, %v873
            %v886 = vadd.f32 %v783, %v874
            %v887 = vadd.f32 %v784, %v875
            %v888 = vadd.f32 %v785, %v876
            %v889 = vadd.f32 %v786, %v877
            %v890 = vadd.f32 %v787, %v878
            %v891 = vadd.f32 %v788, %v879
            %v892 = vadd.f32 %v789, %v880
            %v893 = vadd.f32 %v790, %v881
            %v894 = vadd.f32 %v791, %v882
            %v895 = vadd.f32 %v792, %v883
            %s896 = sadd.s32 %s483, 19
            %s897 = sadd.s32 %s896, %s484
            %s898 = scalar_lea.vmem %s415, %s897
            %v899 = vld [vmem:[%s898] sm:$0xff]
            %v900 = vld [vmem:[%s898 + $0x8] sm:$0xff]
            %v901 = vld [vmem:[%s898 + $0x10] sm:$0xff]
            %v902 = vld [vmem:[%s898 + $0x18] sm:$0xff]
            %v903 = vld [vmem:[%s898 + $0x20] sm:$0xff]
            %v904 = vld [vmem:[%s898 + $0x28] sm:$0xff]
            %v905 = vld [vmem:[%s898 + $0x30] sm:$0xff]
            %v906 = vld [vmem:[%s898 + $0x38] sm:$0xff]
            %v907 = vld [vmem:[%s898 + $0x40] sm:$0xff]
            %v908 = vld [vmem:[%s898 + $0x48] sm:$0xff]
            %v909 = vld [vmem:[%s898 + $0x50] sm:$0xff]
            %v910 = vld [vmem:[%s898 + $0x58] sm:$0xff]
            %912 = vset.pattern.permute.xlu0 0
            %913 = vperm.xlu0 %912, %v899
            %v914 = vpop.permute.xlu0 %913
            %917 = vset.pattern.permute.xlu0 0
            %918 = vperm.xlu0 %917, %v900
            %v919 = vpop.permute.xlu0 %918
            %922 = vset.pattern.permute.xlu0 0
            %923 = vperm.xlu0 %922, %v901
            %v924 = vpop.permute.xlu0 %923
            %927 = vset.pattern.permute.xlu0 0
            %928 = vperm.xlu0 %927, %v902
            %v929 = vpop.permute.xlu0 %928
            %932 = vset.pattern.permute.xlu0 0
            %933 = vperm.xlu0 %932, %v903
            %v934 = vpop.permute.xlu0 %933
            %937 = vset.pattern.permute.xlu0 0
            %938 = vperm.xlu0 %937, %v904
            %v939 = vpop.permute.xlu0 %938
            %942 = vset.pattern.permute.xlu0 0
            %943 = vperm.xlu0 %942, %v905
            %v944 = vpop.permute.xlu0 %943
            %947 = vset.pattern.permute.xlu0 0
            %948 = vperm.xlu0 %947, %v906
            %v949 = vpop.permute.xlu0 %948
            %952 = vset.pattern.permute.xlu0 0
            %953 = vperm.xlu0 %952, %v907
            %v954 = vpop.permute.xlu0 %953
            %957 = vset.pattern.permute.xlu0 0
            %958 = vperm.xlu0 %957, %v908
            %v959 = vpop.permute.xlu0 %958
            %962 = vset.pattern.permute.xlu0 0
            %963 = vperm.xlu0 %962, %v909
            %v964 = vpop.permute.xlu0 %963
            %967 = vset.pattern.permute.xlu0 0
            %968 = vperm.xlu0 %967, %v910
            %v969 = vpop.permute.xlu0 %968
            %v971 = vlaneseq
            %v972 = vshrl.u32 %v971, 7
            %v973 = vsub.s32 0, %v972
            %v974 = vrot.slane %v460, %v973
            %v975 = vmul.f32 %v914, %v974
            %v976 = vmul.f32 %v919, %v974
            %v977 = vmul.f32 %v924, %v974
            %v978 = vmul.f32 %v929, %v974
            %v979 = vmul.f32 %v934, %v974
            %v980 = vmul.f32 %v939, %v974
            %v981 = vmul.f32 %v944, %v974
            %v982 = vmul.f32 %v949, %v974
            %v983 = vmul.f32 %v954, %v974
            %v984 = vmul.f32 %v959, %v974
            %v985 = vmul.f32 %v964, %v974
            %v986 = vmul.f32 %v969, %v974
            %v987 = vadd.f32 %v884, %v975
            %v988 = vadd.f32 %v885, %v976
            %v989 = vadd.f32 %v886, %v977
            %v990 = vadd.f32 %v887, %v978
            %v991 = vadd.f32 %v888, %v979
            %v992 = vadd.f32 %v889, %v980
            %v993 = vadd.f32 %v890, %v981
            %v994 = vadd.f32 %v891, %v982
            %v995 = vadd.f32 %v892, %v983
            %v996 = vadd.f32 %v893, %v984
            %v997 = vadd.f32 %v894, %v985
            %v998 = vadd.f32 %v895, %v986
            %s999 = sadd.s32 %s483, 20
            %s1000 = sadd.s32 %s999, %s484
            %s1001 = scalar_lea.vmem %s415, %s1000
            %v1002 = vld [vmem:[%s1001] sm:$0xff]
            %v1003 = vld [vmem:[%s1001 + $0x8] sm:$0xff]
            %v1004 = vld [vmem:[%s1001 + $0x10] sm:$0xff]
            %v1005 = vld [vmem:[%s1001 + $0x18] sm:$0xff]
            %v1006 = vld [vmem:[%s1001 + $0x20] sm:$0xff]
            %v1007 = vld [vmem:[%s1001 + $0x28] sm:$0xff]
            %v1008 = vld [vmem:[%s1001 + $0x30] sm:$0xff]
            %v1009 = vld [vmem:[%s1001 + $0x38] sm:$0xff]
            %v1010 = vld [vmem:[%s1001 + $0x40] sm:$0xff]
            %v1011 = vld [vmem:[%s1001 + $0x48] sm:$0xff]
            %v1012 = vld [vmem:[%s1001 + $0x50] sm:$0xff]
            %v1013 = vld [vmem:[%s1001 + $0x58] sm:$0xff]
            %1015 = vset.pattern.permute.xlu0 0
            %1016 = vperm.xlu0 %1015, %v1002
            %v1017 = vpop.permute.xlu0 %1016
            %1020 = vset.pattern.permute.xlu0 0
            %1021 = vperm.xlu0 %1020, %v1003
            %v1022 = vpop.permute.xlu0 %1021
            %1025 = vset.pattern.permute.xlu0 0
            %1026 = vperm.xlu0 %1025, %v1004
            %v1027 = vpop.permute.xlu0 %1026
            %1030 = vset.pattern.permute.xlu0 0
            %1031 = vperm.xlu0 %1030, %v1005
            %v1032 = vpop.permute.xlu0 %1031
            %1035 = vset.pattern.permute.xlu0 0
            %1036 = vperm.xlu0 %1035, %v1006
            %v1037 = vpop.permute.xlu0 %1036
            %1040 = vset.pattern.permute.xlu0 0
            %1041 = vperm.xlu0 %1040, %v1007
            %v1042 = vpop.permute.xlu0 %1041
            %1045 = vset.pattern.permute.xlu0 0
            %1046 = vperm.xlu0 %1045, %v1008
            %v1047 = vpop.permute.xlu0 %1046
            %1050 = vset.pattern.permute.xlu0 0
            %1051 = vperm.xlu0 %1050, %v1009
            %v1052 = vpop.permute.xlu0 %1051
            %1055 = vset.pattern.permute.xlu0 0
            %1056 = vperm.xlu0 %1055, %v1010
            %v1057 = vpop.permute.xlu0 %1056
            %1060 = vset.pattern.permute.xlu0 0
            %1061 = vperm.xlu0 %1060, %v1011
            %v1062 = vpop.permute.xlu0 %1061
            %1065 = vset.pattern.permute.xlu0 0
            %1066 = vperm.xlu0 %1065, %v1012
            %v1067 = vpop.permute.xlu0 %1066
            %1070 = vset.pattern.permute.xlu0 0
            %1071 = vperm.xlu0 %1070, %v1013
            %v1072 = vpop.permute.xlu0 %1071
            %v1074 = vlaneseq
            %v1075 = vshrl.u32 %v1074, 7
            %v1076 = vsub.s32 0, %v1075
            %v1077 = vrot.slane %v461, %v1076
            %v1078 = vmul.f32 %v1017, %v1077
            %v1079 = vmul.f32 %v1022, %v1077
            %v1080 = vmul.f32 %v1027, %v1077
            %v1081 = vmul.f32 %v1032, %v1077
            %v1082 = vmul.f32 %v1037, %v1077
            %v1083 = vmul.f32 %v1042, %v1077
            %v1084 = vmul.f32 %v1047, %v1077
            %v1085 = vmul.f32 %v1052, %v1077
            %v1086 = vmul.f32 %v1057, %v1077
            %v1087 = vmul.f32 %v1062, %v1077
            %v1088 = vmul.f32 %v1067, %v1077
            %v1089 = vmul.f32 %v1072, %v1077
            %v1090 = vadd.f32 %v987, %v1078
            %v1091 = vadd.f32 %v988, %v1079
            %v1092 = vadd.f32 %v989, %v1080
            %v1093 = vadd.f32 %v990, %v1081
            %v1094 = vadd.f32 %v991, %v1082
            %v1095 = vadd.f32 %v992, %v1083
            %v1096 = vadd.f32 %v993, %v1084
            %v1097 = vadd.f32 %v994, %v1085
            %v1098 = vadd.f32 %v995, %v1086
            %v1099 = vadd.f32 %v996, %v1087
            %v1100 = vadd.f32 %v997, %v1088
            %v1101 = vadd.f32 %v998, %v1089
            %s1102 = sadd.s32 %s483, 36
            %s1103 = sadd.s32 %s1102, %s484
            %s1104 = scalar_lea.vmem %s415, %s1103
            %v1105 = vld [vmem:[%s1104] sm:$0xff]
            %v1106 = vld [vmem:[%s1104 + $0x8] sm:$0xff]
            %v1107 = vld [vmem:[%s1104 + $0x10] sm:$0xff]
            %v1108 = vld [vmem:[%s1104 + $0x18] sm:$0xff]
            %v1109 = vld [vmem:[%s1104 + $0x20] sm:$0xff]
            %v1110 = vld [vmem:[%s1104 + $0x28] sm:$0xff]
            %v1111 = vld [vmem:[%s1104 + $0x30] sm:$0xff]
            %v1112 = vld [vmem:[%s1104 + $0x38] sm:$0xff]
            %v1113 = vld [vmem:[%s1104 + $0x40] sm:$0xff]
            %v1114 = vld [vmem:[%s1104 + $0x48] sm:$0xff]
            %v1115 = vld [vmem:[%s1104 + $0x50] sm:$0xff]
            %v1116 = vld [vmem:[%s1104 + $0x58] sm:$0xff]
            %1118 = vset.pattern.permute.xlu0 0
            %1119 = vperm.xlu0 %1118, %v1105
            %v1120 = vpop.permute.xlu0 %1119
            %1123 = vset.pattern.permute.xlu0 0
            %1124 = vperm.xlu0 %1123, %v1106
            %v1125 = vpop.permute.xlu0 %1124
            %1128 = vset.pattern.permute.xlu0 0
            %1129 = vperm.xlu0 %1128, %v1107
            %v1130 = vpop.permute.xlu0 %1129
            %1133 = vset.pattern.permute.xlu0 0
            %1134 = vperm.xlu0 %1133, %v1108
            %v1135 = vpop.permute.xlu0 %1134
            %1138 = vset.pattern.permute.xlu0 0
            %1139 = vperm.xlu0 %1138, %v1109
            %v1140 = vpop.permute.xlu0 %1139
            %1143 = vset.pattern.permute.xlu0 0
            %1144 = vperm.xlu0 %1143, %v1110
            %v1145 = vpop.permute.xlu0 %1144
            %1148 = vset.pattern.permute.xlu0 0
            %1149 = vperm.xlu0 %1148, %v1111
            %v1150 = vpop.permute.xlu0 %1149
            %1153 = vset.pattern.permute.xlu0 0
            %1154 = vperm.xlu0 %1153, %v1112
            %v1155 = vpop.permute.xlu0 %1154
            %1158 = vset.pattern.permute.xlu0 0
            %1159 = vperm.xlu0 %1158, %v1113
            %v1160 = vpop.permute.xlu0 %1159
            %1163 = vset.pattern.permute.xlu0 0
            %1164 = vperm.xlu0 %1163, %v1114
            %v1165 = vpop.permute.xlu0 %1164
            %1168 = vset.pattern.permute.xlu0 0
            %1169 = vperm.xlu0 %1168, %v1115
            %v1170 = vpop.permute.xlu0 %1169
            %1173 = vset.pattern.permute.xlu0 0
            %1174 = vperm.xlu0 %1173, %v1116
            %v1175 = vpop.permute.xlu0 %1174
            %v1177 = vlaneseq
            %v1178 = vshrl.u32 %v1177, 7
            %v1179 = vsub.s32 0, %v1178
            %v1180 = vrot.slane %v462, %v1179
            %v1181 = vmul.f32 %v1120, %v1180
            %v1182 = vmul.f32 %v1125, %v1180
            %v1183 = vmul.f32 %v1130, %v1180
            %v1184 = vmul.f32 %v1135, %v1180
            %v1185 = vmul.f32 %v1140, %v1180
            %v1186 = vmul.f32 %v1145, %v1180
            %v1187 = vmul.f32 %v1150, %v1180
            %v1188 = vmul.f32 %v1155, %v1180
            %v1189 = vmul.f32 %v1160, %v1180
            %v1190 = vmul.f32 %v1165, %v1180
            %v1191 = vmul.f32 %v1170, %v1180
            %v1192 = vmul.f32 %v1175, %v1180
            %v1193 = vadd.f32 %v1090, %v1181
            %v1194 = vadd.f32 %v1091, %v1182
            %v1195 = vadd.f32 %v1092, %v1183
            %v1196 = vadd.f32 %v1093, %v1184
            %v1197 = vadd.f32 %v1094, %v1185
            %v1198 = vadd.f32 %v1095, %v1186
            %v1199 = vadd.f32 %v1096, %v1187
            %v1200 = vadd.f32 %v1097, %v1188
            %v1201 = vadd.f32 %v1098, %v1189
            %v1202 = vadd.f32 %v1099, %v1190
            %v1203 = vadd.f32 %v1100, %v1191
            %v1204 = vadd.f32 %v1101, %v1192
            %s1205 = sadd.s32 %s483, 37
            %s1206 = sadd.s32 %s1205, %s484
            %s1207 = scalar_lea.vmem %s415, %s1206
            %v1208 = vld [vmem:[%s1207] sm:$0xff]
            %v1209 = vld [vmem:[%s1207 + $0x8] sm:$0xff]
            %v1210 = vld [vmem:[%s1207 + $0x10] sm:$0xff]
            %v1211 = vld [vmem:[%s1207 + $0x18] sm:$0xff]
            %v1212 = vld [vmem:[%s1207 + $0x20] sm:$0xff]
            %v1213 = vld [vmem:[%s1207 + $0x28] sm:$0xff]
            %v1214 = vld [vmem:[%s1207 + $0x30] sm:$0xff]
            %v1215 = vld [vmem:[%s1207 + $0x38] sm:$0xff]
            %v1216 = vld [vmem:[%s1207 + $0x40] sm:$0xff]
            %v1217 = vld [vmem:[%s1207 + $0x48] sm:$0xff]
            %v1218 = vld [vmem:[%s1207 + $0x50] sm:$0xff]
            %v1219 = vld [vmem:[%s1207 + $0x58] sm:$0xff]
            %1221 = vset.pattern.permute.xlu0 0
            %1222 = vperm.xlu0 %1221, %v1208
            %v1223 = vpop.permute.xlu0 %1222
            %1226 = vset.pattern.permute.xlu0 0
            %1227 = vperm.xlu0 %1226, %v1209
            %v1228 = vpop.permute.xlu0 %1227
            %1231 = vset.pattern.permute.xlu0 0
            %1232 = vperm.xlu0 %1231, %v1210
            %v1233 = vpop.permute.xlu0 %1232
            %1236 = vset.pattern.permute.xlu0 0
            %1237 = vperm.xlu0 %1236, %v1211
            %v1238 = vpop.permute.xlu0 %1237
            %1241 = vset.pattern.permute.xlu0 0
            %1242 = vperm.xlu0 %1241, %v1212
            %v1243 = vpop.permute.xlu0 %1242
            %1246 = vset.pattern.permute.xlu0 0
            %1247 = vperm.xlu0 %1246, %v1213
            %v1248 = vpop.permute.xlu0 %1247
            %1251 = vset.pattern.permute.xlu0 0
            %1252 = vperm.xlu0 %1251, %v1214
            %v1253 = vpop.permute.xlu0 %1252
            %1256 = vset.pattern.permute.xlu0 0
            %1257 = vperm.xlu0 %1256, %v1215
            %v1258 = vpop.permute.xlu0 %1257
            %1261 = vset.pattern.permute.xlu0 0
            %1262 = vperm.xlu0 %1261, %v1216
            %v1263 = vpop.permute.xlu0 %1262
            %1266 = vset.pattern.permute.xlu0 0
            %1267 = vperm.xlu0 %1266, %v1217
            %v1268 = vpop.permute.xlu0 %1267
            %1271 = vset.pattern.permute.xlu0 0
            %1272 = vperm.xlu0 %1271, %v1218
            %v1273 = vpop.permute.xlu0 %1272
            %1276 = vset.pattern.permute.xlu0 0
            %1277 = vperm.xlu0 %1276, %v1219
            %v1278 = vpop.permute.xlu0 %1277
            %v1280 = vlaneseq
            %v1281 = vshrl.u32 %v1280, 7
            %v1282 = vsub.s32 0, %v1281
            %v1283 = vrot.slane %v463, %v1282
            %v1284 = vmul.f32 %v1223, %v1283
            %v1285 = vmul.f32 %v1228, %v1283
            %v1286 = vmul.f32 %v1233, %v1283
            %v1287 = vmul.f32 %v1238, %v1283
            %v1288 = vmul.f32 %v1243, %v1283
            %v1289 = vmul.f32 %v1248, %v1283
            %v1290 = vmul.f32 %v1253, %v1283
            %v1291 = vmul.f32 %v1258, %v1283
            %v1292 = vmul.f32 %v1263, %v1283
            %v1293 = vmul.f32 %v1268, %v1283
            %v1294 = vmul.f32 %v1273, %v1283
            %v1295 = vmul.f32 %v1278, %v1283
            %v1296 = vadd.f32 %v1193, %v1284
            %v1297 = vadd.f32 %v1194, %v1285
            %v1298 = vadd.f32 %v1195, %v1286
            %v1299 = vadd.f32 %v1196, %v1287
            %v1300 = vadd.f32 %v1197, %v1288
            %v1301 = vadd.f32 %v1198, %v1289
            %v1302 = vadd.f32 %v1199, %v1290
            %v1303 = vadd.f32 %v1200, %v1291
            %v1304 = vadd.f32 %v1201, %v1292
            %v1305 = vadd.f32 %v1202, %v1293
            %v1306 = vadd.f32 %v1203, %v1294
            %v1307 = vadd.f32 %v1204, %v1295
            %s1308 = sadd.s32 %s483, 38
            %s1309 = sadd.s32 %s1308, %s484
            %s1310 = scalar_lea.vmem %s415, %s1309
            %v1311 = vld [vmem:[%s1310] sm:$0xff]
            %v1312 = vld [vmem:[%s1310 + $0x8] sm:$0xff]
            %v1313 = vld [vmem:[%s1310 + $0x10] sm:$0xff]
            %v1314 = vld [vmem:[%s1310 + $0x18] sm:$0xff]
            %v1315 = vld [vmem:[%s1310 + $0x20] sm:$0xff]
            %v1316 = vld [vmem:[%s1310 + $0x28] sm:$0xff]
            %v1317 = vld [vmem:[%s1310 + $0x30] sm:$0xff]
            %v1318 = vld [vmem:[%s1310 + $0x38] sm:$0xff]
            %v1319 = vld [vmem:[%s1310 + $0x40] sm:$0xff]
            %v1320 = vld [vmem:[%s1310 + $0x48] sm:$0xff]
            %v1321 = vld [vmem:[%s1310 + $0x50] sm:$0xff]
            %v1322 = vld [vmem:[%s1310 + $0x58] sm:$0xff]
            %1324 = vset.pattern.permute.xlu0 0
            %1325 = vperm.xlu0 %1324, %v1311
            %v1326 = vpop.permute.xlu0 %1325
            %1329 = vset.pattern.permute.xlu0 0
            %1330 = vperm.xlu0 %1329, %v1312
            %v1331 = vpop.permute.xlu0 %1330
            %1334 = vset.pattern.permute.xlu0 0
            %1335 = vperm.xlu0 %1334, %v1313
            %v1336 = vpop.permute.xlu0 %1335
            %1339 = vset.pattern.permute.xlu0 0
            %1340 = vperm.xlu0 %1339, %v1314
            %v1341 = vpop.permute.xlu0 %1340
            %1344 = vset.pattern.permute.xlu0 0
            %1345 = vperm.xlu0 %1344, %v1315
            %v1346 = vpop.permute.xlu0 %1345
            %1349 = vset.pattern.permute.xlu0 0
            %1350 = vperm.xlu0 %1349, %v1316
            %v1351 = vpop.permute.xlu0 %1350
            %1354 = vset.pattern.permute.xlu0 0
            %1355 = vperm.xlu0 %1354, %v1317
            %v1356 = vpop.permute.xlu0 %1355
            %1359 = vset.pattern.permute.xlu0 0
            %1360 = vperm.xlu0 %1359, %v1318
            %v1361 = vpop.permute.xlu0 %1360
            %1364 = vset.pattern.permute.xlu0 0
            %1365 = vperm.xlu0 %1364, %v1319
            %v1366 = vpop.permute.xlu0 %1365
            %1369 = vset.pattern.permute.xlu0 0
            %1370 = vperm.xlu0 %1369, %v1320
            %v1371 = vpop.permute.xlu0 %1370
            %1374 = vset.pattern.permute.xlu0 0
            %1375 = vperm.xlu0 %1374, %v1321
            %v1376 = vpop.permute.xlu0 %1375
            %1379 = vset.pattern.permute.xlu0 0
            %1380 = vperm.xlu0 %1379, %v1322
            %v1381 = vpop.permute.xlu0 %1380
            %v1383 = vlaneseq
            %v1384 = vshrl.u32 %v1383, 7
            %v1385 = vsub.s32 0, %v1384
            %v1386 = vrot.slane %v464, %v1385
            %v1387 = vmul.f32 %v1326, %v1386
            %v1388 = vmul.f32 %v1331, %v1386
            %v1389 = vmul.f32 %v1336, %v1386
            %v1390 = vmul.f32 %v1341, %v1386
            %v1391 = vmul.f32 %v1346, %v1386
            %v1392 = vmul.f32 %v1351, %v1386
            %v1393 = vmul.f32 %v1356, %v1386
            %v1394 = vmul.f32 %v1361, %v1386
            %v1395 = vmul.f32 %v1366, %v1386
            %v1396 = vmul.f32 %v1371, %v1386
            %v1397 = vmul.f32 %v1376, %v1386
            %v1398 = vmul.f32 %v1381, %v1386
            %v1399 = vadd.f32 %v1296, %v1387
            %v1400 = vadd.f32 %v1297, %v1388
            %v1401 = vadd.f32 %v1298, %v1389
            %v1402 = vadd.f32 %v1299, %v1390
            %v1403 = vadd.f32 %v1300, %v1391
            %v1404 = vadd.f32 %v1301, %v1392
            %v1405 = vadd.f32 %v1302, %v1393
            %v1406 = vadd.f32 %v1303, %v1394
            %v1407 = vadd.f32 %v1304, %v1395
            %v1408 = vadd.f32 %v1305, %v1396
            %v1409 = vadd.f32 %v1306, %v1397
            %v1410 = vadd.f32 %v1307, %v1398
            %v1412 = vlaneseq
            %v1413 = vshrl.u32 %v1412, 7
            %v1414 = vsub.s32 0, %v1413
            %v1415 = vrot.slane %v465, %v1414
            %v1417 = vmul.f32 %v1399, %v1415
            %v1418 = vmul.f32 %v1400, %v1415
            %v1419 = vmul.f32 %v1401, %v1415
            %v1420 = vmul.f32 %v1402, %v1415
            %v1421 = vmul.f32 %v1403, %v1415
            %v1422 = vmul.f32 %v1404, %v1415
            %v1423 = vmul.f32 %v1405, %v1415
            %v1424 = vmul.f32 %v1406, %v1415
            %v1425 = vmul.f32 %v1407, %v1415
            %v1426 = vmul.f32 %v1408, %v1415
            %v1427 = vmul.f32 %v1409, %v1415
            %v1428 = vmul.f32 %v1410, %v1415
            %v1430 = vlaneseq
            %v1431 = vshrl.u32 %v1430, 7
            %v1432 = vsub.s32 0, %v1431
            %v1433 = vrot.slane %v466, %v1432
            %v1435 = vadd.f32 %v1417, %v1433
            %v1436 = vadd.f32 %v1418, %v1433
            %v1437 = vadd.f32 %v1419, %v1433
            %v1438 = vadd.f32 %v1420, %v1433
            %v1439 = vadd.f32 %v1421, %v1433
            %v1440 = vadd.f32 %v1422, %v1433
            %v1441 = vadd.f32 %v1423, %v1433
            %v1442 = vadd.f32 %v1424, %v1433
            %v1443 = vadd.f32 %v1425, %v1433
            %v1444 = vadd.f32 %v1426, %v1433
            %v1445 = vadd.f32 %v1427, %v1433
            %v1446 = vadd.f32 %v1428, %v1433
            %v1447 = vmax.f32 %v1435, 0.0
            %v1448 = vmax.f32 %v1436, 0.0
            %v1449 = vmax.f32 %v1437, 0.0
            %v1450 = vmax.f32 %v1438, 0.0
            %v1451 = vmax.f32 %v1439, 0.0
            %v1452 = vmax.f32 %v1440, 0.0
            %v1453 = vmax.f32 %v1441, 0.0
            %v1454 = vmax.f32 %v1442, 0.0
            %v1455 = vmax.f32 %v1443, 0.0
            %v1456 = vmax.f32 %v1444, 0.0
            %v1457 = vmax.f32 %v1445, 0.0
            %v1458 = vmax.f32 %v1446, 0.0
            %s1459 = scalar_lea.vmem [#allocation4], %s483
            %1460 = vst [vmem:[%s1459] sm:$0xff] %v1447
            %1461 = vst [vmem:[%s1459 + $0x8] sm:$0xff] %v1448
            %1462 = vst [vmem:[%s1459 + $0x10] sm:$0xff] %v1449
            %1463 = vst [vmem:[%s1459 + $0x18] sm:$0xff] %v1450
            %1464 = vst [vmem:[%s1459 + $0x20] sm:$0xff] %v1451
            %1465 = vst [vmem:[%s1459 + $0x28] sm:$0xff] %v1452
            %1466 = vst [vmem:[%s1459 + $0x30] sm:$0xff] %v1453
            %1467 = vst [vmem:[%s1459 + $0x38] sm:$0xff] %v1454
            %1468 = vst [vmem:[%s1459 + $0x40] sm:$0xff] %v1455
            %1469 = vst [vmem:[%s1459 + $0x48] sm:$0xff] %v1456
            %1470 = vst [vmem:[%s1459 + $0x50] sm:$0xff] %v1457
            %1471 = vst [vmem:[%s1459 + $0x58] sm:$0xff] %v1458
          $region80: #{mnistnet_forward.1} parent=72 // loop_footer
            %s482 = sadd.s32 1, %s478
          $region81: #{mnistnet_forward.1} parent=72 // loop_footer_branch
            %477 = sbr.rel target = $region77
          $region82: #{mnistnet_forward.1} parent=72 // loop_exit
            _
          %v1472 = vld [vmem:[#allocation4] ss:$2 sm:$0xff]
          %s1473 = scalar_lea.vmem [#allocation4], 1
          %v1474 = vld [vmem:[%s1473] ss:$2 sm:$0xff]
          %s1475 = scalar_lea.vmem [#allocation4], 18
          %v1476 = vld [vmem:[%s1475] ss:$2 sm:$0xff]
          %s1477 = scalar_lea.vmem [#allocation4], 19
          %v1478 = vld [vmem:[%s1477] ss:$2 sm:$0xff]
          %v1479 = vmax.f32 %v1472, %v1474
          %v1480 = vmax.f32 %v1476, %v1478
          %v1481 = vmax.f32 %v1479, %v1480
          %v1482 = vpack.c.bf16 %v1481, %v1481
          %1483 = vst [vmem:[#allocation2 + $0xc] sm:$0xf] %v1482
          %s1484 = scalar_lea.vmem [#allocation4], 36
          %v1485 = vld [vmem:[%s1484] ss:$2 sm:$0xff]
          %s1486 = scalar_lea.vmem [#allocation4], 37
          %v1487 = vld [vmem:[%s1486] ss:$2 sm:$0xff]
          %s1488 = scalar_lea.vmem [#allocation4], 54
          %v1489 = vld [vmem:[%s1488] ss:$2 sm:$0xff]
          %s1490 = scalar_lea.vmem [#allocation4], 55
          %v1491 = vld [vmem:[%s1490] ss:$2 sm:$0xff]
          %v1492 = vmax.f32 %v1485, %v1487
          %v1493 = vmax.f32 %v1489, %v1491
          %v1494 = vmax.f32 %v1492, %v1493
          %v1495 = vpack.c.bf16 %v1494, %v1494
          %1496 = vst [vmem:[#allocation2 + $0x14] sm:$0xf] %v1495
          %s1497 = scalar_lea.vmem [#allocation4], 72
          %v1498 = vld [vmem:[%s1497] ss:$2 sm:$0xff]
          %s1499 = scalar_lea.vmem [#allocation4], 73
          %v1500 = vld [vmem:[%s1499] ss:$2 sm:$0xff]
          %s1501 = scalar_lea.vmem [#allocation4], 90
          %v1502 = vld [vmem:[%s1501] ss:$2 sm:$0xff]
          %s1503 = scalar_lea.vmem [#allocation4], 91
          %v1504 = vld [vmem:[%s1503] ss:$2 sm:$0xff]
          %v1505 = vmax.f32 %v1498, %v1500
          %v1506 = vmax.f32 %v1502, %v1504
          %v1507 = vmax.f32 %v1505, %v1506
          %v1508 = vpack.c.bf16 %v1507, %v1507
          %1509 = vst [vmem:[#allocation2 + $0x1c] sm:$0xf] %v1508
          %s1510 = scalar_lea.vmem [#allocation4], 108
          %v1511 = vld [vmem:[%s1510] ss:$2 sm:$0xff]
          %s1512 = scalar_lea.vmem [#allocation4], 109
          %v1513 = vld [vmem:[%s1512] ss:$2 sm:$0xff]
          %s1514 = scalar_lea.vmem [#allocation4], 126
          %v1515 = vld [vmem:[%s1514] ss:$2 sm:$0xff]
          %s1516 = scalar_lea.vmem [#allocation4], 127
          %v1517 = vld [vmem:[%s1516] ss:$2 sm:$0xff]
          %v1518 = vmax.f32 %v1511, %v1513
          %v1519 = vmax.f32 %v1515, %v1517
          %v1520 = vmax.f32 %v1518, %v1519
          %v1521 = vpack.c.bf16 %v1520, %v1520
          %1522 = vst [vmem:[#allocation2 + $0x24] sm:$0xf] %v1521
          %s1523 = scalar_lea.vmem [#allocation4], 144
          %v1524 = vld [vmem:[%s1523] ss:$2 sm:$0xff]
          %s1525 = scalar_lea.vmem [#allocation4], 145
          %v1526 = vld [vmem:[%s1525] ss:$2 sm:$0xff]
          %s1527 = scalar_lea.vmem [#allocation4], 162
          %v1528 = vld [vmem:[%s1527] ss:$2 sm:$0xff]
          %s1529 = scalar_lea.vmem [#allocation4], 163
          %v1530 = vld [vmem:[%s1529] ss:$2 sm:$0xff]
          %v1531 = vmax.f32 %v1524, %v1526
          %v1532 = vmax.f32 %v1528, %v1530
          %v1533 = vmax.f32 %v1531, %v1532
          %v1534 = vpack.c.bf16 %v1533, %v1533
          %1535 = vst [vmem:[#allocation2 + $0x2c] sm:$0xf] %v1534
          %s1536 = scalar_lea.vmem [#allocation4], 180
          %v1537 = vld [vmem:[%s1536] ss:$2 sm:$0xff]
          %s1538 = scalar_lea.vmem [#allocation4], 181
          %v1539 = vld [vmem:[%s1538] ss:$2 sm:$0xff]
          %s1540 = scalar_lea.vmem [#allocation4], 198
          %v1541 = vld [vmem:[%s1540] ss:$2 sm:$0xff]
          %s1542 = scalar_lea.vmem [#allocation4], 199
          %v1543 = vld [vmem:[%s1542] ss:$2 sm:$0xff]
          %v1544 = vmax.f32 %v1537, %v1539
          %v1545 = vmax.f32 %v1541, %v1543
          %v1546 = vmax.f32 %v1544, %v1545
          %v1547 = vpack.c.bf16 %v1546, %v1546
          %1548 = vst [vmem:[#allocation2 + $0x34] sm:$0xf] %v1547
          %s1549 = scalar_lea.vmem [#allocation4], 216
          %v1550 = vld [vmem:[%s1549] ss:$2 sm:$0xff]
          %s1551 = scalar_lea.vmem [#allocation4], 217
          %v1552 = vld [vmem:[%s1551] ss:$2 sm:$0xff]
          %s1553 = scalar_lea.vmem [#allocation4], 234
          %v1554 = vld [vmem:[%s1553] ss:$2 sm:$0xff]
          %s1555 = scalar_lea.vmem [#allocation4], 235
          %v1556 = vld [vmem:[%s1555] ss:$2 sm:$0xff]
          %v1557 = vmax.f32 %v1550, %v1552
          %v1558 = vmax.f32 %v1554, %v1556
          %v1559 = vmax.f32 %v1557, %v1558
          %v1560 = vpack.c.bf16 %v1559, %v1559
          %1561 = vst [vmem:[#allocation2 + $0x3c] sm:$0xf] %v1560
          %s1562 = scalar_lea.vmem [#allocation4], 252
          %v1563 = vld [vmem:[%s1562] ss:$2 sm:$0xff]
          %s1564 = scalar_lea.vmem [#allocation4], 253
          %v1565 = vld [vmem:[%s1564] ss:$2 sm:$0xff]
          %s1566 = scalar_lea.vmem [#allocation4], 270
          %v1567 = vld [vmem:[%s1566] ss:$2 sm:$0xff]
          %s1568 = scalar_lea.vmem [#allocation4], 271
          %v1569 = vld [vmem:[%s1568] ss:$2 sm:$0xff]
          %v1570 = vmax.f32 %v1563, %v1565
          %v1571 = vmax.f32 %v1567, %v1569
          %v1572 = vmax.f32 %v1570, %v1571
          %v1573 = vpack.c.bf16 %v1572, %v1572
          %1574 = vst [vmem:[#allocation2 + $0x44] sm:$0xf] %v1573
          %v1575 = vld [vmem:[#allocation2] sm:$0x8]
          %v1576 = vld [vmem:[#allocation2 + $0x4] sm:$0xf]
          %v1577 = vld [vmem:[#allocation2 + $0x8] sm:$0xf]
          %v1578 = vld [vmem:[#allocation2 + $0xc] sm:$0xf]
          %v1579 = vld [vmem:[#allocation2 + $0x10] sm:$0xf]
          %v1580 = vld [vmem:[#allocation2 + $0x14] sm:$0xf]
          %v1581 = vld [vmem:[#allocation2 + $0x18] sm:$0xf]
          %v1582 = vld [vmem:[#allocation2 + $0x1c] sm:$0xf]
          %v1583 = vld [vmem:[#allocation2 + $0x20] sm:$0xf]
          %v1584 = vld [vmem:[#allocation2 + $0x24] sm:$0xf]
          %v1585 = vld [vmem:[#allocation2 + $0x28] sm:$0xf]
          %v1586 = vld [vmem:[#allocation2 + $0x2c] sm:$0xf]
          %v1587 = vld [vmem:[#allocation2 + $0x30] sm:$0xf]
          %v1588 = vld [vmem:[#allocation2 + $0x34] sm:$0xf]
          %v1589 = vld [vmem:[#allocation2 + $0x38] sm:$0xf]
          %v1590 = vld [vmem:[#allocation2 + $0x3c] sm:$0xf]
          %v1591 = vld [vmem:[%s4] sm:$0xf]
          %v1592 = vld [vmem:[%s4 + $0x4] sm:$0xf]
          %v1593 = vld [vmem:[%s4 + $0x8] sm:$0xf]
          %v1594 = vld [vmem:[%s4 + $0xc] sm:$0xf]
          %v1595 = vld [vmem:[%s4 + $0x10] sm:$0xf]
          %v1596 = vld [vmem:[%s4 + $0x14] sm:$0xf]
          %v1597 = vld [vmem:[%s4 + $0x18] sm:$0xf]
          %v1598 = vld [vmem:[%s4 + $0x1c] sm:$0xf]
          %v1599 = vld [vmem:[%s4 + $0x20] sm:$0xf]
          %v1600 = vld [vmem:[%s4 + $0x24] sm:$0xf]
          %v1601 = vld [vmem:[%s4 + $0x28] sm:$0xf]
          %v1602 = vld [vmem:[%s4 + $0x2c] sm:$0xf]
          %v1603 = vld [vmem:[%s4 + $0x30] sm:$0xf]
          %v1604 = vld [vmem:[%s4 + $0x34] sm:$0xf]
          %v1605 = vld [vmem:[%s4 + $0x38] sm:$0xf]
          %v1606 = vld [vmem:[%s4 + $0x3c] sm:$0xf]
          %s1607 = scalar_lea.vmem %s4, 64
          %v1608 = vld [vmem:[%s1607] sm:$0xf]
          %v1609 = vld [vmem:[%s1607 + $0x4] sm:$0xf]
          %v1610 = vld [vmem:[%s1607 + $0x8] sm:$0xf]
          %v1611 = vld [vmem:[%s1607 + $0xc] sm:$0xf]
          %v1612 = vld [vmem:[%s1607 + $0x10] sm:$0xf]
          %v1613 = vld [vmem:[%s1607 + $0x14] sm:$0xf]
          %v1614 = vld [vmem:[%s1607 + $0x18] sm:$0xf]
          %v1615 = vld [vmem:[%s1607 + $0x1c] sm:$0xf]
          %v1616 = vld [vmem:[%s1607 + $0x20] sm:$0xf]
          %v1617 = vld [vmem:[%s1607 + $0x24] sm:$0xf]
          %v1618 = vld [vmem:[%s1607 + $0x28] sm:$0xf]
          %v1619 = vld [vmem:[%s1607 + $0x2c] sm:$0xf]
          %v1620 = vld [vmem:[%s1607 + $0x30] sm:$0xf]
          %v1621 = vld [vmem:[%s1607 + $0x34] sm:$0xf]
          %v1622 = vld [vmem:[%s1607 + $0x38] sm:$0xf]
          %v1623 = vld [vmem:[%s1607 + $0x3c] sm:$0xf]
          %v1639 = vunpack.c.l.b16 %v1576
          %v1640 = vunpack.c.l.b16 %v1577
          %v1641 = vunpack.c.l.b16 %v1578
          %v1642 = vunpack.c.l.b16 %v1579
          %v1643 = vunpack.c.l.b16 %v1580
          %v1644 = vunpack.c.l.b16 %v1581
          %v1645 = vunpack.c.l.b16 %v1582
          %v1646 = vunpack.c.l.b16 %v1583
          %v1647 = vunpack.c.l.b16 %v1584
          %v1648 = vunpack.c.l.b16 %v1585
          %v1649 = vunpack.c.l.b16 %v1586
          %v1650 = vunpack.c.l.b16 %v1587
          %v1651 = vunpack.c.l.b16 %v1588
          %v1652 = vunpack.c.l.b16 %v1589
          %v1653 = vunpack.c.l.b16 %v1590
          %v1654 = vpack.c.b16 %v1640, %v1639
          %v1655 = vpack.c.b16 %v1642, %v1641
          %v1656 = vpack.c.b16 %v1644, %v1643
          %v1657 = vpack.c.b16 %v1646, %v1645
          %v1658 = vpack.c.b16 %v1648, %v1647
          %v1659 = vpack.c.b16 %v1650, %v1649
          %v1660 = vpack.c.b16 %v1652, %v1651
          %v1661 = vpack.c.b16 %v1653, %v1653
          %v1686 = vunpack.c.l.b16 %v1608
          %v1687 = vunpack.c.l.b16 %v1609
          %v1688 = vunpack.c.l.b16 %v1610
          %v1689 = vunpack.c.l.b16 %v1611
          %v1690 = vunpack.c.l.b16 %v1612
          %v1691 = vunpack.c.l.b16 %v1613
          %v1692 = vunpack.c.l.b16 %v1614
          %v1693 = vunpack.c.l.b16 %v1615
          %v1694 = vunpack.c.l.b16 %v1616
          %v1695 = vunpack.c.l.b16 %v1617
          %v1696 = vunpack.c.l.b16 %v1618
          %v1697 = vunpack.c.l.b16 %v1619
          %v1698 = vunpack.c.l.b16 %v1620
          %v1699 = vunpack.c.l.b16 %v1621
          %v1700 = vunpack.c.l.b16 %v1622
          %v1701 = vunpack.c.l.b16 %v1623
          %v1702 = vpack.c.b16 %v1687, %v1686
          %v1703 = vpack.c.b16 %v1689, %v1688
          %v1704 = vpack.c.b16 %v1691, %v1690
          %v1705 = vpack.c.b16 %v1693, %v1692
          %v1706 = vpack.c.b16 %v1695, %v1694
          %v1707 = vpack.c.b16 %v1697, %v1696
          %v1708 = vpack.c.b16 %v1699, %v1698
          %v1709 = vpack.c.b16 %v1701, %v1700
          %1718 = vmatprep.subr.bf16.mxu0 0
          %1719 = vmatpush1.bf16.msra.mxu0 %v1702
          %1720 = vmatprep.subr.bf16.mxu0 0
          %1721 = vmatpush1.bf16.msra.mxu0 %v1703
          %1722 = vmatprep.subr.bf16.mxu0 0
          %1723 = vmatpush1.bf16.msra.mxu0 %v1704
          %1724 = vmatprep.subr.bf16.mxu0 0
          %1725 = vmatpush1.bf16.msra.mxu0 %v1705
          %1726 = vmatprep.subr.bf16.mxu0 0
          %1727 = vmatpush1.bf16.msra.mxu0 %v1706
          %1728 = vmatprep.subr.bf16.mxu0 0
          %1729 = vmatpush1.bf16.msra.mxu0 %v1707
          %1730 = vmatprep.subr.bf16.mxu0 0
          %1731 = vmatpush1.bf16.msra.mxu0 %v1708
          %1732 = vmatprep.subr.bf16.mxu0 0
          %1733 = vmatpush1.bf16.msra.mxu0 %v1709
          %1734 = vmatprep.subr.bf16.mxu0 0
          %1735 = vmatpush1.bf16.msra.mxu0 0
          %1736 = vmatprep.subr.bf16.mxu0 0
          %1737 = vmatpush1.bf16.msra.mxu0 0
          %1738 = vmatprep.subr.bf16.mxu0 0
          %1739 = vmatpush1.bf16.msra.mxu0 0
          %1740 = vmatprep.subr.bf16.mxu0 0
          %1741 = vmatpush1.bf16.msra.mxu0 0
          %1742 = vmatprep.subr.bf16.mxu0 0
          %1743 = vmatpush1.bf16.msra.mxu0 0
          %1744 = vmatprep.subr.bf16.mxu0 0
          %1745 = vmatpush1.bf16.msra.mxu0 0
          %1746 = vmatprep.subr.bf16.mxu0 0
          %1747 = vmatpush1.bf16.msra.mxu0 0
          %1748 = vmatprep.subr.bf16.mxu0 0
          %1749 = vmatpush1.bf16.msra.mxu0 0
          %1750 = vmatprep.mubr.bf16.mxu0 0
          %1751 = vmatmul.mubr.bf16.gmra.mrb[0].mxu0 %v1654
          %v1752 = vpop.f32.mrb[0].mxu0
          %v1753 = vadd.f32 0.0, %v1752
          %v1754 = vpop.f32.mrb[0].mxu0
          %v1755 = vpop.f32.mrb[0].mxu0
          %v1756 = vadd.f32 0.0, %v1755
          %v1757 = vpop.f32.mrb[0].mxu0
          %1758 = vmatprep.mubr.bf16.mxu0 0
          %1759 = vmatmul.mubr.bf16.gmra.mrb[0].mxu0 %v1655
          %v1760 = vpop.f32.mrb[0].mxu0
          %v1761 = vadd.f32 0.0, %v1760
          %v1762 = vpop.f32.mrb[0].mxu0
          %v1763 = vpop.f32.mrb[0].mxu0
          %v1764 = vadd.f32 0.0, %v1763
          %v1765 = vpop.f32.mrb[0].mxu0
          %1766 = vmatprep.mubr.bf16.mxu0 0
          %1767 = vmatmul.mubr.bf16.gmra.mrb[0].mxu0 %v1656
          %v1768 = vpop.f32.mrb[0].mxu0
          %v1769 = vadd.f32 0.0, %v1768
          %v1770 = vpop.f32.mrb[0].mxu0
          %v1771 = vpop.f32.mrb[0].mxu0
          %v1772 = vadd.f32 0.0, %v1771
          %v1773 = vpop.f32.mrb[0].mxu0
          %1774 = vmatprep.mubr.bf16.mxu0 0
          %1775 = vmatmul.mubr.bf16.gmra.mrb[0].mxu0 %v1657
          %v1776 = vpop.f32.mrb[0].mxu0
          %v1777 = vadd.f32 0.0, %v1776
          %v1778 = vpop.f32.mrb[0].mxu0
          %v1779 = vpop.f32.mrb[0].mxu0
          %v1780 = vadd.f32 0.0, %v1779
          %v1781 = vpop.f32.mrb[0].mxu0
          %1782 = vmatprep.mubr.bf16.mxu0 0
          %1783 = vmatmul.mubr.bf16.gmra.mrb[0].mxu0 %v1658
          %v1784 = vpop.f32.mrb[0].mxu0
          %v1785 = vadd.f32 0.0, %v1784
          %v1786 = vpop.f32.mrb[0].mxu0
          %v1787 = vpop.f32.mrb[0].mxu0
          %v1788 = vadd.f32 0.0, %v1787
          %v1789 = vpop.f32.mrb[0].mxu0
          %1790 = vmatprep.mubr.bf16.mxu0 0
          %1791 = vmatmul.mubr.bf16.gmra.mrb[0].mxu0 %v1659
          %v1792 = vpop.f32.mrb[0].mxu0
          %v1793 = vadd.f32 0.0, %v1792
          %v1794 = vpop.f32.mrb[0].mxu0
          %v1795 = vpop.f32.mrb[0].mxu0
          %v1796 = vadd.f32 0.0, %v1795
          %v1797 = vpop.f32.mrb[0].mxu0
          %1798 = vmatprep.mubr.bf16.mxu0 0
          %1799 = vmatmul.mubr.bf16.gmra.mrb[0].mxu0 %v1660
          %v1800 = vpop.f32.mrb[0].mxu0
          %v1801 = vadd.f32 0.0, %v1800
          %v1802 = vpop.f32.mrb[0].mxu0
          %v1803 = vpop.f32.mrb[0].mxu0
          %v1804 = vadd.f32 0.0, %v1803
          %v1805 = vpop.f32.mrb[0].mxu0
          %1806 = vmatprep.mubr.bf16.mxu0 0
          %1807 = vmatmul.mubr.bf16.gmra.mrb[0].mxu0 %v1661
          %v1808 = vpop.f32.mrb[0].mxu0
          %v1809 = vadd.f32 0.0, %v1808
          %v1810 = vpop.f32.mrb[0].mxu0
          %v1811 = vpop.f32.mrb[0].mxu0
          %v1812 = vpop.f32.mrb[0].mxu0
          %1813 = vdwg.mxu0
          %v1815 = vunpack.c.l.b16 %v1575
          %v1816 = vpack.c.b16 %v1639, %v1815
          %v1817 = vpack.c.b16 %v1641, %v1640
          %v1818 = vpack.c.b16 %v1643, %v1642
          %v1819 = vpack.c.b16 %v1645, %v1644
          %v1820 = vpack.c.b16 %v1647, %v1646
          %v1821 = vpack.c.b16 %v1649, %v1648
          %v1822 = vpack.c.b16 %v1651, %v1650
          %v1823 = vpack.c.b16 %v1653, %v1652
          %vm1824 = vsmask.f32 4352
          %v1826 = vshrl.u32 %v1816, 16
          %v1828 = vrot.slane %v1826, 3
          %v1829 = vshll.u32 %v1816, 16
          %v1831 = vrot.slane %v1829, 4
          %v1832 = vor.u32 %v1828, %v1831
          %v1834 = vshrl.u32 %v1817, 16
          %v1836 = vrot.slane %v1834, 3
          %v1837 = vshll.u32 %v1817, 16
          %v1839 = vrot.slane %v1837, 4
          %v1840 = vor.u32 %v1836, %v1839
          %v1841 = vsel %vm1824, %v1832, %v1840
          %v1843 = vshrl.u32 %v1818, 16
          %v1845 = vrot.slane %v1843, 3
          %v1846 = vshll.u32 %v1818, 16
          %v1848 = vrot.slane %v1846, 4
          %v1849 = vor.u32 %v1845, %v1848
          %v1850 = vsel %vm1824, %v1840, %v1849
          %v1852 = vshrl.u32 %v1819, 16
          %v1854 = vrot.slane %v1852, 3
          %v1855 = vshll.u32 %v1819, 16
          %v1857 = vrot.slane %v1855, 4
          %v1858 = vor.u32 %v1854, %v1857
          %v1859 = vsel %vm1824, %v1849, %v1858
          %v1861 = vshrl.u32 %v1820, 16
          %v1863 = vrot.slane %v1861, 3
          %v1864 = vshll.u32 %v1820, 16
          %v1866 = vrot.slane %v1864, 4
          %v1867 = vor.u32 %v1863, %v1866
          %v1868 = vsel %vm1824, %v1858, %v1867
          %v1870 = vshrl.u32 %v1821, 16
          %v1872 = vrot.slane %v1870, 3
          %v1873 = vshll.u32 %v1821, 16
          %v1875 = vrot.slane %v1873, 4
          %v1876 = vor.u32 %v1872, %v1875
          %v1877 = vsel %vm1824, %v1867, %v1876
          %v1879 = vshrl.u32 %v1822, 16
          %v1881 = vrot.slane %v1879, 3
          %v1882 = vshll.u32 %v1822, 16
          %v1884 = vrot.slane %v1882, 4
          %v1885 = vor.u32 %v1881, %v1884
          %v1886 = vsel %vm1824, %v1876, %v1885
          %v1888 = vshrl.u32 %v1823, 16
          %v1890 = vrot.slane %v1888, 3
          %v1891 = vshll.u32 %v1823, 16
          %v1893 = vrot.slane %v1891, 4
          %v1894 = vor.u32 %v1890, %v1893
          %v1895 = vsel %vm1824, %v1885, %v1894
          %v1920 = vunpack.c.l.b16 %v1591
          %v1921 = vunpack.c.l.b16 %v1592
          %v1922 = vunpack.c.l.b16 %v1593
          %v1923 = vunpack.c.l.b16 %v1594
          %v1924 = vunpack.c.l.b16 %v1595
          %v1925 = vunpack.c.l.b16 %v1596
          %v1926 = vunpack.c.l.b16 %v1597
          %v1927 = vunpack.c.l.b16 %v1598
          %v1928 = vunpack.c.l.b16 %v1599
          %v1929 = vunpack.c.l.b16 %v1600
          %v1930 = vunpack.c.l.b16 %v1601
          %v1931 = vunpack.c.l.b16 %v1602
          %v1932 = vunpack.c.l.b16 %v1603
          %v1933 = vunpack.c.l.b16 %v1604
          %v1934 = vunpack.c.l.b16 %v1605
          %v1935 = vunpack.c.l.b16 %v1606
          %v1936 = vpack.c.b16 %v1921, %v1920
          %v1937 = vpack.c.b16 %v1923, %v1922
          %v1938 = vpack.c.b16 %v1925, %v1924
          %v1939 = vpack.c.b16 %v1927, %v1926
          %v1940 = vpack.c.b16 %v1929, %v1928
          %v1941 = vpack.c.b16 %v1931, %v1930
          %v1942 = vpack.c.b16 %v1933, %v1932
          %v1943 = vpack.c.b16 %v1935, %v1934
          %1952 = vmatprep.subr.bf16.mxu0 0
          %1953 = vmatpush1.bf16.msra.mxu0 %v1936
          %1954 = vmatprep.subr.bf16.mxu0 0
          %1955 = vmatpush1.bf16.msra.mxu0 %v1937
          %1956 = vmatprep.subr.bf16.mxu0 0
          %1957 = vmatpush1.bf16.msra.mxu0 %v1938
          %1958 = vmatprep.subr.bf16.mxu0 0
          %1959 = vmatpush1.bf16.msra.mxu0 %v1939
          %1960 = vmatprep.subr.bf16.mxu0 0
          %1961 = vmatpush1.bf16.msra.mxu0 %v1940
          %1962 = vmatprep.subr.bf16.mxu0 0
          %1963 = vmatpush1.bf16.msra.mxu0 %v1941
          %1964 = vmatprep.subr.bf16.mxu0 0
          %1965 = vmatpush1.bf16.msra.mxu0 %v1942
          %1966 = vmatprep.subr.bf16.mxu0 0
          %1967 = vmatpush1.bf16.msra.mxu0 %v1943
          %1968 = vmatprep.subr.bf16.mxu0 0
          %1969 = vmatpush1.bf16.msra.mxu0 0
          %1970 = vmatprep.subr.bf16.mxu0 0
          %1971 = vmatpush1.bf16.msra.mxu0 0
          %1972 = vmatprep.subr.bf16.mxu0 0
          %1973 = vmatpush1.bf16.msra.mxu0 0
          %1974 = vmatprep.subr.bf16.mxu0 0
          %1975 = vmatpush1.bf16.msra.mxu0 0
          %1976 = vmatprep.subr.bf16.mxu0 0
          %1977 = vmatpush1.bf16.msra.mxu0 0
          %1978 = vmatprep.subr.bf16.mxu0 0
          %1979 = vmatpush1.bf16.msra.mxu0 0
          %1980 = vmatprep.subr.bf16.mxu0 0
          %1981 = vmatpush1.bf16.msra.mxu0 0
          %1982 = vmatprep.subr.bf16.mxu0 0
          %1983 = vmatpush1.bf16.msra.mxu0 0
          %1984 = vmatprep.mubr.bf16.mxu0 0
          %1985 = vmatmul.mubr.bf16.gmra.mrb[0].mxu0 %v1841
          %v1986 = vpop.f32.mrb[0].mxu0
          %v1987 = vadd.f32 %v1753, %v1986
          %v1988 = vpop.f32.mrb[0].mxu0
          %v1989 = vpop.f32.mrb[0].mxu0
          %v1990 = vadd.f32 %v1756, %v1989
          %v1991 = vpop.f32.mrb[0].mxu0
          %1992 = vmatprep.mubr.bf16.mxu0 0
          %1993 = vmatmul.mubr.bf16.gmra.mrb[0].mxu0 %v1850
          %v1994 = vpop.f32.mrb[0].mxu0
          %v1995 = vadd.f32 %v1761, %v1994
          %v1996 = vpop.f32.mrb[0].mxu0
          %v1997 = vpop.f32.mrb[0].mxu0
          %v1998 = vadd.f32 %v1764, %v1997
          %v1999 = vpop.f32.mrb[0].mxu0
          %2000 = vmatprep.mubr.bf16.mxu0 0
          %2001 = vmatmul.mubr.bf16.gmra.mrb[0].mxu0 %v1859
          %v2002 = vpop.f32.mrb[0].mxu0
          %v2003 = vadd.f32 %v1769, %v2002
          %v2004 = vpop.f32.mrb[0].mxu0
          %v2005 = vpop.f32.mrb[0].mxu0
          %v2006 = vadd.f32 %v1772, %v2005
          %v2007 = vpop.f32.mrb[0].mxu0
          %2008 = vmatprep.mubr.bf16.mxu0 0
          %2009 = vmatmul.mubr.bf16.gmra.mrb[0].mxu0 %v1868
          %v2010 = vpop.f32.mrb[0].mxu0
          %v2011 = vadd.f32 %v1777, %v2010
          %v2012 = vpop.f32.mrb[0].mxu0
          %v2013 = vpop.f32.mrb[0].mxu0
          %v2014 = vadd.f32 %v1780, %v2013
          %v2015 = vpop.f32.mrb[0].mxu0
          %2016 = vmatprep.mubr.bf16.mxu0 0
          %2017 = vmatmul.mubr.bf16.gmra.mrb[0].mxu0 %v1877
          %v2018 = vpop.f32.mrb[0].mxu0
          %v2019 = vadd.f32 %v1785, %v2018
          %v2020 = vpop.f32.mrb[0].mxu0
          %v2021 = vpop.f32.mrb[0].mxu0
          %v2022 = vadd.f32 %v1788, %v2021
          %v2023 = vpop.f32.mrb[0].mxu0
          %2024 = vmatprep.mubr.bf16.mxu0 0
          %2025 = vmatmul.mubr.bf16.gmra.mrb[0].mxu0 %v1886
          %v2026 = vpop.f32.mrb[0].mxu0
          %v2027 = vadd.f32 %v1793, %v2026
          %v2028 = vpop.f32.mrb[0].mxu0
          %v2029 = vpop.f32.mrb[0].mxu0
          %v2030 = vadd.f32 %v1796, %v2029
          %v2031 = vpop.f32.mrb[0].mxu0
          %2032 = vmatprep.mubr.bf16.mxu0 0
          %2033 = vmatmul.mubr.bf16.gmra.mrb[0].mxu0 %v1895
          %v2034 = vpop.f32.mrb[0].mxu0
          %v2035 = vadd.f32 %v1801, %v2034
          %v2036 = vpop.f32.mrb[0].mxu0
          %v2037 = vpop.f32.mrb[0].mxu0
          %v2038 = vadd.f32 %v1804, %v2037
          %v2039 = vpop.f32.mrb[0].mxu0
          %2040 = vmatprep.mubr.bf16.mxu0 0
          %2041 = vmatmul.mubr.bf16.gmra.mrb[0].mxu0 %v1894
          %v2042 = vpop.f32.mrb[0].mxu0
          %v2043 = vadd.f32 %v1809, %v2042
          %v2044 = vpop.f32.mrb[0].mxu0
          %v2045 = vpop.f32.mrb[0].mxu0
          %v2046 = vpop.f32.mrb[0].mxu0
          %2047 = vdwg.mxu0
          %v2048 = vld [vmem:[#allocation2 + $0x4] sm:$0xf]
          %v2049 = vld [vmem:[#allocation2 + $0x8] sm:$0xf]
          %v2050 = vld [vmem:[#allocation2 + $0xc] sm:$0xf]
          %v2051 = vld [vmem:[#allocation2 + $0x10] sm:$0xf]
          %v2052 = vld [vmem:[#allocation2 + $0x14] sm:$0xf]
          %v2053 = vld [vmem:[#allocation2 + $0x18] sm:$0xf]
          %v2054 = vld [vmem:[#allocation2 + $0x1c] sm:$0xf]
          %v2055 = vld [vmem:[#allocation2 + $0x20] sm:$0xf]
          %v2056 = vld [vmem:[#allocation2 + $0x24] sm:$0xf]
          %v2057 = vld [vmem:[#allocation2 + $0x28] sm:$0xf]
          %v2058 = vld [vmem:[#allocation2 + $0x2c] sm:$0xf]
          %v2059 = vld [vmem:[#allocation2 + $0x30] sm:$0xf]
          %v2060 = vld [vmem:[#allocation2 + $0x34] sm:$0xf]
          %v2061 = vld [vmem:[#allocation2 + $0x38] sm:$0xf]
          %v2062 = vld [vmem:[#allocation2 + $0x3c] sm:$0xf]
          %v2063 = vld [vmem:[#allocation2 + $0x40] sm:$0x1]
          %s2064 = scalar_lea.vmem %s4, 128
          %v2065 = vld [vmem:[%s2064] sm:$0xf]
          %v2066 = vld [vmem:[%s2064 + $0x4] sm:$0xf]
          %v2067 = vld [vmem:[%s2064 + $0x8] sm:$0xf]
          %v2068 = vld [vmem:[%s2064 + $0xc] sm:$0xf]
          %v2069 = vld [vmem:[%s2064 + $0x10] sm:$0xf]
          %v2070 = vld [vmem:[%s2064 + $0x14] sm:$0xf]
          %v2071 = vld [vmem:[%s2064 + $0x18] sm:$0xf]
          %v2072 = vld [vmem:[%s2064 + $0x1c] sm:$0xf]
          %v2073 = vld [vmem:[%s2064 + $0x20] sm:$0xf]
          %v2074 = vld [vmem:[%s2064 + $0x24] sm:$0xf]
          %v2075 = vld [vmem:[%s2064 + $0x28] sm:$0xf]
          %v2076 = vld [vmem:[%s2064 + $0x2c] sm:$0xf]
          %v2077 = vld [vmem:[%s2064 + $0x30] sm:$0xf]
          %v2078 = vld [vmem:[%s2064 + $0x34] sm:$0xf]
          %v2079 = vld [vmem:[%s2064 + $0x38] sm:$0xf]
          %v2080 = vld [vmem:[%s2064 + $0x3c] sm:$0xf]
          %v2097 = vunpack.c.l.b16 %v2048
          %v2098 = vunpack.c.l.b16 %v2049
          %v2099 = vunpack.c.l.b16 %v2050
          %v2100 = vunpack.c.l.b16 %v2051
          %v2101 = vunpack.c.l.b16 %v2052
          %v2102 = vunpack.c.l.b16 %v2053
          %v2103 = vunpack.c.l.b16 %v2054
          %v2104 = vunpack.c.l.b16 %v2055
          %v2105 = vunpack.c.l.b16 %v2056
          %v2106 = vunpack.c.l.b16 %v2057
          %v2107 = vunpack.c.l.b16 %v2058
          %v2108 = vunpack.c.l.b16 %v2059
          %v2109 = vunpack.c.l.b16 %v2060
          %v2110 = vunpack.c.l.b16 %v2061
          %v2111 = vunpack.c.l.b16 %v2062
          %v2112 = vunpack.c.l.b16 %v2063
          %v2113 = vpack.c.b16 %v2098, %v2097
          %v2114 = vpack.c.b16 %v2100, %v2099
          %v2115 = vpack.c.b16 %v2102, %v2101
          %v2116 = vpack.c.b16 %v2104, %v2103
          %v2117 = vpack.c.b16 %v2106, %v2105
          %v2118 = vpack.c.b16 %v2108, %v2107
          %v2119 = vpack.c.b16 %v2110, %v2109
          %v2120 = vpack.c.b16 %v2112, %v2111
          %vm2121 = vsmask.f32 7424
          %v2123 = vshrl.u32 %v2113, 16
          %v2125 = vshll.u32 %v2113, 16
          %v2127 = vrot.slane %v2125, 1
          %v2128 = vor.u32 %v2123, %v2127
          %v2130 = vshll.u32 %v2114, 16
          %v2132 = vrot.slane %v2130, 1
          %v2133 = vsel %vm2121, %v2128, %v2132
          %v2134 = vshrl.u32 %v2114, 16
          %v2136 = vor.u32 %v2134, %v2132
          %v2138 = vshll.u32 %v2115, 16
          %v2140 = vrot.slane %v2138, 1
          %v2141 = vsel %vm2121, %v2136, %v2140
          %v2142 = vshrl.u32 %v2115, 16
          %v2144 = vor.u32 %v2142, %v2140
          %v2146 = vshll.u32 %v2116, 16
          %v2148 = vrot.slane %v2146, 1
          %v2149 = vsel %vm2121, %v2144, %v2148
          %v2150 = vshrl.u32 %v2116, 16
          %v2152 = vor.u32 %v2150, %v2148
          %v2154 = vshll.u32 %v2117, 16
          %v2156 = vrot.slane %v2154, 1
          %v2157 = vsel %vm2121, %v2152, %v2156
          %v2158 = vshrl.u32 %v2117, 16
          %v2160 = vor.u32 %v2158, %v2156
          %v2162 = vshll.u32 %v2118, 16
          %v2164 = vrot.slane %v2162, 1
          %v2165 = vsel %vm2121, %v2160, %v2164
          %v2166 = vshrl.u32 %v2118, 16
          %v2168 = vor.u32 %v2166, %v2164
          %v2170 = vshll.u32 %v2119, 16
          %v2172 = vrot.slane %v2170, 1
          %v2173 = vsel %vm2121, %v2168, %v2172
          %v2174 = vshrl.u32 %v2119, 16
          %v2176 = vor.u32 %v2174, %v2172
          %v2178 = vshll.u32 %v2120, 16
          %v2180 = vrot.slane %v2178, 1
          %v2181 = vsel %vm2121, %v2176, %v2180
          %v2182 = vshrl.u32 %v2120, 16
          %v2184 = vor.u32 %v2182, %v2180
          %v2209 = vunpack.c.l.b16 %v2065
          %v2210 = vunpack.c.l.b16 %v2066
          %v2211 = vunpack.c.l.b16 %v2067
          %v2212 = vunpack.c.l.b16 %v2068
          %v2213 = vunpack.c.l.b16 %v2069
          %v2214 = vunpack.c.l.b16 %v2070
          %v2215 = vunpack.c.l.b16 %v2071
          %v2216 = vunpack.c.l.b16 %v2072
          %v2217 = vunpack.c.l.b16 %v2073
          %v2218 = vunpack.c.l.b16 %v2074
          %v2219 = vunpack.c.l.b16 %v2075
          %v2220 = vunpack.c.l.b16 %v2076
          %v2221 = vunpack.c.l.b16 %v2077
          %v2222 = vunpack.c.l.b16 %v2078
          %v2223 = vunpack.c.l.b16 %v2079
          %v2224 = vunpack.c.l.b16 %v2080
          %v2225 = vpack.c.b16 %v2210, %v2209
          %v2226 = vpack.c.b16 %v2212, %v2211
          %v2227 = vpack.c.b16 %v2214, %v2213
          %v2228 = vpack.c.b16 %v2216, %v2215
          %v2229 = vpack.c.b16 %v2218, %v2217
          %v2230 = vpack.c.b16 %v2220, %v2219
          %v2231 = vpack.c.b16 %v2222, %v2221
          %v2232 = vpack.c.b16 %v2224, %v2223
          %2241 = vmatprep.subr.bf16.mxu0 0
          %2242 = vmatpush1.bf16.msra.mxu0 %v2225
          %2243 = vmatprep.subr.bf16.mxu0 0
          %2244 = vmatpush1.bf16.msra.mxu0 %v2226
          %2245 = vmatprep.subr.bf16.mxu0 0
          %2246 = vmatpush1.bf16.msra.mxu0 %v2227
          %2247 = vmatprep.subr.bf16.mxu0 0
          %2248 = vmatpush1.bf16.msra.mxu0 %v2228
          %2249 = vmatprep.subr.bf16.mxu0 0
          %2250 = vmatpush1.bf16.msra.mxu0 %v2229
          %2251 = vmatprep.subr.bf16.mxu0 0
          %2252 = vmatpush1.bf16.msra.mxu0 %v2230
          %2253 = vmatprep.subr.bf16.mxu0 0
          %2254 = vmatpush1.bf16.msra.mxu0 %v2231
          %2255 = vmatprep.subr.bf16.mxu0 0
          %2256 = vmatpush1.bf16.msra.mxu0 %v2232
          %2257 = vmatprep.subr.bf16.mxu0 0
          %2258 = vmatpush1.bf16.msra.mxu0 0
          %2259 = vmatprep.subr.bf16.mxu0 0
          %2260 = vmatpush1.bf16.msra.mxu0 0
          %2261 = vmatprep.subr.bf16.mxu0 0
          %2262 = vmatpush1.bf16.msra.mxu0 0
          %2263 = vmatprep.subr.bf16.mxu0 0
          %2264 = vmatpush1.bf16.msra.mxu0 0
          %2265 = vmatprep.subr.bf16.mxu0 0
          %2266 = vmatpush1.bf16.msra.mxu0 0
          %2267 = vmatprep.subr.bf16.mxu0 0
          %2268 = vmatpush1.bf16.msra.mxu0 0
          %2269 = vmatprep.subr.bf16.mxu0 0
          %2270 = vmatpush1.bf16.msra.mxu0 0
          %2271 = vmatprep.subr.bf16.mxu0 0
          %2272 = vmatpush1.bf16.msra.mxu0 0
          %2273 = vmatprep.mubr.bf16.mxu0 0
          %2274 = vmatmul.mubr.bf16.gmra.mrb[0].mxu0 %v2133
          %v2275 = vpop.f32.mrb[0].mxu0
          %v2276 = vadd.f32 0.0, %v2275
          %v2277 = vpop.f32.mrb[0].mxu0
          %v2278 = vpop.f32.mrb[0].mxu0
          %v2279 = vadd.f32 0.0, %v2278
          %v2280 = vpop.f32.mrb[0].mxu0
          %2281 = vmatprep.mubr.bf16.mxu0 0
          %2282 = vmatmul.mubr.bf16.gmra.mrb[0].mxu0 %v2141
          %v2283 = vpop.f32.mrb[0].mxu0
          %v2284 = vadd.f32 0.0, %v2283
          %v2285 = vpop.f32.mrb[0].mxu0
          %v2286 = vpop.f32.mrb[0].mxu0
          %v2287 = vadd.f32 0.0, %v2286
          %v2288 = vpop.f32.mrb[0].mxu0
          %2289 = vmatprep.mubr.bf16.mxu0 0
          %2290 = vmatmul.mubr.bf16.gmra.mrb[0].mxu0 %v2149
          %v2291 = vpop.f32.mrb[0].mxu0
          %v2292 = vadd.f32 0.0, %v2291
          %v2293 = vpop.f32.mrb[0].mxu0
          %v2294 = vpop.f32.mrb[0].mxu0
          %v2295 = vadd.f32 0.0, %v2294
          %v2296 = vpop.f32.mrb[0].mxu0
          %2297 = vmatprep.mubr.bf16.mxu0 0
          %2298 = vmatmul.mubr.bf16.gmra.mrb[0].mxu0 %v2157
          %v2299 = vpop.f32.mrb[0].mxu0
          %v2300 = vadd.f32 0.0, %v2299
          %v2301 = vpop.f32.mrb[0].mxu0
          %v2302 = vpop.f32.mrb[0].mxu0
          %v2303 = vadd.f32 0.0, %v2302
          %v2304 = vpop.f32.mrb[0].mxu0
          %2305 = vmatprep.mubr.bf16.mxu0 0
          %2306 = vmatmul.mubr.bf16.gmra.mrb[0].mxu0 %v2165
          %v2307 = vpop.f32.mrb[0].mxu0
          %v2308 = vadd.f32 0.0, %v2307
          %v2309 = vpop.f32.mrb[0].mxu0
          %v2310 = vpop.f32.mrb[0].mxu0
          %v2311 = vadd.f32 0.0, %v2310
          %v2312 = vpop.f32.mrb[0].mxu0
          %2313 = vmatprep.mubr.bf16.mxu0 0
          %2314 = vmatmul.mubr.bf16.gmra.mrb[0].mxu0 %v2173
          %v2315 = vpop.f32.mrb[0].mxu0
          %v2316 = vadd.f32 0.0, %v2315
          %v2317 = vpop.f32.mrb[0].mxu0
          %v2318 = vpop.f32.mrb[0].mxu0
          %v2319 = vadd.f32 0.0, %v2318
          %v2320 = vpop.f32.mrb[0].mxu0
          %2321 = vmatprep.mubr.bf16.mxu0 0
          %2322 = vmatmul.mubr.bf16.gmra.mrb[0].mxu0 %v2181
          %v2323 = vpop.f32.mrb[0].mxu0
          %v2324 = vadd.f32 0.0, %v2323
          %v2325 = vpop.f32.mrb[0].mxu0
          %v2326 = vpop.f32.mrb[0].mxu0
          %v2327 = vadd.f32 0.0, %v2326
          %v2328 = vpop.f32.mrb[0].mxu0
          %2329 = vmatprep.mubr.bf16.mxu0 0
          %2330 = vmatmul.mubr.bf16.gmra.mrb[0].mxu0 %v2184
          %v2331 = vpop.f32.mrb[0].mxu0
          %v2332 = vadd.f32 0.0, %v2331
          %v2333 = vpop.f32.mrb[0].mxu0
          %v2334 = vpop.f32.mrb[0].mxu0
          %v2335 = vpop.f32.mrb[0].mxu0
          %2336 = vdwg.mxu0
          %v2337 = vadd.f32 %v1987, %v2276
          %v2338 = vadd.f32 %v1990, %v2279
          %v2339 = vadd.f32 %v1995, %v2284
          %v2340 = vadd.f32 %v1998, %v2287
          %v2341 = vadd.f32 %v2003, %v2292
          %v2342 = vadd.f32 %v2006, %v2295
          %v2343 = vadd.f32 %v2011, %v2300
          %v2344 = vadd.f32 %v2014, %v2303
          %v2345 = vadd.f32 %v2019, %v2308
          %v2346 = vadd.f32 %v2022, %v2311
          %v2347 = vadd.f32 %v2027, %v2316
          %v2348 = vadd.f32 %v2030, %v2319
          %v2349 = vadd.f32 %v2035, %v2324
          %v2350 = vadd.f32 %v2038, %v2327
          %v2351 = vadd.f32 %v2043, %v2332
          %v2352 = vld [vmem:[#allocation2 + $0x8] sm:$0x8]
          %v2353 = vld [vmem:[#allocation2 + $0xc] sm:$0xf]
          %v2354 = vld [vmem:[#allocation2 + $0x10] sm:$0xf]
          %v2355 = vld [vmem:[#allocation2 + $0x14] sm:$0xf]
          %v2356 = vld [vmem:[#allocation2 + $0x18] sm:$0xf]
          %v2357 = vld [vmem:[#allocation2 + $0x1c] sm:$0xf]
          %v2358 = vld [vmem:[#allocation2 + $0x20] sm:$0xf]
          %v2359 = vld [vmem:[#allocation2 + $0x24] sm:$0xf]
          %v2360 = vld [vmem:[#allocation2 + $0x28] sm:$0xf]
          %v2361 = vld [vmem:[#allocation2 + $0x2c] sm:$0xf]
          %v2362 = vld [vmem:[#allocation2 + $0x30] sm:$0xf]
          %v2363 = vld [vmem:[#allocation2 + $0x34] sm:$0xf]
          %v2364 = vld [vmem:[#allocation2 + $0x38] sm:$0xf]
          %v2365 = vld [vmem:[#allocation2 + $0x3c] sm:$0xf]
          %v2366 = vld [vmem:[#allocation2 + $0x40] sm:$0xf]
          %v2367 = vld [vmem:[#allocation2 + $0x44] sm:$0xf]
          %s2368 = scalar_lea.vmem %s4, 192
          %v2369 = vld [vmem:[%s2368] sm:$0xf]
          %v2370 = vld [vmem:[%s2368 + $0x4] sm:$0xf]
          %v2371 = vld [vmem:[%s2368 + $0x8] sm:$0xf]
          %v2372 = vld [vmem:[%s2368 + $0xc] sm:$0xf]
          %v2373 = vld [vmem:[%s2368 + $0x10] sm:$0xf]
          %v2374 = vld [vmem:[%s2368 + $0x14] sm:$0xf]
          %v2375 = vld [vmem:[%s2368 + $0x18] sm:$0xf]
          %v2376 = vld [vmem:[%s2368 + $0x1c] sm:$0xf]
          %v2377 = vld [vmem:[%s2368 + $0x20] sm:$0xf]
          %v2378 = vld [vmem:[%s2368 + $0x24] sm:$0xf]
          %v2379 = vld [vmem:[%s2368 + $0x28] sm:$0xf]
          %v2380 = vld [vmem:[%s2368 + $0x2c] sm:$0xf]
          %v2381 = vld [vmem:[%s2368 + $0x30] sm:$0xf]
          %v2382 = vld [vmem:[%s2368 + $0x34] sm:$0xf]
          %v2383 = vld [vmem:[%s2368 + $0x38] sm:$0xf]
          %v2384 = vld [vmem:[%s2368 + $0x3c] sm:$0xf]
          %v2401 = vunpack.c.l.b16 %v2352
          %v2402 = vunpack.c.l.b16 %v2353
          %v2403 = vunpack.c.l.b16 %v2354
          %v2404 = vunpack.c.l.b16 %v2355
          %v2405 = vunpack.c.l.b16 %v2356
          %v2406 = vunpack.c.l.b16 %v2357
          %v2407 = vunpack.c.l.b16 %v2358
          %v2408 = vunpack.c.l.b16 %v2359
          %v2409 = vunpack.c.l.b16 %v2360
          %v2410 = vunpack.c.l.b16 %v2361
          %v2411 = vunpack.c.l.b16 %v2362
          %v2412 = vunpack.c.l.b16 %v2363
          %v2413 = vunpack.c.l.b16 %v2364
          %v2414 = vunpack.c.l.b16 %v2365
          %v2415 = vunpack.c.l.b16 %v2366
          %v2416 = vunpack.c.l.b16 %v2367
          %v2417 = vpack.c.b16 %v2402, %v2401
          %v2418 = vpack.c.b16 %v2404, %v2403
          %v2419 = vpack.c.b16 %v2406, %v2405
          %v2420 = vpack.c.b16 %v2408, %v2407
          %v2421 = vpack.c.b16 %v2410, %v2409
          %v2422 = vpack.c.b16 %v2412, %v2411
          %v2423 = vpack.c.b16 %v2414, %v2413
          %v2424 = vpack.c.b16 %v2416, %v2415
          %v2426 = vshrl.u32 %v2417, 16
          %v2428 = vrot.slane %v2426, 3
          %v2429 = vshll.u32 %v2417, 16
          %v2431 = vrot.slane %v2429, 4
          %v2432 = vor.u32 %v2428, %v2431
          %v2434 = vshrl.u32 %v2418, 16
          %v2436 = vrot.slane %v2434, 3
          %v2437 = vshll.u32 %v2418, 16
          %v2439 = vrot.slane %v2437, 4
          %v2440 = vor.u32 %v2436, %v2439
          %v2441 = vsel %vm1824, %v2432, %v2440
          %v2443 = vshrl.u32 %v2419, 16
          %v2445 = vrot.slane %v2443, 3
          %v2446 = vshll.u32 %v2419, 16
          %v2448 = vrot.slane %v2446, 4
          %v2449 = vor.u32 %v2445, %v2448
          %v2450 = vsel %vm1824, %v2440, %v2449
          %v2452 = vshrl.u32 %v2420, 16
          %v2454 = vrot.slane %v2452, 3
          %v2455 = vshll.u32 %v2420, 16
          %v2457 = vrot.slane %v2455, 4
          %v2458 = vor.u32 %v2454, %v2457
          %v2459 = vsel %vm1824, %v2449, %v2458
          %v2461 = vshrl.u32 %v2421, 16
          %v2463 = vrot.slane %v2461, 3
          %v2464 = vshll.u32 %v2421, 16
          %v2466 = vrot.slane %v2464, 4
          %v2467 = vor.u32 %v2463, %v2466
          %v2468 = vsel %vm1824, %v2458, %v2467
          %v2470 = vshrl.u32 %v2422, 16
          %v2472 = vrot.slane %v2470, 3
          %v2473 = vshll.u32 %v2422, 16
          %v2475 = vrot.slane %v2473, 4
          %v2476 = vor.u32 %v2472, %v2475
          %v2477 = vsel %vm1824, %v2467, %v2476
          %v2479 = vshrl.u32 %v2423, 16
          %v2481 = vrot.slane %v2479, 3
          %v2482 = vshll.u32 %v2423, 16
          %v2484 = vrot.slane %v2482, 4
          %v2485 = vor.u32 %v2481, %v2484
          %v2486 = vsel %vm1824, %v2476, %v2485
          %v2488 = vshrl.u32 %v2424, 16
          %v2490 = vrot.slane %v2488, 3
          %v2491 = vshll.u32 %v2424, 16
          %v2493 = vrot.slane %v2491, 4
          %v2494 = vor.u32 %v2490, %v2493
          %v2495 = vsel %vm1824, %v2485, %v2494
          %v2520 = vunpack.c.l.b16 %v2369
          %v2521 = vunpack.c.l.b16 %v2370
          %v2522 = vunpack.c.l.b16 %v2371
          %v2523 = vunpack.c.l.b16 %v2372
          %v2524 = vunpack.c.l.b16 %v2373
          %v2525 = vunpack.c.l.b16 %v2374
          %v2526 = vunpack.c.l.b16 %v2375
          %v2527 = vunpack.c.l.b16 %v2376
          %v2528 = vunpack.c.l.b16 %v2377
          %v2529 = vunpack.c.l.b16 %v2378
          %v2530 = vunpack.c.l.b16 %v2379
          %v2531 = vunpack.c.l.b16 %v2380
          %v2532 = vunpack.c.l.b16 %v2381
          %v2533 = vunpack.c.l.b16 %v2382
          %v2534 = vunpack.c.l.b16 %v2383
          %v2535 = vunpack.c.l.b16 %v2384
          %v2536 = vpack.c.b16 %v2521, %v2520
          %v2537 = vpack.c.b16 %v2523, %v2522
          %v2538 = vpack.c.b16 %v2525, %v2524
          %v2539 = vpack.c.b16 %v2527, %v2526
          %v2540 = vpack.c.b16 %v2529, %v2528
          %v2541 = vpack.c.b16 %v2531, %v2530
          %v2542 = vpack.c.b16 %v2533, %v2532
          %v2543 = vpack.c.b16 %v2535, %v2534
          %2552 = vmatprep.subr.bf16.mxu0 0
          %2553 = vmatpush1.bf16.msra.mxu0 %v2536
          %2554 = vmatprep.subr.bf16.mxu0 0
          %2555 = vmatpush1.bf16.msra.mxu0 %v2537
          %2556 = vmatprep.subr.bf16.mxu0 0
          %2557 = vmatpush1.bf16.msra.mxu0 %v2538
          %2558 = vmatprep.subr.bf16.mxu0 0
          %2559 = vmatpush1.bf16.msra.mxu0 %v2539
          %2560 = vmatprep.subr.bf16.mxu0 0
          %2561 = vmatpush1.bf16.msra.mxu0 %v2540
          %2562 = vmatprep.subr.bf16.mxu0 0
          %2563 = vmatpush1.bf16.msra.mxu0 %v2541
          %2564 = vmatprep.subr.bf16.mxu0 0
          %2565 = vmatpush1.bf16.msra.mxu0 %v2542
          %2566 = vmatprep.subr.bf16.mxu0 0
          %2567 = vmatpush1.bf16.msra.mxu0 %v2543
          %2568 = vmatprep.subr.bf16.mxu0 0
          %2569 = vmatpush1.bf16.msra.mxu0 0
          %2570 = vmatprep.subr.bf16.mxu0 0
          %2571 = vmatpush1.bf16.msra.mxu0 0
          %2572 = vmatprep.subr.bf16.mxu0 0
          %2573 = vmatpush1.bf16.msra.mxu0 0
          %2574 = vmatprep.subr.bf16.mxu0 0
          %2575 = vmatpush1.bf16.msra.mxu0 0
          %2576 = vmatprep.subr.bf16.mxu0 0
          %2577 = vmatpush1.bf16.msra.mxu0 0
          %2578 = vmatprep.subr.bf16.mxu0 0
          %2579 = vmatpush1.bf16.msra.mxu0 0
          %2580 = vmatprep.subr.bf16.mxu0 0
          %2581 = vmatpush1.bf16.msra.mxu0 0
          %2582 = vmatprep.subr.bf16.mxu0 0
          %2583 = vmatpush1.bf16.msra.mxu0 0
          %2584 = vmatprep.mubr.bf16.mxu0 0
          %2585 = vmatmul.mubr.bf16.gmra.mrb[0].mxu0 %v2441
          %v2586 = vpop.f32.mrb[0].mxu0
          %v2587 = vadd.f32 0.0, %v2586
          %v2588 = vpop.f32.mrb[0].mxu0
          %v2589 = vpop.f32.mrb[0].mxu0
          %v2590 = vadd.f32 0.0, %v2589
          %v2591 = vpop.f32.mrb[0].mxu0
          %2592 = vmatprep.mubr.bf16.mxu0 0
          %2593 = vmatmul.mubr.bf16.gmra.mrb[0].mxu0 %v2450
          %v2594 = vpop.f32.mrb[0].mxu0
          %v2595 = vadd.f32 0.0, %v2594
          %v2596 = vpop.f32.mrb[0].mxu0
          %v2597 = vpop.f32.mrb[0].mxu0
          %v2598 = vadd.f32 0.0, %v2597
          %v2599 = vpop.f32.mrb[0].mxu0
          %2600 = vmatprep.mubr.bf16.mxu0 0
          %2601 = vmatmul.mubr.bf16.gmra.mrb[0].mxu0 %v2459
          %v2602 = vpop.f32.mrb[0].mxu0
          %v2603 = vadd.f32 0.0, %v2602
          %v2604 = vpop.f32.mrb[0].mxu0
          %v2605 = vpop.f32.mrb[0].mxu0
          %v2606 = vadd.f32 0.0, %v2605
          %v2607 = vpop.f32.mrb[0].mxu0
          %2608 = vmatprep.mubr.bf16.mxu0 0
          %2609 = vmatmul.mubr.bf16.gmra.mrb[0].mxu0 %v2468
          %v2610 = vpop.f32.mrb[0].mxu0
          %v2611 = vadd.f32 0.0, %v2610
          %v2612 = vpop.f32.mrb[0].mxu0
          %v2613 = vpop.f32.mrb[0].mxu0
          %v2614 = vadd.f32 0.0, %v2613
          %v2615 = vpop.f32.mrb[0].mxu0
          %2616 = vmatprep.mubr.bf16.mxu0 0
          %2617 = vmatmul.mubr.bf16.gmra.mrb[0].mxu0 %v2477
          %v2618 = vpop.f32.mrb[0].mxu0
          %v2619 = vadd.f32 0.0, %v2618
          %v2620 = vpop.f32.mrb[0].mxu0
          %v2621 = vpop.f32.mrb[0].mxu0
          %v2622 = vadd.f32 0.0, %v2621
          %v2623 = vpop.f32.mrb[0].mxu0
          %2624 = vmatprep.mubr.bf16.mxu0 0
          %2625 = vmatmul.mubr.bf16.gmra.mrb[0].mxu0 %v2486
          %v2626 = vpop.f32.mrb[0].mxu0
          %v2627 = vadd.f32 0.0, %v2626
          %v2628 = vpop.f32.mrb[0].mxu0
          %v2629 = vpop.f32.mrb[0].mxu0
          %v2630 = vadd.f32 0.0, %v2629
          %v2631 = vpop.f32.mrb[0].mxu0
          %2632 = vmatprep.mubr.bf16.mxu0 0
          %2633 = vmatmul.mubr.bf16.gmra.mrb[0].mxu0 %v2495
          %v2634 = vpop.f32.mrb[0].mxu0
          %v2635 = vadd.f32 0.0, %v2634
          %v2636 = vpop.f32.mrb[0].mxu0
          %v2637 = vpop.f32.mrb[0].mxu0
          %v2638 = vadd.f32 0.0, %v2637
          %v2639 = vpop.f32.mrb[0].mxu0
          %2640 = vmatprep.mubr.bf16.mxu0 0
          %2641 = vmatmul.mubr.bf16.gmra.mrb[0].mxu0 %v2494
          %v2642 = vpop.f32.mrb[0].mxu0
          %v2643 = vadd.f32 0.0, %v2642
          %v2644 = vpop.f32.mrb[0].mxu0
          %v2645 = vpop.f32.mrb[0].mxu0
          %v2646 = vpop.f32.mrb[0].mxu0
          %2647 = vdwg.mxu0
          %v2648 = vadd.f32 %v2337, %v2587
          %v2649 = vadd.f32 %v2338, %v2590
          %v2650 = vadd.f32 %v2339, %v2595
          %v2651 = vadd.f32 %v2340, %v2598
          %v2652 = vadd.f32 %v2341, %v2603
          %v2653 = vadd.f32 %v2342, %v2606
          %v2654 = vadd.f32 %v2343, %v2611
          %v2655 = vadd.f32 %v2344, %v2614
          %v2656 = vadd.f32 %v2345, %v2619
          %v2657 = vadd.f32 %v2346, %v2622
          %v2658 = vadd.f32 %v2347, %v2627
          %v2659 = vadd.f32 %v2348, %v2630
          %v2660 = vadd.f32 %v2349, %v2635
          %v2661 = vadd.f32 %v2350, %v2638
          %v2662 = vadd.f32 %v2351, %v2643
          %s2663 = scalar_lea.vmem %s4, 256
          %v2664 = vld [vmem:[%s2663] sm:$0xf]
          %v2665 = vld [vmem:[%s2663 + $0x4] sm:$0xf]
          %v2666 = vld [vmem:[%s2663 + $0x8] sm:$0xf]
          %v2667 = vld [vmem:[%s2663 + $0xc] sm:$0xf]
          %v2668 = vld [vmem:[%s2663 + $0x10] sm:$0xf]
          %v2669 = vld [vmem:[%s2663 + $0x14] sm:$0xf]
          %v2670 = vld [vmem:[%s2663 + $0x18] sm:$0xf]
          %v2671 = vld [vmem:[%s2663 + $0x1c] sm:$0xf]
          %v2672 = vld [vmem:[%s2663 + $0x20] sm:$0xf]
          %v2673 = vld [vmem:[%s2663 + $0x24] sm:$0xf]
          %v2674 = vld [vmem:[%s2663 + $0x28] sm:$0xf]
          %v2675 = vld [vmem:[%s2663 + $0x2c] sm:$0xf]
          %v2676 = vld [vmem:[%s2663 + $0x30] sm:$0xf]
          %v2677 = vld [vmem:[%s2663 + $0x34] sm:$0xf]
          %v2678 = vld [vmem:[%s2663 + $0x38] sm:$0xf]
          %v2679 = vld [vmem:[%s2663 + $0x3c] sm:$0xf]
          %v2680 = vpack.c.b16 %v2403, %v2402
          %v2681 = vpack.c.b16 %v2405, %v2404
          %v2682 = vpack.c.b16 %v2407, %v2406
          %v2683 = vpack.c.b16 %v2409, %v2408
          %v2684 = vpack.c.b16 %v2411, %v2410
          %v2685 = vpack.c.b16 %v2413, %v2412
          %v2686 = vpack.c.b16 %v2415, %v2414
          %v2687 = vpack.c.b16 %v2416, %v2416
          %v2712 = vunpack.c.l.b16 %v2664
          %v2713 = vunpack.c.l.b16 %v2665
          %v2714 = vunpack.c.l.b16 %v2666
          %v2715 = vunpack.c.l.b16 %v2667
          %v2716 = vunpack.c.l.b16 %v2668
          %v2717 = vunpack.c.l.b16 %v2669
          %v2718 = vunpack.c.l.b16 %v2670
          %v2719 = vunpack.c.l.b16 %v2671
          %v2720 = vunpack.c.l.b16 %v2672
          %v2721 = vunpack.c.l.b16 %v2673
          %v2722 = vunpack.c.l.b16 %v2674
          %v2723 = vunpack.c.l.b16 %v2675
          %v2724 = vunpack.c.l.b16 %v2676
          %v2725 = vunpack.c.l.b16 %v2677
          %v2726 = vunpack.c.l.b16 %v2678
          %v2727 = vunpack.c.l.b16 %v2679
          %v2728 = vpack.c.b16 %v2713, %v2712
          %v2729 = vpack.c.b16 %v2715, %v2714
          %v2730 = vpack.c.b16 %v2717, %v2716
          %v2731 = vpack.c.b16 %v2719, %v2718
          %v2732 = vpack.c.b16 %v2721, %v2720
          %v2733 = vpack.c.b16 %v2723, %v2722
          %v2734 = vpack.c.b16 %v2725, %v2724
          %v2735 = vpack.c.b16 %v2727, %v2726
          %2744 = vmatprep.subr.bf16.mxu0 0
          %2745 = vmatpush1.bf16.msra.mxu0 %v2728
          %2746 = vmatprep.subr.bf16.mxu0 0
          %2747 = vmatpush1.bf16.msra.mxu0 %v2729
          %2748 = vmatprep.subr.bf16.mxu0 0
          %2749 = vmatpush1.bf16.msra.mxu0 %v2730
          %2750 = vmatprep.subr.bf16.mxu0 0
          %2751 = vmatpush1.bf16.msra.mxu0 %v2731
          %2752 = vmatprep.subr.bf16.mxu0 0
          %2753 = vmatpush1.bf16.msra.mxu0 %v2732
          %2754 = vmatprep.subr.bf16.mxu0 0
          %2755 = vmatpush1.bf16.msra.mxu0 %v2733
          %2756 = vmatprep.subr.bf16.mxu0 0
          %2757 = vmatpush1.bf16.msra.mxu0 %v2734
          %2758 = vmatprep.subr.bf16.mxu0 0
          %2759 = vmatpush1.bf16.msra.mxu0 %v2735
          %2760 = vmatprep.subr.bf16.mxu0 0
          %2761 = vmatpush1.bf16.msra.mxu0 0
          %2762 = vmatprep.subr.bf16.mxu0 0
          %2763 = vmatpush1.bf16.msra.mxu0 0
          %2764 = vmatprep.subr.bf16.mxu0 0
          %2765 = vmatpush1.bf16.msra.mxu0 0
          %2766 = vmatprep.subr.bf16.mxu0 0
          %2767 = vmatpush1.bf16.msra.mxu0 0
          %2768 = vmatprep.subr.bf16.mxu0 0
          %2769 = vmatpush1.bf16.msra.mxu0 0
          %2770 = vmatprep.subr.bf16.mxu0 0
          %2771 = vmatpush1.bf16.msra.mxu0 0
          %2772 = vmatprep.subr.bf16.mxu0 0
          %2773 = vmatpush1.bf16.msra.mxu0 0
          %2774 = vmatprep.subr.bf16.mxu0 0
          %2775 = vmatpush1.bf16.msra.mxu0 0
          %2776 = vmatprep.mubr.bf16.mxu0 0
          %2777 = vmatmul.mubr.bf16.gmra.mrb[0].mxu0 %v2680
          %v2778 = vpop.f32.mrb[0].mxu0
          %v2779 = vadd.f32 0.0, %v2778
          %v2780 = vpop.f32.mrb[0].mxu0
          %v2781 = vpop.f32.mrb[0].mxu0
          %v2782 = vadd.f32 0.0, %v2781
          %v2783 = vpop.f32.mrb[0].mxu0
          %2784 = vmatprep.mubr.bf16.mxu0 0
          %2785 = vmatmul.mubr.bf16.gmra.mrb[0].mxu0 %v2681
          %v2786 = vpop.f32.mrb[0].mxu0
          %v2787 = vadd.f32 0.0, %v2786
          %v2788 = vpop.f32.mrb[0].mxu0
          %v2789 = vpop.f32.mrb[0].mxu0
          %v2790 = vadd.f32 0.0, %v2789
          %v2791 = vpop.f32.mrb[0].mxu0
          %2792 = vmatprep.mubr.bf16.mxu0 0
          %2793 = vmatmul.mubr.bf16.gmra.mrb[0].mxu0 %v2682
          %v2794 = vpop.f32.mrb[0].mxu0
          %v2795 = vadd.f32 0.0, %v2794
          %v2796 = vpop.f32.mrb[0].mxu0
          %v2797 = vpop.f32.mrb[0].mxu0
          %v2798 = vadd.f32 0.0, %v2797
          %v2799 = vpop.f32.mrb[0].mxu0
          %2800 = vmatprep.mubr.bf16.mxu0 0
          %2801 = vmatmul.mubr.bf16.gmra.mrb[0].mxu0 %v2683
          %v2802 = vpop.f32.mrb[0].mxu0
          %v2803 = vadd.f32 0.0, %v2802
          %v2804 = vpop.f32.mrb[0].mxu0
          %v2805 = vpop.f32.mrb[0].mxu0
          %v2806 = vadd.f32 0.0, %v2805
          %v2807 = vpop.f32.mrb[0].mxu0
          %2808 = vmatprep.mubr.bf16.mxu0 0
          %2809 = vmatmul.mubr.bf16.gmra.mrb[0].mxu0 %v2684
          %v2810 = vpop.f32.mrb[0].mxu0
          %v2811 = vadd.f32 0.0, %v2810
          %v2812 = vpop.f32.mrb[0].mxu0
          %v2813 = vpop.f32.mrb[0].mxu0
          %v2814 = vadd.f32 0.0, %v2813
          %v2815 = vpop.f32.mrb[0].mxu0
          %2816 = vmatprep.mubr.bf16.mxu0 0
          %2817 = vmatmul.mubr.bf16.gmra.mrb[0].mxu0 %v2685
          %v2818 = vpop.f32.mrb[0].mxu0
          %v2819 = vadd.f32 0.0, %v2818
          %v2820 = vpop.f32.mrb[0].mxu0
          %v2821 = vpop.f32.mrb[0].mxu0
          %v2822 = vadd.f32 0.0, %v2821
          %v2823 = vpop.f32.mrb[0].mxu0
          %2824 = vmatprep.mubr.bf16.mxu0 0
          %2825 = vmatmul.mubr.bf16.gmra.mrb[0].mxu0 %v2686
          %v2826 = vpop.f32.mrb[0].mxu0
          %v2827 = vadd.f32 0.0, %v2826
          %v2828 = vpop.f32.mrb[0].mxu0
          %v2829 = vpop.f32.mrb[0].mxu0
          %v2830 = vadd.f32 0.0, %v2829
          %v2831 = vpop.f32.mrb[0].mxu0
          %2832 = vmatprep.mubr.bf16.mxu0 0
          %2833 = vmatmul.mubr.bf16.gmra.mrb[0].mxu0 %v2687
          %v2834 = vpop.f32.mrb[0].mxu0
          %v2835 = vadd.f32 0.0, %v2834
          %v2836 = vpop.f32.mrb[0].mxu0
          %v2837 = vpop.f32.mrb[0].mxu0
          %v2838 = vpop.f32.mrb[0].mxu0
          %2839 = vdwg.mxu0
          %v2840 = vadd.f32 %v2648, %v2779
          %v2841 = vadd.f32 %v2649, %v2782
          %v2842 = vadd.f32 %v2650, %v2787
          %v2843 = vadd.f32 %v2651, %v2790
          %v2844 = vadd.f32 %v2652, %v2795
          %v2845 = vadd.f32 %v2653, %v2798
          %v2846 = vadd.f32 %v2654, %v2803
          %v2847 = vadd.f32 %v2655, %v2806
          %v2848 = vadd.f32 %v2656, %v2811
          %v2849 = vadd.f32 %v2657, %v2814
          %v2850 = vadd.f32 %v2658, %v2819
          %v2851 = vadd.f32 %v2659, %v2822
          %v2852 = vadd.f32 %v2660, %v2827
          %v2853 = vadd.f32 %v2661, %v2830
          %v2854 = vadd.f32 %v2662, %v2835
          %v2855 = vld [vmem:[#allocation2 + $0xc] sm:$0xf]
          %v2856 = vld [vmem:[#allocation2 + $0x10] sm:$0xf]
          %v2857 = vld [vmem:[#allocation2 + $0x14] sm:$0xf]
          %v2858 = vld [vmem:[#allocation2 + $0x18] sm:$0xf]
          %v2859 = vld [vmem:[#allocation2 + $0x1c] sm:$0xf]
          %v2860 = vld [vmem:[#allocation2 + $0x20] sm:$0xf]
          %v2861 = vld [vmem:[#allocation2 + $0x24] sm:$0xf]
          %v2862 = vld [vmem:[#allocation2 + $0x28] sm:$0xf]
          %v2863 = vld [vmem:[#allocation2 + $0x2c] sm:$0xf]
          %v2864 = vld [vmem:[#allocation2 + $0x30] sm:$0xf]
          %v2865 = vld [vmem:[#allocation2 + $0x34] sm:$0xf]
          %v2866 = vld [vmem:[#allocation2 + $0x38] sm:$0xf]
          %v2867 = vld [vmem:[#allocation2 + $0x3c] sm:$0xf]
          %v2868 = vld [vmem:[#allocation2 + $0x40] sm:$0xf]
          %v2869 = vld [vmem:[#allocation2 + $0x44] sm:$0xf]
          %v2870 = vld [vmem:[#allocation2 + $0x48] sm:$0x1]
          %s2871 = scalar_lea.vmem %s4, 320
          %v2872 = vld [vmem:[%s2871] sm:$0xf]
          %v2873 = vld [vmem:[%s2871 + $0x4] sm:$0xf]
          %v2874 = vld [vmem:[%s2871 + $0x8] sm:$0xf]
          %v2875 = vld [vmem:[%s2871 + $0xc] sm:$0xf]
          %v2876 = vld [vmem:[%s2871 + $0x10] sm:$0xf]
          %v2877 = vld [vmem:[%s2871 + $0x14] sm:$0xf]
          %v2878 = vld [vmem:[%s2871 + $0x18] sm:$0xf]
          %v2879 = vld [vmem:[%s2871 + $0x1c] sm:$0xf]
          %v2880 = vld [vmem:[%s2871 + $0x20] sm:$0xf]
          %v2881 = vld [vmem:[%s2871 + $0x24] sm:$0xf]
          %v2882 = vld [vmem:[%s2871 + $0x28] sm:$0xf]
          %v2883 = vld [vmem:[%s2871 + $0x2c] sm:$0xf]
          %v2884 = vld [vmem:[%s2871 + $0x30] sm:$0xf]
          %v2885 = vld [vmem:[%s2871 + $0x34] sm:$0xf]
          %v2886 = vld [vmem:[%s2871 + $0x38] sm:$0xf]
          %v2887 = vld [vmem:[%s2871 + $0x3c] sm:$0xf]
          %v2904 = vunpack.c.l.b16 %v2855
          %v2905 = vunpack.c.l.b16 %v2856
          %v2906 = vunpack.c.l.b16 %v2857
          %v2907 = vunpack.c.l.b16 %v2858
          %v2908 = vunpack.c.l.b16 %v2859
          %v2909 = vunpack.c.l.b16 %v2860
          %v2910 = vunpack.c.l.b16 %v2861
          %v2911 = vunpack.c.l.b16 %v2862
          %v2912 = vunpack.c.l.b16 %v2863
          %v2913 = vunpack.c.l.b16 %v2864
          %v2914 = vunpack.c.l.b16 %v2865
          %v2915 = vunpack.c.l.b16 %v2866
          %v2916 = vunpack.c.l.b16 %v2867
          %v2917 = vunpack.c.l.b16 %v2868
          %v2918 = vunpack.c.l.b16 %v2869
          %v2919 = vunpack.c.l.b16 %v2870
          %v2920 = vpack.c.b16 %v2905, %v2904
          %v2921 = vpack.c.b16 %v2907, %v2906
          %v2922 = vpack.c.b16 %v2909, %v2908
          %v2923 = vpack.c.b16 %v2911, %v2910
          %v2924 = vpack.c.b16 %v2913, %v2912
          %v2925 = vpack.c.b16 %v2915, %v2914
          %v2926 = vpack.c.b16 %v2917, %v2916
          %v2927 = vpack.c.b16 %v2919, %v2918
          %v2929 = vshrl.u32 %v2920, 16
          %v2931 = vshll.u32 %v2920, 16
          %v2933 = vrot.slane %v2931, 1
          %v2934 = vor.u32 %v2929, %v2933
          %v2936 = vshll.u32 %v2921, 16
          %v2938 = vrot.slane %v2936, 1
          %v2939 = vsel %vm2121, %v2934, %v2938
          %v2940 = vshrl.u32 %v2921, 16
          %v2942 = vor.u32 %v2940, %v2938
          %v2944 = vshll.u32 %v2922, 16
          %v2946 = vrot.slane %v2944, 1
          %v2947 = vsel %vm2121, %v2942, %v2946
          %v2948 = vshrl.u32 %v2922, 16
          %v2950 = vor.u32 %v2948, %v2946
          %v2952 = vshll.u32 %v2923, 16
          %v2954 = vrot.slane %v2952, 1
          %v2955 = vsel %vm2121, %v2950, %v2954
          %v2956 = vshrl.u32 %v2923, 16
          %v2958 = vor.u32 %v2956, %v2954
          %v2960 = vshll.u32 %v2924, 16
          %v2962 = vrot.slane %v2960, 1
          %v2963 = vsel %vm2121, %v2958, %v2962
          %v2964 = vshrl.u32 %v2924, 16
          %v2966 = vor.u32 %v2964, %v2962
          %v2968 = vshll.u32 %v2925, 16
          %v2970 = vrot.slane %v2968, 1
          %v2971 = vsel %vm2121, %v2966, %v2970
          %v2972 = vshrl.u32 %v2925, 16
          %v2974 = vor.u32 %v2972, %v2970
          %v2976 = vshll.u32 %v2926, 16
          %v2978 = vrot.slane %v2976, 1
          %v2979 = vsel %vm2121, %v2974, %v2978
          %v2980 = vshrl.u32 %v2926, 16
          %v2982 = vor.u32 %v2980, %v2978
          %v2984 = vshll.u32 %v2927, 16
          %v2986 = vrot.slane %v2984, 1
          %v2987 = vsel %vm2121, %v2982, %v2986
          %v2988 = vshrl.u32 %v2927, 16
          %v2990 = vor.u32 %v2988, %v2986
          %v3015 = vunpack.c.l.b16 %v2872
          %v3016 = vunpack.c.l.b16 %v2873
          %v3017 = vunpack.c.l.b16 %v2874
          %v3018 = vunpack.c.l.b16 %v2875
          %v3019 = vunpack.c.l.b16 %v2876
          %v3020 = vunpack.c.l.b16 %v2877
          %v3021 = vunpack.c.l.b16 %v2878
          %v3022 = vunpack.c.l.b16 %v2879
          %v3023 = vunpack.c.l.b16 %v2880
          %v3024 = vunpack.c.l.b16 %v2881
          %v3025 = vunpack.c.l.b16 %v2882
          %v3026 = vunpack.c.l.b16 %v2883
          %v3027 = vunpack.c.l.b16 %v2884
          %v3028 = vunpack.c.l.b16 %v2885
          %v3029 = vunpack.c.l.b16 %v2886
          %v3030 = vunpack.c.l.b16 %v2887
          %v3031 = vpack.c.b16 %v3016, %v3015
          %v3032 = vpack.c.b16 %v3018, %v3017
          %v3033 = vpack.c.b16 %v3020, %v3019
          %v3034 = vpack.c.b16 %v3022, %v3021
          %v3035 = vpack.c.b16 %v3024, %v3023
          %v3036 = vpack.c.b16 %v3026, %v3025
          %v3037 = vpack.c.b16 %v3028, %v3027
          %v3038 = vpack.c.b16 %v3030, %v3029
          %3047 = vmatprep.subr.bf16.mxu0 0
          %3048 = vmatpush1.bf16.msra.mxu0 %v3031
          %3049 = vmatprep.subr.bf16.mxu0 0
          %3050 = vmatpush1.bf16.msra.mxu0 %v3032
          %3051 = vmatprep.subr.bf16.mxu0 0
          %3052 = vmatpush1.bf16.msra.mxu0 %v3033
          %3053 = vmatprep.subr.bf16.mxu0 0
          %3054 = vmatpush1.bf16.msra.mxu0 %v3034
          %3055 = vmatprep.subr.bf16.mxu0 0
          %3056 = vmatpush1.bf16.msra.mxu0 %v3035
          %3057 = vmatprep.subr.bf16.mxu0 0
          %3058 = vmatpush1.bf16.msra.mxu0 %v3036
          %3059 = vmatprep.subr.bf16.mxu0 0
          %3060 = vmatpush1.bf16.msra.mxu0 %v3037
          %3061 = vmatprep.subr.bf16.mxu0 0
          %3062 = vmatpush1.bf16.msra.mxu0 %v3038
          %3063 = vmatprep.subr.bf16.mxu0 0
          %3064 = vmatpush1.bf16.msra.mxu0 0
          %3065 = vmatprep.subr.bf16.mxu0 0
          %3066 = vmatpush1.bf16.msra.mxu0 0
          %3067 = vmatprep.subr.bf16.mxu0 0
          %3068 = vmatpush1.bf16.msra.mxu0 0
          %3069 = vmatprep.subr.bf16.mxu0 0
          %3070 = vmatpush1.bf16.msra.mxu0 0
          %3071 = vmatprep.subr.bf16.mxu0 0
          %3072 = vmatpush1.bf16.msra.mxu0 0
          %3073 = vmatprep.subr.bf16.mxu0 0
          %3074 = vmatpush1.bf16.msra.mxu0 0
          %3075 = vmatprep.subr.bf16.mxu0 0
          %3076 = vmatpush1.bf16.msra.mxu0 0
          %3077 = vmatprep.subr.bf16.mxu0 0
          %3078 = vmatpush1.bf16.msra.mxu0 0
          %3079 = vmatprep.mubr.bf16.mxu0 0
          %3080 = vmatmul.mubr.bf16.gmra.mrb[0].mxu0 %v2939
          %v3081 = vpop.f32.mrb[0].mxu0
          %v3082 = vadd.f32 0.0, %v3081
          %v3083 = vpop.f32.mrb[0].mxu0
          %v3084 = vpop.f32.mrb[0].mxu0
          %v3085 = vadd.f32 0.0, %v3084
          %v3086 = vpop.f32.mrb[0].mxu0
          %3087 = vmatprep.mubr.bf16.mxu0 0
          %3088 = vmatmul.mubr.bf16.gmra.mrb[0].mxu0 %v2947
          %v3089 = vpop.f32.mrb[0].mxu0
          %v3090 = vadd.f32 0.0, %v3089
          %v3091 = vpop.f32.mrb[0].mxu0
          %v3092 = vpop.f32.mrb[0].mxu0
          %v3093 = vadd.f32 0.0, %v3092
          %v3094 = vpop.f32.mrb[0].mxu0
          %3095 = vmatprep.mubr.bf16.mxu0 0
          %3096 = vmatmul.mubr.bf16.gmra.mrb[0].mxu0 %v2955
          %v3097 = vpop.f32.mrb[0].mxu0
          %v3098 = vadd.f32 0.0, %v3097
          %v3099 = vpop.f32.mrb[0].mxu0
          %v3100 = vpop.f32.mrb[0].mxu0
          %v3101 = vadd.f32 0.0, %v3100
          %v3102 = vpop.f32.mrb[0].mxu0
          %3103 = vmatprep.mubr.bf16.mxu0 0
          %3104 = vmatmul.mubr.bf16.gmra.mrb[0].mxu0 %v2963
          %v3105 = vpop.f32.mrb[0].mxu0
          %v3106 = vadd.f32 0.0, %v3105
          %v3107 = vpop.f32.mrb[0].mxu0
          %v3108 = vpop.f32.mrb[0].mxu0
          %v3109 = vadd.f32 0.0, %v3108
          %v3110 = vpop.f32.mrb[0].mxu0
          %3111 = vmatprep.mubr.bf16.mxu0 0
          %3112 = vmatmul.mubr.bf16.gmra.mrb[0].mxu0 %v2971
          %v3113 = vpop.f32.mrb[0].mxu0
          %v3114 = vadd.f32 0.0, %v3113
          %v3115 = vpop.f32.mrb[0].mxu0
          %v3116 = vpop.f32.mrb[0].mxu0
          %v3117 = vadd.f32 0.0, %v3116
          %v3118 = vpop.f32.mrb[0].mxu0
          %3119 = vmatprep.mubr.bf16.mxu0 0
          %3120 = vmatmul.mubr.bf16.gmra.mrb[0].mxu0 %v2979
          %v3121 = vpop.f32.mrb[0].mxu0
          %v3122 = vadd.f32 0.0, %v3121
          %v3123 = vpop.f32.mrb[0].mxu0
          %v3124 = vpop.f32.mrb[0].mxu0
          %v3125 = vadd.f32 0.0, %v3124
          %v3126 = vpop.f32.mrb[0].mxu0
          %3127 = vmatprep.mubr.bf16.mxu0 0
          %3128 = vmatmul.mubr.bf16.gmra.mrb[0].mxu0 %v2987
          %v3129 = vpop.f32.mrb[0].mxu0
          %v3130 = vadd.f32 0.0, %v3129
          %v3131 = vpop.f32.mrb[0].mxu0
          %v3132 = vpop.f32.mrb[0].mxu0
          %v3133 = vadd.f32 0.0, %v3132
          %v3134 = vpop.f32.mrb[0].mxu0
          %3135 = vmatprep.mubr.bf16.mxu0 0
          %3136 = vmatmul.mubr.bf16.gmra.mrb[0].mxu0 %v2990
          %v3137 = vpop.f32.mrb[0].mxu0
          %v3138 = vadd.f32 0.0, %v3137
          %v3139 = vpop.f32.mrb[0].mxu0
          %v3140 = vpop.f32.mrb[0].mxu0
          %v3141 = vpop.f32.mrb[0].mxu0
          %3142 = vdwg.mxu0
          %v3143 = vadd.f32 %v2840, %v3082
          %v3144 = vadd.f32 %v2841, %v3085
          %v3145 = vadd.f32 %v2842, %v3090
          %v3146 = vadd.f32 %v2843, %v3093
          %v3147 = vadd.f32 %v2844, %v3098
          %v3148 = vadd.f32 %v2845, %v3101
          %v3149 = vadd.f32 %v2846, %v3106
          %v3150 = vadd.f32 %v2847, %v3109
          %v3151 = vadd.f32 %v2848, %v3114
          %v3152 = vadd.f32 %v2849, %v3117
          %v3153 = vadd.f32 %v2850, %v3122
          %v3154 = vadd.f32 %v2851, %v3125
          %v3155 = vadd.f32 %v2852, %v3130
          %v3156 = vadd.f32 %v2853, %v3133
          %v3157 = vadd.f32 %v2854, %v3138
          %v3158 = vld [vmem:[#allocation2 + $0x10] sm:$0x8]
          %v3159 = vld [vmem:[#allocation2 + $0x14] sm:$0xf]
          %v3160 = vld [vmem:[#allocation2 + $0x18] sm:$0xf]
          %v3161 = vld [vmem:[#allocation2 + $0x1c] sm:$0xf]
          %v3162 = vld [vmem:[#allocation2 + $0x20] sm:$0xf]
          %v3163 = vld [vmem:[#allocation2 + $0x24] sm:$0xf]
          %v3164 = vld [vmem:[#allocation2 + $0x28] sm:$0xf]
          %v3165 = vld [vmem:[#allocation2 + $0x2c] sm:$0xf]
          %v3166 = vld [vmem:[#allocation2 + $0x30] sm:$0xf]
          %v3167 = vld [vmem:[#allocation2 + $0x34] sm:$0xf]
          %v3168 = vld [vmem:[#allocation2 + $0x38] sm:$0xf]
          %v3169 = vld [vmem:[#allocation2 + $0x3c] sm:$0xf]
          %v3170 = vld [vmem:[#allocation2 + $0x40] sm:$0xf]
          %v3171 = vld [vmem:[#allocation2 + $0x44] sm:$0xf]
          %v3172 = vld [vmem:[#allocation2 + $0x48] sm:$0xf]
          %v3173 = vld [vmem:[#allocation2 + $0x4c] sm:$0xf]
          %s3174 = scalar_lea.vmem %s4, 384
          %v3175 = vld [vmem:[%s3174] sm:$0xf]
          %v3176 = vld [vmem:[%s3174 + $0x4] sm:$0xf]
          %v3177 = vld [vmem:[%s3174 + $0x8] sm:$0xf]
          %v3178 = vld [vmem:[%s3174 + $0xc] sm:$0xf]
          %v3179 = vld [vmem:[%s3174 + $0x10] sm:$0xf]
          %v3180 = vld [vmem:[%s3174 + $0x14] sm:$0xf]
          %v3181 = vld [vmem:[%s3174 + $0x18] sm:$0xf]
          %v3182 = vld [vmem:[%s3174 + $0x1c] sm:$0xf]
          %v3183 = vld [vmem:[%s3174 + $0x20] sm:$0xf]
          %v3184 = vld [vmem:[%s3174 + $0x24] sm:$0xf]
          %v3185 = vld [vmem:[%s3174 + $0x28] sm:$0xf]
          %v3186 = vld [vmem:[%s3174 + $0x2c] sm:$0xf]
          %v3187 = vld [vmem:[%s3174 + $0x30] sm:$0xf]
          %v3188 = vld [vmem:[%s3174 + $0x34] sm:$0xf]
          %v3189 = vld [vmem:[%s3174 + $0x38] sm:$0xf]
          %v3190 = vld [vmem:[%s3174 + $0x3c] sm:$0xf]
          %v3207 = vunpack.c.l.b16 %v3158
          %v3208 = vunpack.c.l.b16 %v3159
          %v3209 = vunpack.c.l.b16 %v3160
          %v3210 = vunpack.c.l.b16 %v3161
          %v3211 = vunpack.c.l.b16 %v3162
          %v3212 = vunpack.c.l.b16 %v3163
          %v3213 = vunpack.c.l.b16 %v3164
          %v3214 = vunpack.c.l.b16 %v3165
          %v3215 = vunpack.c.l.b16 %v3166
          %v3216 = vunpack.c.l.b16 %v3167
          %v3217 = vunpack.c.l.b16 %v3168
          %v3218 = vunpack.c.l.b16 %v3169
          %v3219 = vunpack.c.l.b16 %v3170
          %v3220 = vunpack.c.l.b16 %v3171
          %v3221 = vunpack.c.l.b16 %v3172
          %v3222 = vunpack.c.l.b16 %v3173
          %v3223 = vpack.c.b16 %v3208, %v3207
          %v3224 = vpack.c.b16 %v3210, %v3209
          %v3225 = vpack.c.b16 %v3212, %v3211
          %v3226 = vpack.c.b16 %v3214, %v3213
          %v3227 = vpack.c.b16 %v3216, %v3215
          %v3228 = vpack.c.b16 %v3218, %v3217
          %v3229 = vpack.c.b16 %v3220, %v3219
          %v3230 = vpack.c.b16 %v3222, %v3221
          %v3232 = vshrl.u32 %v3223, 16
          %v3234 = vrot.slane %v3232, 3
          %v3235 = vshll.u32 %v3223, 16
          %v3237 = vrot.slane %v3235, 4
          %v3238 = vor.u32 %v3234, %v3237
          %v3240 = vshrl.u32 %v3224, 16
          %v3242 = vrot.slane %v3240, 3
          %v3243 = vshll.u32 %v3224, 16
          %v3245 = vrot.slane %v3243, 4
          %v3246 = vor.u32 %v3242, %v3245
          %v3247 = vsel %vm1824, %v3238, %v3246
          %v3249 = vshrl.u32 %v3225, 16
          %v3251 = vrot.slane %v3249, 3
          %v3252 = vshll.u32 %v3225, 16
          %v3254 = vrot.slane %v3252, 4
          %v3255 = vor.u32 %v3251, %v3254
          %v3256 = vsel %vm1824, %v3246, %v3255
          %v3258 = vshrl.u32 %v3226, 16
          %v3260 = vrot.slane %v3258, 3
          %v3261 = vshll.u32 %v3226, 16
          %v3263 = vrot.slane %v3261, 4
          %v3264 = vor.u32 %v3260, %v3263
          %v3265 = vsel %vm1824, %v3255, %v3264
          %v3267 = vshrl.u32 %v3227, 16
          %v3269 = vrot.slane %v3267, 3
          %v3270 = vshll.u32 %v3227, 16
          %v3272 = vrot.slane %v3270, 4
          %v3273 = vor.u32 %v3269, %v3272
          %v3274 = vsel %vm1824, %v3264, %v3273
          %v3276 = vshrl.u32 %v3228, 16
          %v3278 = vrot.slane %v3276, 3
          %v3279 = vshll.u32 %v3228, 16
          %v3281 = vrot.slane %v3279, 4
          %v3282 = vor.u32 %v3278, %v3281
          %v3283 = vsel %vm1824, %v3273, %v3282
          %v3285 = vshrl.u32 %v3229, 16
          %v3287 = vrot.slane %v3285, 3
          %v3288 = vshll.u32 %v3229, 16
          %v3290 = vrot.slane %v3288, 4
          %v3291 = vor.u32 %v3287, %v3290
          %v3292 = vsel %vm1824, %v3282, %v3291
          %v3294 = vshrl.u32 %v3230, 16
          %v3296 = vrot.slane %v3294, 3
          %v3297 = vshll.u32 %v3230, 16
          %v3299 = vrot.slane %v3297, 4
          %v3300 = vor.u32 %v3296, %v3299
          %v3301 = vsel %vm1824, %v3291, %v3300
          %v3326 = vunpack.c.l.b16 %v3175
          %v3327 = vunpack.c.l.b16 %v3176
          %v3328 = vunpack.c.l.b16 %v3177
          %v3329 = vunpack.c.l.b16 %v3178
          %v3330 = vunpack.c.l.b16 %v3179
          %v3331 = vunpack.c.l.b16 %v3180
          %v3332 = vunpack.c.l.b16 %v3181
          %v3333 = vunpack.c.l.b16 %v3182
          %v3334 = vunpack.c.l.b16 %v3183
          %v3335 = vunpack.c.l.b16 %v3184
          %v3336 = vunpack.c.l.b16 %v3185
          %v3337 = vunpack.c.l.b16 %v3186
          %v3338 = vunpack.c.l.b16 %v3187
          %v3339 = vunpack.c.l.b16 %v3188
          %v3340 = vunpack.c.l.b16 %v3189
          %v3341 = vunpack.c.l.b16 %v3190
          %v3342 = vpack.c.b16 %v3327, %v3326
          %v3343 = vpack.c.b16 %v3329, %v3328
          %v3344 = vpack.c.b16 %v3331, %v3330
          %v3345 = vpack.c.b16 %v3333, %v3332
          %v3346 = vpack.c.b16 %v3335, %v3334
          %v3347 = vpack.c.b16 %v3337, %v3336
          %v3348 = vpack.c.b16 %v3339, %v3338
          %v3349 = vpack.c.b16 %v3341, %v3340
          %3358 = vmatprep.subr.bf16.mxu0 0
          %3359 = vmatpush1.bf16.msra.mxu0 %v3342
          %3360 = vmatprep.subr.bf16.mxu0 0
          %3361 = vmatpush1.bf16.msra.mxu0 %v3343
          %3362 = vmatprep.subr.bf16.mxu0 0
          %3363 = vmatpush1.bf16.msra.mxu0 %v3344
          %3364 = vmatprep.subr.bf16.mxu0 0
          %3365 = vmatpush1.bf16.msra.mxu0 %v3345
          %3366 = vmatprep.subr.bf16.mxu0 0
          %3367 = vmatpush1.bf16.msra.mxu0 %v3346
          %3368 = vmatprep.subr.bf16.mxu0 0
          %3369 = vmatpush1.bf16.msra.mxu0 %v3347
          %3370 = vmatprep.subr.bf16.mxu0 0
          %3371 = vmatpush1.bf16.msra.mxu0 %v3348
          %3372 = vmatprep.subr.bf16.mxu0 0
          %3373 = vmatpush1.bf16.msra.mxu0 %v3349
          %3374 = vmatprep.subr.bf16.mxu0 0
          %3375 = vmatpush1.bf16.msra.mxu0 0
          %3376 = vmatprep.subr.bf16.mxu0 0
          %3377 = vmatpush1.bf16.msra.mxu0 0
          %3378 = vmatprep.subr.bf16.mxu0 0
          %3379 = vmatpush1.bf16.msra.mxu0 0
          %3380 = vmatprep.subr.bf16.mxu0 0
          %3381 = vmatpush1.bf16.msra.mxu0 0
          %3382 = vmatprep.subr.bf16.mxu0 0
          %3383 = vmatpush1.bf16.msra.mxu0 0
          %3384 = vmatprep.subr.bf16.mxu0 0
          %3385 = vmatpush1.bf16.msra.mxu0 0
          %3386 = vmatprep.subr.bf16.mxu0 0
          %3387 = vmatpush1.bf16.msra.mxu0 0
          %3388 = vmatprep.subr.bf16.mxu0 0
          %3389 = vmatpush1.bf16.msra.mxu0 0
          %3390 = vmatprep.mubr.bf16.mxu0 0
          %3391 = vmatmul.mubr.bf16.gmra.mrb[0].mxu0 %v3247
          %v3392 = vpop.f32.mrb[0].mxu0
          %v3393 = vadd.f32 0.0, %v3392
          %v3394 = vpop.f32.mrb[0].mxu0
          %v3395 = vpop.f32.mrb[0].mxu0
          %v3396 = vadd.f32 0.0, %v3395
          %v3397 = vpop.f32.mrb[0].mxu0
          %3398 = vmatprep.mubr.bf16.mxu0 0
          %3399 = vmatmul.mubr.bf16.gmra.mrb[0].mxu0 %v3256
          %v3400 = vpop.f32.mrb[0].mxu0
          %v3401 = vadd.f32 0.0, %v3400
          %v3402 = vpop.f32.mrb[0].mxu0
          %v3403 = vpop.f32.mrb[0].mxu0
          %v3404 = vadd.f32 0.0, %v3403
          %v3405 = vpop.f32.mrb[0].mxu0
          %3406 = vmatprep.mubr.bf16.mxu0 0
          %3407 = vmatmul.mubr.bf16.gmra.mrb[0].mxu0 %v3265
          %v3408 = vpop.f32.mrb[0].mxu0
          %v3409 = vadd.f32 0.0, %v3408
          %v3410 = vpop.f32.mrb[0].mxu0
          %v3411 = vpop.f32.mrb[0].mxu0
          %v3412 = vadd.f32 0.0, %v3411
          %v3413 = vpop.f32.mrb[0].mxu0
          %3414 = vmatprep.mubr.bf16.mxu0 0
          %3415 = vmatmul.mubr.bf16.gmra.mrb[0].mxu0 %v3274
          %v3416 = vpop.f32.mrb[0].mxu0
          %v3417 = vadd.f32 0.0, %v3416
          %v3418 = vpop.f32.mrb[0].mxu0
          %v3419 = vpop.f32.mrb[0].mxu0
          %v3420 = vadd.f32 0.0, %v3419
          %v3421 = vpop.f32.mrb[0].mxu0
          %3422 = vmatprep.mubr.bf16.mxu0 0
          %3423 = vmatmul.mubr.bf16.gmra.mrb[0].mxu0 %v3283
          %v3424 = vpop.f32.mrb[0].mxu0
          %v3425 = vadd.f32 0.0, %v3424
          %v3426 = vpop.f32.mrb[0].mxu0
          %v3427 = vpop.f32.mrb[0].mxu0
          %v3428 = vadd.f32 0.0, %v3427
          %v3429 = vpop.f32.mrb[0].mxu0
          %3430 = vmatprep.mubr.bf16.mxu0 0
          %3431 = vmatmul.mubr.bf16.gmra.mrb[0].mxu0 %v3292
          %v3432 = vpop.f32.mrb[0].mxu0
          %v3433 = vadd.f32 0.0, %v3432
          %v3434 = vpop.f32.mrb[0].mxu0
          %v3435 = vpop.f32.mrb[0].mxu0
          %v3436 = vadd.f32 0.0, %v3435
          %v3437 = vpop.f32.mrb[0].mxu0
          %3438 = vmatprep.mubr.bf16.mxu0 0
          %3439 = vmatmul.mubr.bf16.gmra.mrb[0].mxu0 %v3301
          %v3440 = vpop.f32.mrb[0].mxu0
          %v3441 = vadd.f32 0.0, %v3440
          %v3442 = vpop.f32.mrb[0].mxu0
          %v3443 = vpop.f32.mrb[0].mxu0
          %v3444 = vadd.f32 0.0, %v3443
          %v3445 = vpop.f32.mrb[0].mxu0
          %3446 = vmatprep.mubr.bf16.mxu0 0
          %3447 = vmatmul.mubr.bf16.gmra.mrb[0].mxu0 %v3300
          %v3448 = vpop.f32.mrb[0].mxu0
          %v3449 = vadd.f32 0.0, %v3448
          %v3450 = vpop.f32.mrb[0].mxu0
          %v3451 = vpop.f32.mrb[0].mxu0
          %v3452 = vpop.f32.mrb[0].mxu0
          %3453 = vdwg.mxu0
          %v3454 = vadd.f32 %v3143, %v3393
          %v3455 = vadd.f32 %v3144, %v3396
          %v3456 = vadd.f32 %v3145, %v3401
          %v3457 = vadd.f32 %v3146, %v3404
          %v3458 = vadd.f32 %v3147, %v3409
          %v3459 = vadd.f32 %v3148, %v3412
          %v3460 = vadd.f32 %v3149, %v3417
          %v3461 = vadd.f32 %v3150, %v3420
          %v3462 = vadd.f32 %v3151, %v3425
          %v3463 = vadd.f32 %v3152, %v3428
          %v3464 = vadd.f32 %v3153, %v3433
          %v3465 = vadd.f32 %v3154, %v3436
          %v3466 = vadd.f32 %v3155, %v3441
          %v3467 = vadd.f32 %v3156, %v3444
          %v3468 = vadd.f32 %v3157, %v3449
          %s3469 = scalar_lea.vmem %s4, 448
          %v3470 = vld [vmem:[%s3469] sm:$0xf]
          %v3471 = vld [vmem:[%s3469 + $0x4] sm:$0xf]
          %v3472 = vld [vmem:[%s3469 + $0x8] sm:$0xf]
          %v3473 = vld [vmem:[%s3469 + $0xc] sm:$0xf]
          %v3474 = vld [vmem:[%s3469 + $0x10] sm:$0xf]
          %v3475 = vld [vmem:[%s3469 + $0x14] sm:$0xf]
          %v3476 = vld [vmem:[%s3469 + $0x18] sm:$0xf]
          %v3477 = vld [vmem:[%s3469 + $0x1c] sm:$0xf]
          %v3478 = vld [vmem:[%s3469 + $0x20] sm:$0xf]
          %v3479 = vld [vmem:[%s3469 + $0x24] sm:$0xf]
          %v3480 = vld [vmem:[%s3469 + $0x28] sm:$0xf]
          %v3481 = vld [vmem:[%s3469 + $0x2c] sm:$0xf]
          %v3482 = vld [vmem:[%s3469 + $0x30] sm:$0xf]
          %v3483 = vld [vmem:[%s3469 + $0x34] sm:$0xf]
          %v3484 = vld [vmem:[%s3469 + $0x38] sm:$0xf]
          %v3485 = vld [vmem:[%s3469 + $0x3c] sm:$0xf]
          %v3486 = vpack.c.b16 %v3209, %v3208
          %v3487 = vpack.c.b16 %v3211, %v3210
          %v3488 = vpack.c.b16 %v3213, %v3212
          %v3489 = vpack.c.b16 %v3215, %v3214
          %v3490 = vpack.c.b16 %v3217, %v3216
          %v3491 = vpack.c.b16 %v3219, %v3218
          %v3492 = vpack.c.b16 %v3221, %v3220
          %v3493 = vpack.c.b16 %v3222, %v3222
          %v3518 = vunpack.c.l.b16 %v3470
          %v3519 = vunpack.c.l.b16 %v3471
          %v3520 = vunpack.c.l.b16 %v3472
          %v3521 = vunpack.c.l.b16 %v3473
          %v3522 = vunpack.c.l.b16 %v3474
          %v3523 = vunpack.c.l.b16 %v3475
          %v3524 = vunpack.c.l.b16 %v3476
          %v3525 = vunpack.c.l.b16 %v3477
          %v3526 = vunpack.c.l.b16 %v3478
          %v3527 = vunpack.c.l.b16 %v3479
          %v3528 = vunpack.c.l.b16 %v3480
          %v3529 = vunpack.c.l.b16 %v3481
          %v3530 = vunpack.c.l.b16 %v3482
          %v3531 = vunpack.c.l.b16 %v3483
          %v3532 = vunpack.c.l.b16 %v3484
          %v3533 = vunpack.c.l.b16 %v3485
          %v3534 = vpack.c.b16 %v3519, %v3518
          %v3535 = vpack.c.b16 %v3521, %v3520
          %v3536 = vpack.c.b16 %v3523, %v3522
          %v3537 = vpack.c.b16 %v3525, %v3524
          %v3538 = vpack.c.b16 %v3527, %v3526
          %v3539 = vpack.c.b16 %v3529, %v3528
          %v3540 = vpack.c.b16 %v3531, %v3530
          %v3541 = vpack.c.b16 %v3533, %v3532
          %3550 = vmatprep.subr.bf16.mxu0 0
          %3551 = vmatpush1.bf16.msra.mxu0 %v3534
          %3552 = vmatprep.subr.bf16.mxu0 0
          %3553 = vmatpush1.bf16.msra.mxu0 %v3535
          %3554 = vmatprep.subr.bf16.mxu0 0
          %3555 = vmatpush1.bf16.msra.mxu0 %v3536
          %3556 = vmatprep.subr.bf16.mxu0 0
          %3557 = vmatpush1.bf16.msra.mxu0 %v3537
          %3558 = vmatprep.subr.bf16.mxu0 0
          %3559 = vmatpush1.bf16.msra.mxu0 %v3538
          %3560 = vmatprep.subr.bf16.mxu0 0
          %3561 = vmatpush1.bf16.msra.mxu0 %v3539
          %3562 = vmatprep.subr.bf16.mxu0 0
          %3563 = vmatpush1.bf16.msra.mxu0 %v3540
          %3564 = vmatprep.subr.bf16.mxu0 0
          %3565 = vmatpush1.bf16.msra.mxu0 %v3541
          %3566 = vmatprep.subr.bf16.mxu0 0
          %3567 = vmatpush1.bf16.msra.mxu0 0
          %3568 = vmatprep.subr.bf16.mxu0 0
          %3569 = vmatpush1.bf16.msra.mxu0 0
          %3570 = vmatprep.subr.bf16.mxu0 0
          %3571 = vmatpush1.bf16.msra.mxu0 0
          %3572 = vmatprep.subr.bf16.mxu0 0
          %3573 = vmatpush1.bf16.msra.mxu0 0
          %3574 = vmatprep.subr.bf16.mxu0 0
          %3575 = vmatpush1.bf16.msra.mxu0 0
          %3576 = vmatprep.subr.bf16.mxu0 0
          %3577 = vmatpush1.bf16.msra.mxu0 0
          %3578 = vmatprep.subr.bf16.mxu0 0
          %3579 = vmatpush1.bf16.msra.mxu0 0
          %3580 = vmatprep.subr.bf16.mxu0 0
          %3581 = vmatpush1.bf16.msra.mxu0 0
          %3582 = vmatprep.mubr.bf16.mxu0 0
          %3583 = vmatmul.mubr.bf16.gmra.mrb[0].mxu0 %v3486
          %v3584 = vpop.f32.mrb[0].mxu0
          %v3585 = vadd.f32 0.0, %v3584
          %v3586 = vpop.f32.mrb[0].mxu0
          %v3587 = vpop.f32.mrb[0].mxu0
          %v3588 = vadd.f32 0.0, %v3587
          %v3589 = vpop.f32.mrb[0].mxu0
          %3590 = vmatprep.mubr.bf16.mxu0 0
          %3591 = vmatmul.mubr.bf16.gmra.mrb[0].mxu0 %v3487
          %v3592 = vpop.f32.mrb[0].mxu0
          %v3593 = vadd.f32 0.0, %v3592
          %v3594 = vpop.f32.mrb[0].mxu0
          %v3595 = vpop.f32.mrb[0].mxu0
          %v3596 = vadd.f32 0.0, %v3595
          %v3597 = vpop.f32.mrb[0].mxu0
          %3598 = vmatprep.mubr.bf16.mxu0 0
          %3599 = vmatmul.mubr.bf16.gmra.mrb[0].mxu0 %v3488
          %v3600 = vpop.f32.mrb[0].mxu0
          %v3601 = vadd.f32 0.0, %v3600
          %v3602 = vpop.f32.mrb[0].mxu0
          %v3603 = vpop.f32.mrb[0].mxu0
          %v3604 = vadd.f32 0.0, %v3603
          %v3605 = vpop.f32.mrb[0].mxu0
          %3606 = vmatprep.mubr.bf16.mxu0 0
          %3607 = vmatmul.mubr.bf16.gmra.mrb[0].mxu0 %v3489
          %v3608 = vpop.f32.mrb[0].mxu0
          %v3609 = vadd.f32 0.0, %v3608
          %v3610 = vpop.f32.mrb[0].mxu0
          %v3611 = vpop.f32.mrb[0].mxu0
          %v3612 = vadd.f32 0.0, %v3611
          %v3613 = vpop.f32.mrb[0].mxu0
          %3614 = vmatprep.mubr.bf16.mxu0 0
          %3615 = vmatmul.mubr.bf16.gmra.mrb[0].mxu0 %v3490
          %v3616 = vpop.f32.mrb[0].mxu0
          %v3617 = vadd.f32 0.0, %v3616
          %v3618 = vpop.f32.mrb[0].mxu0
          %v3619 = vpop.f32.mrb[0].mxu0
          %v3620 = vadd.f32 0.0, %v3619
          %v3621 = vpop.f32.mrb[0].mxu0
          %3622 = vmatprep.mubr.bf16.mxu0 0
          %3623 = vmatmul.mubr.bf16.gmra.mrb[0].mxu0 %v3491
          %v3624 = vpop.f32.mrb[0].mxu0
          %v3625 = vadd.f32 0.0, %v3624
          %v3626 = vpop.f32.mrb[0].mxu0
          %v3627 = vpop.f32.mrb[0].mxu0
          %v3628 = vadd.f32 0.0, %v3627
          %v3629 = vpop.f32.mrb[0].mxu0
          %3630 = vmatprep.mubr.bf16.mxu0 0
          %3631 = vmatmul.mubr.bf16.gmra.mrb[0].mxu0 %v3492
          %v3632 = vpop.f32.mrb[0].mxu0
          %v3633 = vadd.f32 0.0, %v3632
          %v3634 = vpop.f32.mrb[0].mxu0
          %v3635 = vpop.f32.mrb[0].mxu0
          %v3636 = vadd.f32 0.0, %v3635
          %v3637 = vpop.f32.mrb[0].mxu0
          %3638 = vmatprep.mubr.bf16.mxu0 0
          %3639 = vmatmul.mubr.bf16.gmra.mrb[0].mxu0 %v3493
          %v3640 = vpop.f32.mrb[0].mxu0
          %v3641 = vadd.f32 0.0, %v3640
          %v3642 = vpop.f32.mrb[0].mxu0
          %v3643 = vpop.f32.mrb[0].mxu0
          %v3644 = vpop.f32.mrb[0].mxu0
          %3645 = vdwg.mxu0
          %v3646 = vadd.f32 %v3454, %v3585
          %v3647 = vadd.f32 %v3455, %v3588
          %v3648 = vadd.f32 %v3456, %v3593
          %v3649 = vadd.f32 %v3457, %v3596
          %v3650 = vadd.f32 %v3458, %v3601
          %v3651 = vadd.f32 %v3459, %v3604
          %v3652 = vadd.f32 %v3460, %v3609
          %v3653 = vadd.f32 %v3461, %v3612
          %v3654 = vadd.f32 %v3462, %v3617
          %v3655 = vadd.f32 %v3463, %v3620
          %v3656 = vadd.f32 %v3464, %v3625
          %v3657 = vadd.f32 %v3465, %v3628
          %v3658 = vadd.f32 %v3466, %v3633
          %v3659 = vadd.f32 %v3467, %v3636
          %v3660 = vadd.f32 %v3468, %v3641
          %v3661 = vld [vmem:[#allocation2 + $0x14] sm:$0xf]
          %v3662 = vld [vmem:[#allocation2 + $0x18] sm:$0xf]
          %v3663 = vld [vmem:[#allocation2 + $0x1c] sm:$0xf]
          %v3664 = vld [vmem:[#allocation2 + $0x20] sm:$0xf]
          %v3665 = vld [vmem:[#allocation2 + $0x24] sm:$0xf]
          %v3666 = vld [vmem:[#allocation2 + $0x28] sm:$0xf]
          %v3667 = vld [vmem:[#allocation2 + $0x2c] sm:$0xf]
          %v3668 = vld [vmem:[#allocation2 + $0x30] sm:$0xf]
          %v3669 = vld [vmem:[#allocation2 + $0x34] sm:$0xf]
          %v3670 = vld [vmem:[#allocation2 + $0x38] sm:$0xf]
          %v3671 = vld [vmem:[#allocation2 + $0x3c] sm:$0xf]
          %v3672 = vld [vmem:[#allocation2 + $0x40] sm:$0xf]
          %v3673 = vld [vmem:[#allocation2 + $0x44] sm:$0xf]
          %v3674 = vld [vmem:[#allocation2 + $0x48] sm:$0xf]
          %v3675 = vld [vmem:[#allocation2 + $0x4c] sm:$0xf]
          %v3676 = vld [vmem:[#allocation2 + $0x50] sm:$0x1]
          %s3677 = scalar_lea.vmem %s4, 512
          %v3678 = vld [vmem:[%s3677] sm:$0xf]
          %v3679 = vld [vmem:[%s3677 + $0x4] sm:$0xf]
          %v3680 = vld [vmem:[%s3677 + $0x8] sm:$0xf]
          %v3681 = vld [vmem:[%s3677 + $0xc] sm:$0xf]
          %v3682 = vld [vmem:[%s3677 + $0x10] sm:$0xf]
          %v3683 = vld [vmem:[%s3677 + $0x14] sm:$0xf]
          %v3684 = vld [vmem:[%s3677 + $0x18] sm:$0xf]
          %v3685 = vld [vmem:[%s3677 + $0x1c] sm:$0xf]
          %v3686 = vld [vmem:[%s3677 + $0x20] sm:$0xf]
          %v3687 = vld [vmem:[%s3677 + $0x24] sm:$0xf]
          %v3688 = vld [vmem:[%s3677 + $0x28] sm:$0xf]
          %v3689 = vld [vmem:[%s3677 + $0x2c] sm:$0xf]
          %v3690 = vld [vmem:[%s3677 + $0x30] sm:$0xf]
          %v3691 = vld [vmem:[%s3677 + $0x34] sm:$0xf]
          %v3692 = vld [vmem:[%s3677 + $0x38] sm:$0xf]
          %v3693 = vld [vmem:[%s3677 + $0x3c] sm:$0xf]
          %v3710 = vunpack.c.l.b16 %v3661
          %v3711 = vunpack.c.l.b16 %v3662
          %v3712 = vunpack.c.l.b16 %v3663
          %v3713 = vunpack.c.l.b16 %v3664
          %v3714 = vunpack.c.l.b16 %v3665
          %v3715 = vunpack.c.l.b16 %v3666
          %v3716 = vunpack.c.l.b16 %v3667
          %v3717 = vunpack.c.l.b16 %v3668
          %v3718 = vunpack.c.l.b16 %v3669
          %v3719 = vunpack.c.l.b16 %v3670
          %v3720 = vunpack.c.l.b16 %v3671
          %v3721 = vunpack.c.l.b16 %v3672
          %v3722 = vunpack.c.l.b16 %v3673
          %v3723 = vunpack.c.l.b16 %v3674
          %v3724 = vunpack.c.l.b16 %v3675
          %v3725 = vunpack.c.l.b16 %v3676
          %v3726 = vpack.c.b16 %v3711, %v3710
          %v3727 = vpack.c.b16 %v3713, %v3712
          %v3728 = vpack.c.b16 %v3715, %v3714
          %v3729 = vpack.c.b16 %v3717, %v3716
          %v3730 = vpack.c.b16 %v3719, %v3718
          %v3731 = vpack.c.b16 %v3721, %v3720
          %v3732 = vpack.c.b16 %v3723, %v3722
          %v3733 = vpack.c.b16 %v3725, %v3724
          %v3735 = vshrl.u32 %v3726, 16
          %v3737 = vshll.u32 %v3726, 16
          %v3739 = vrot.slane %v3737, 1
          %v3740 = vor.u32 %v3735, %v3739
          %v3742 = vshll.u32 %v3727, 16
          %v3744 = vrot.slane %v3742, 1
          %v3745 = vsel %vm2121, %v3740, %v3744
          %v3746 = vshrl.u32 %v3727, 16
          %v3748 = vor.u32 %v3746, %v3744
          %v3750 = vshll.u32 %v3728, 16
          %v3752 = vrot.slane %v3750, 1
          %v3753 = vsel %vm2121, %v3748, %v3752
          %v3754 = vshrl.u32 %v3728, 16
          %v3756 = vor.u32 %v3754, %v3752
          %v3758 = vshll.u32 %v3729, 16
          %v3760 = vrot.slane %v3758, 1
          %v3761 = vsel %vm2121, %v3756, %v3760
          %v3762 = vshrl.u32 %v3729, 16
          %v3764 = vor.u32 %v3762, %v3760
          %v3766 = vshll.u32 %v3730, 16
          %v3768 = vrot.slane %v3766, 1
          %v3769 = vsel %vm2121, %v3764, %v3768
          %v3770 = vshrl.u32 %v3730, 16
          %v3772 = vor.u32 %v3770, %v3768
          %v3774 = vshll.u32 %v3731, 16
          %v3776 = vrot.slane %v3774, 1
          %v3777 = vsel %vm2121, %v3772, %v3776
          %v3778 = vshrl.u32 %v3731, 16
          %v3780 = vor.u32 %v3778, %v3776
          %v3782 = vshll.u32 %v3732, 16
          %v3784 = vrot.slane %v3782, 1
          %v3785 = vsel %vm2121, %v3780, %v3784
          %v3786 = vshrl.u32 %v3732, 16
          %v3788 = vor.u32 %v3786, %v3784
          %v3790 = vshll.u32 %v3733, 16
          %v3792 = vrot.slane %v3790, 1
          %v3793 = vsel %vm2121, %v3788, %v3792
          %v3794 = vshrl.u32 %v3733, 16
          %v3796 = vor.u32 %v3794, %v3792
          %v3821 = vunpack.c.l.b16 %v3678
          %v3822 = vunpack.c.l.b16 %v3679
          %v3823 = vunpack.c.l.b16 %v3680
          %v3824 = vunpack.c.l.b16 %v3681
          %v3825 = vunpack.c.l.b16 %v3682
          %v3826 = vunpack.c.l.b16 %v3683
          %v3827 = vunpack.c.l.b16 %v3684
          %v3828 = vunpack.c.l.b16 %v3685
          %v3829 = vunpack.c.l.b16 %v3686
          %v3830 = vunpack.c.l.b16 %v3687
          %v3831 = vunpack.c.l.b16 %v3688
          %v3832 = vunpack.c.l.b16 %v3689
          %v3833 = vunpack.c.l.b16 %v3690
          %v3834 = vunpack.c.l.b16 %v3691
          %v3835 = vunpack.c.l.b16 %v3692
          %v3836 = vunpack.c.l.b16 %v3693
          %v3837 = vpack.c.b16 %v3822, %v3821
          %v3838 = vpack.c.b16 %v3824, %v3823
          %v3839 = vpack.c.b16 %v3826, %v3825
          %v3840 = vpack.c.b16 %v3828, %v3827
          %v3841 = vpack.c.b16 %v3830, %v3829
          %v3842 = vpack.c.b16 %v3832, %v3831
          %v3843 = vpack.c.b16 %v3834, %v3833
          %v3844 = vpack.c.b16 %v3836, %v3835
          %3853 = vmatprep.subr.bf16.mxu0 0
          %3854 = vmatpush1.bf16.msra.mxu0 %v3837
          %3855 = vmatprep.subr.bf16.mxu0 0
          %3856 = vmatpush1.bf16.msra.mxu0 %v3838
          %3857 = vmatprep.subr.bf16.mxu0 0
          %3858 = vmatpush1.bf16.msra.mxu0 %v3839
          %3859 = vmatprep.subr.bf16.mxu0 0
          %3860 = vmatpush1.bf16.msra.mxu0 %v3840
          %3861 = vmatprep.subr.bf16.mxu0 0
          %3862 = vmatpush1.bf16.msra.mxu0 %v3841
          %3863 = vmatprep.subr.bf16.mxu0 0
          %3864 = vmatpush1.bf16.msra.mxu0 %v3842
          %3865 = vmatprep.subr.bf16.mxu0 0
          %3866 = vmatpush1.bf16.msra.mxu0 %v3843
          %3867 = vmatprep.subr.bf16.mxu0 0
          %3868 = vmatpush1.bf16.msra.mxu0 %v3844
          %3869 = vmatprep.subr.bf16.mxu0 0
          %3870 = vmatpush1.bf16.msra.mxu0 0
          %3871 = vmatprep.subr.bf16.mxu0 0
          %3872 = vmatpush1.bf16.msra.mxu0 0
          %3873 = vmatprep.subr.bf16.mxu0 0
          %3874 = vmatpush1.bf16.msra.mxu0 0
          %3875 = vmatprep.subr.bf16.mxu0 0
          %3876 = vmatpush1.bf16.msra.mxu0 0
          %3877 = vmatprep.subr.bf16.mxu0 0
          %3878 = vmatpush1.bf16.msra.mxu0 0
          %3879 = vmatprep.subr.bf16.mxu0 0
          %3880 = vmatpush1.bf16.msra.mxu0 0
          %3881 = vmatprep.subr.bf16.mxu0 0
          %3882 = vmatpush1.bf16.msra.mxu0 0
          %3883 = vmatprep.subr.bf16.mxu0 0
          %3884 = vmatpush1.bf16.msra.mxu0 0
          %3885 = vmatprep.mubr.bf16.mxu0 0
          %3886 = vmatmul.mubr.bf16.gmra.mrb[0].mxu0 %v3745
          %v3887 = vpop.f32.mrb[0].mxu0
          %v3888 = vadd.f32 0.0, %v3887
          %v3889 = vpop.f32.mrb[0].mxu0
          %v3890 = vpop.f32.mrb[0].mxu0
          %v3891 = vadd.f32 0.0, %v3890
          %v3892 = vpop.f32.mrb[0].mxu0
          %3893 = vmatprep.mubr.bf16.mxu0 0
          %3894 = vmatmul.mubr.bf16.gmra.mrb[0].mxu0 %v3753
          %v3895 = vpop.f32.mrb[0].mxu0
          %v3896 = vadd.f32 0.0, %v3895
          %v3897 = vpop.f32.mrb[0].mxu0
          %v3898 = vpop.f32.mrb[0].mxu0
          %v3899 = vadd.f32 0.0, %v3898
          %v3900 = vpop.f32.mrb[0].mxu0
          %3901 = vmatprep.mubr.bf16.mxu0 0
          %3902 = vmatmul.mubr.bf16.gmra.mrb[0].mxu0 %v3761
          %v3903 = vpop.f32.mrb[0].mxu0
          %v3904 = vadd.f32 0.0, %v3903
          %v3905 = vpop.f32.mrb[0].mxu0
          %v3906 = vpop.f32.mrb[0].mxu0
          %v3907 = vadd.f32 0.0, %v3906
          %v3908 = vpop.f32.mrb[0].mxu0
          %3909 = vmatprep.mubr.bf16.mxu0 0
          %3910 = vmatmul.mubr.bf16.gmra.mrb[0].mxu0 %v3769
          %v3911 = vpop.f32.mrb[0].mxu0
          %v3912 = vadd.f32 0.0, %v3911
          %v3913 = vpop.f32.mrb[0].mxu0
          %v3914 = vpop.f32.mrb[0].mxu0
          %v3915 = vadd.f32 0.0, %v3914
          %v3916 = vpop.f32.mrb[0].mxu0
          %3917 = vmatprep.mubr.bf16.mxu0 0
          %3918 = vmatmul.mubr.bf16.gmra.mrb[0].mxu0 %v3777
          %v3919 = vpop.f32.mrb[0].mxu0
          %v3920 = vadd.f32 0.0, %v3919
          %v3921 = vpop.f32.mrb[0].mxu0
          %v3922 = vpop.f32.mrb[0].mxu0
          %v3923 = vadd.f32 0.0, %v3922
          %v3924 = vpop.f32.mrb[0].mxu0
          %3925 = vmatprep.mubr.bf16.mxu0 0
          %3926 = vmatmul.mubr.bf16.gmra.mrb[0].mxu0 %v3785
          %v3927 = vpop.f32.mrb[0].mxu0
          %v3928 = vadd.f32 0.0, %v3927
          %v3929 = vpop.f32.mrb[0].mxu0
          %v3930 = vpop.f32.mrb[0].mxu0
          %v3931 = vadd.f32 0.0, %v3930
          %v3932 = vpop.f32.mrb[0].mxu0
          %3933 = vmatprep.mubr.bf16.mxu0 0
          %3934 = vmatmul.mubr.bf16.gmra.mrb[0].mxu0 %v3793
          %v3935 = vpop.f32.mrb[0].mxu0
          %v3936 = vadd.f32 0.0, %v3935
          %v3937 = vpop.f32.mrb[0].mxu0
          %v3938 = vpop.f32.mrb[0].mxu0
          %v3939 = vadd.f32 0.0, %v3938
          %v3940 = vpop.f32.mrb[0].mxu0
          %3941 = vmatprep.mubr.bf16.mxu0 0
          %3942 = vmatmul.mubr.bf16.gmra.mrb[0].mxu0 %v3796
          %v3943 = vpop.f32.mrb[0].mxu0
          %v3944 = vadd.f32 0.0, %v3943
          %v3945 = vpop.f32.mrb[0].mxu0
          %v3946 = vpop.f32.mrb[0].mxu0
          %v3947 = vpop.f32.mrb[0].mxu0
          %3948 = vdwg.mxu0
          %v3949 = vadd.f32 %v3646, %v3888
          %v3950 = vadd.f32 %v3647, %v3891
          %v3951 = vadd.f32 %v3648, %v3896
          %v3952 = vadd.f32 %v3649, %v3899
          %v3953 = vadd.f32 %v3650, %v3904
          %v3954 = vadd.f32 %v3651, %v3907
          %v3955 = vadd.f32 %v3652, %v3912
          %v3956 = vadd.f32 %v3653, %v3915
          %v3957 = vadd.f32 %v3654, %v3920
          %v3958 = vadd.f32 %v3655, %v3923
          %v3959 = vadd.f32 %v3656, %v3928
          %v3960 = vadd.f32 %v3657, %v3931
          %v3961 = vadd.f32 %v3658, %v3936
          %v3962 = vadd.f32 %v3659, %v3939
          %v3963 = vadd.f32 %v3660, %v3944
          %v3965 = vlaneseq
          %v3966 = vshrl.u32 %v3965, 7
          %v3967 = vsub.s32 0, %v3966
          %v3968 = vrot.slane %v467, %v3967
          %v3970 = vmul.f32 %v3949, %v3968
          %v3971 = vmul.f32 %v3950, %v3968
          %v3972 = vmul.f32 %v3951, %v3968
          %v3973 = vmul.f32 %v3952, %v3968
          %v3974 = vmul.f32 %v3953, %v3968
          %v3975 = vmul.f32 %v3954, %v3968
          %v3976 = vmul.f32 %v3955, %v3968
          %v3977 = vmul.f32 %v3956, %v3968
          %v3978 = vmul.f32 %v3957, %v3968
          %v3979 = vmul.f32 %v3958, %v3968
          %v3980 = vmul.f32 %v3959, %v3968
          %v3981 = vmul.f32 %v3960, %v3968
          %v3982 = vmul.f32 %v3961, %v3968
          %v3983 = vmul.f32 %v3962, %v3968
          %v3984 = vmul.f32 %v3963, %v3968
          %v3986 = vlaneseq
          %v3987 = vshrl.u32 %v3986, 7
          %v3988 = vsub.s32 0, %v3987
          %v3989 = vrot.slane %v468, %v3988
          %v3991 = vadd.f32 %v3970, %v3989
          %v3992 = vadd.f32 %v3971, %v3989
          %v3993 = vadd.f32 %v3972, %v3989
          %v3994 = vadd.f32 %v3973, %v3989
          %v3995 = vadd.f32 %v3974, %v3989
          %v3996 = vadd.f32 %v3975, %v3989
          %v3997 = vadd.f32 %v3976, %v3989
          %v3998 = vadd.f32 %v3977, %v3989
          %v3999 = vadd.f32 %v3978, %v3989
          %v4000 = vadd.f32 %v3979, %v3989
          %v4001 = vadd.f32 %v3980, %v3989
          %v4002 = vadd.f32 %v3981, %v3989
          %v4003 = vadd.f32 %v3982, %v3989
          %v4004 = vadd.f32 %v3983, %v3989
          %v4005 = vadd.f32 %v3984, %v3989
          %v4006 = vmax.f32 %v3991, 0.0
          %v4007 = vmax.f32 %v3992, 0.0
          %v4008 = vmax.f32 %v3993, 0.0
          %v4009 = vmax.f32 %v3994, 0.0
          %v4010 = vmax.f32 %v3995, 0.0
          %v4011 = vmax.f32 %v3996, 0.0
          %v4012 = vmax.f32 %v3997, 0.0
          %v4013 = vmax.f32 %v3998, 0.0
          %v4014 = vmax.f32 %v3999, 0.0
          %v4015 = vmax.f32 %v4000, 0.0
          %v4016 = vmax.f32 %v4001, 0.0
          %v4017 = vmax.f32 %v4002, 0.0
          %v4018 = vmax.f32 %v4003, 0.0
          %v4019 = vmax.f32 %v4004, 0.0
          %v4020 = vmax.f32 %v4005, 0.0
          %4021 = vst [vmem:[#allocation5] sm:$0xff] %v4006
          %4022 = vst [vmem:[#allocation5 + $0x8] sm:$0xff] %v4007
          %4023 = vst [vmem:[#allocation5 + $0x10] sm:$0xff] %v4008
          %4024 = vst [vmem:[#allocation5 + $0x18] sm:$0xff] %v4009
          %4025 = vst [vmem:[#allocation5 + $0x20] sm:$0xff] %v4010
          %4026 = vst [vmem:[#allocation5 + $0x28] sm:$0xff] %v4011
          %4027 = vst [vmem:[#allocation5 + $0x30] sm:$0xff] %v4012
          %4028 = vst [vmem:[#allocation5 + $0x38] sm:$0xff] %v4013
          %4029 = vst [vmem:[#allocation5 + $0x40] sm:$0xff] %v4014
          %4030 = vst [vmem:[#allocation5 + $0x48] sm:$0xff] %v4015
          %4031 = vst [vmem:[#allocation5 + $0x50] sm:$0xff] %v4016
          %4032 = vst [vmem:[#allocation5 + $0x58] sm:$0xff] %v4017
          %4033 = vst [vmem:[#allocation5 + $0x60] sm:$0xff] %v4018
          %4034 = vst [vmem:[#allocation5 + $0x68] sm:$0xff] %v4019
          %4035 = vst [vmem:[#allocation5 + $0x70] sm:$0xff] %v4020
          %v4036 = vld [vmem:[#allocation5] ss:$2 sm:$0xf]
          %s4037 = scalar_lea.vmem [#allocation5], 1
          %v4038 = vld [vmem:[%s4037] ss:$2 sm:$0xf]
          %s4039 = scalar_lea.vmem [#allocation5], 16
          %v4040 = vld [vmem:[%s4039] ss:$2 sm:$0xf]
          %s4041 = scalar_lea.vmem [#allocation5], 17
          %v4042 = vld [vmem:[%s4041] ss:$2 sm:$0xf]
          %v4043 = vmax.f32 %v4036, %v4038
          %v4044 = vmax.f32 %v4040, %v4042
          %v4045 = vmax.f32 %v4043, %v4044
          %v4046 = vpack.c.bf16 %v4045, %v4045
          %4047 = vst [vmem:[#allocation3 + $0x8] sm:$0x3] %v4046
          %s4048 = scalar_lea.vmem [#allocation5], 32
          %v4049 = vld [vmem:[%s4048] ss:$2 sm:$0xf]
          %s4050 = scalar_lea.vmem [#allocation5], 33
          %v4051 = vld [vmem:[%s4050] ss:$2 sm:$0xf]
          %s4052 = scalar_lea.vmem [#allocation5], 48
          %v4053 = vld [vmem:[%s4052] ss:$2 sm:$0xf]
          %s4054 = scalar_lea.vmem [#allocation5], 49
          %v4055 = vld [vmem:[%s4054] ss:$2 sm:$0xf]
          %v4056 = vmax.f32 %v4049, %v4051
          %v4057 = vmax.f32 %v4053, %v4055
          %v4058 = vmax.f32 %v4056, %v4057
          %v4059 = vpack.c.bf16 %v4058, %v4058
          %4060 = vst [vmem:[#allocation3 + $0xc] sm:$0x3] %v4059
          %s4061 = scalar_lea.vmem [#allocation5], 64
          %v4062 = vld [vmem:[%s4061] ss:$2 sm:$0xf]
          %s4063 = scalar_lea.vmem [#allocation5], 65
          %v4064 = vld [vmem:[%s4063] ss:$2 sm:$0xf]
          %s4065 = scalar_lea.vmem [#allocation5], 80
          %v4066 = vld [vmem:[%s4065] ss:$2 sm:$0xf]
          %s4067 = scalar_lea.vmem [#allocation5], 81
          %v4068 = vld [vmem:[%s4067] ss:$2 sm:$0xf]
          %v4069 = vmax.f32 %v4062, %v4064
          %v4070 = vmax.f32 %v4066, %v4068
          %v4071 = vmax.f32 %v4069, %v4070
          %v4072 = vpack.c.bf16 %v4071, %v4071
          %4073 = vst [vmem:[#allocation3 + $0x10] sm:$0x3] %v4072
          %s4074 = scalar_lea.vmem [#allocation5], 96
          %v4075 = vld [vmem:[%s4074] ss:$2 sm:$0xf]
          %s4076 = scalar_lea.vmem [#allocation5], 97
          %v4077 = vld [vmem:[%s4076] ss:$2 sm:$0xf]
          %s4078 = scalar_lea.vmem [#allocation5], 112
          %v4079 = vld [vmem:[%s4078] ss:$2 sm:$0xf]
          %s4080 = scalar_lea.vmem [#allocation5], 113
          %v4081 = vld [vmem:[%s4080] ss:$2 sm:$0xf]
          %v4082 = vmax.f32 %v4075, %v4077
          %v4083 = vmax.f32 %v4079, %v4081
          %v4084 = vmax.f32 %v4082, %v4083
          %v4085 = vpack.c.bf16 %v4084, %v4084
          %4086 = vst [vmem:[#allocation3 + $0x14] sm:$0x3] %v4085
          %v4087 = vld [vmem:[#allocation3] sm:$0x8]
          %v4088 = vld [vmem:[#allocation3 + $0x4] sm:$0xf]
          %v4089 = vld [vmem:[#allocation3 + $0x8] sm:$0xf]
          %v4090 = vld [vmem:[#allocation3 + $0xc] sm:$0xf]
          %v4091 = vld [vmem:[#allocation3 + $0x10] sm:$0x3]
          %v4092 = vld [vmem:[%s7] sm:$0xf]
          %v4093 = vld [vmem:[%s7 + $0x4] sm:$0xf]
          %v4094 = vld [vmem:[%s7 + $0x8] sm:$0xf]
          %v4095 = vld [vmem:[%s7 + $0xc] sm:$0xf]
          %v4096 = vld [vmem:[%s7 + $0x10] sm:$0xf]
          %v4097 = vld [vmem:[%s7 + $0x14] sm:$0xf]
          %v4098 = vld [vmem:[%s7 + $0x18] sm:$0xf]
          %v4099 = vld [vmem:[%s7 + $0x1c] sm:$0xf]
          %v4100 = vld [vmem:[%s7 + $0x20] sm:$0xf]
          %v4101 = vld [vmem:[%s7 + $0x24] sm:$0xf]
          %v4102 = vld [vmem:[%s7 + $0x28] sm:$0xf]
          %v4103 = vld [vmem:[%s7 + $0x2c] sm:$0xf]
          %v4104 = vld [vmem:[%s7 + $0x30] sm:$0xf]
          %v4105 = vld [vmem:[%s7 + $0x34] sm:$0xf]
          %v4106 = vld [vmem:[%s7 + $0x38] sm:$0xf]
          %v4107 = vld [vmem:[%s7 + $0x3c] sm:$0xf]
          %s4108 = scalar_lea.vmem %s7, 64
          %v4109 = vld [vmem:[%s4108] sm:$0xf]
          %v4110 = vld [vmem:[%s4108 + $0x4] sm:$0xf]
          %v4111 = vld [vmem:[%s4108 + $0x8] sm:$0xf]
          %v4112 = vld [vmem:[%s4108 + $0xc] sm:$0xf]
          %v4113 = vld [vmem:[%s4108 + $0x10] sm:$0xf]
          %v4114 = vld [vmem:[%s4108 + $0x14] sm:$0xf]
          %v4115 = vld [vmem:[%s4108 + $0x18] sm:$0xf]
          %v4116 = vld [vmem:[%s4108 + $0x1c] sm:$0xf]
          %v4117 = vld [vmem:[%s4108 + $0x20] sm:$0xf]
          %v4118 = vld [vmem:[%s4108 + $0x24] sm:$0xf]
          %v4119 = vld [vmem:[%s4108 + $0x28] sm:$0xf]
          %v4120 = vld [vmem:[%s4108 + $0x2c] sm:$0xf]
          %v4121 = vld [vmem:[%s4108 + $0x30] sm:$0xf]
          %v4122 = vld [vmem:[%s4108 + $0x34] sm:$0xf]
          %v4123 = vld [vmem:[%s4108 + $0x38] sm:$0xf]
          %v4124 = vld [vmem:[%s4108 + $0x3c] sm:$0xf]
          %v4129 = vunpack.c.l.b16 %v4088
          %v4130 = vunpack.c.l.b16 %v4089
          %v4131 = vunpack.c.l.b16 %v4090
          %v4132 = vunpack.c.l.b16 %v4091
          %v4133 = vpack.c.b16 %v4130, %v4129
          %v4134 = vpack.c.b16 %v4132, %v4131
          %v4153 = vunpack.c.l.b16 %v4109
          %v4154 = vunpack.c.l.b16 %v4110
          %v4155 = vunpack.c.l.b16 %v4111
          %v4156 = vunpack.c.l.b16 %v4112
          %v4157 = vunpack.c.l.b16 %v4113
          %v4158 = vunpack.c.l.b16 %v4114
          %v4159 = vunpack.c.l.b16 %v4115
          %v4160 = vunpack.c.l.b16 %v4116
          %v4161 = vunpack.c.l.b16 %v4117
          %v4162 = vunpack.c.l.b16 %v4118
          %v4163 = vunpack.c.l.b16 %v4119
          %v4164 = vunpack.c.l.b16 %v4120
          %v4165 = vunpack.c.l.b16 %v4121
          %v4166 = vunpack.c.l.b16 %v4122
          %v4167 = vunpack.c.l.b16 %v4123
          %v4168 = vunpack.c.l.b16 %v4124
          %v4169 = vpack.c.b16 %v4154, %v4153
          %v4170 = vpack.c.b16 %v4156, %v4155
          %v4171 = vpack.c.b16 %v4158, %v4157
          %v4172 = vpack.c.b16 %v4160, %v4159
          %v4173 = vpack.c.b16 %v4162, %v4161
          %v4174 = vpack.c.b16 %v4164, %v4163
          %v4175 = vpack.c.b16 %v4166, %v4165
          %v4176 = vpack.c.b16 %v4168, %v4167
          %4185 = vmatprep.subr.bf16.mxu0 0
          %4186 = vmatpush1.bf16.msra.mxu0 %v4169
          %4187 = vmatprep.subr.bf16.mxu0 0
          %4188 = vmatpush1.bf16.msra.mxu0 %v4170
          %4189 = vmatprep.subr.bf16.mxu0 0
          %4190 = vmatpush1.bf16.msra.mxu0 %v4171
          %4191 = vmatprep.subr.bf16.mxu0 0
          %4192 = vmatpush1.bf16.msra.mxu0 %v4172
          %4193 = vmatprep.subr.bf16.mxu0 0
          %4194 = vmatpush1.bf16.msra.mxu0 %v4173
          %4195 = vmatprep.subr.bf16.mxu0 0
          %4196 = vmatpush1.bf16.msra.mxu0 %v4174
          %4197 = vmatprep.subr.bf16.mxu0 0
          %4198 = vmatpush1.bf16.msra.mxu0 %v4175
          %4199 = vmatprep.subr.bf16.mxu0 0
          %4200 = vmatpush1.bf16.msra.mxu0 %v4176
          %4201 = vmatprep.subr.bf16.mxu0 0
          %4202 = vmatpush1.bf16.msra.mxu0 0
          %4203 = vmatprep.subr.bf16.mxu0 0
          %4204 = vmatpush1.bf16.msra.mxu0 0
          %4205 = vmatprep.subr.bf16.mxu0 0
          %4206 = vmatpush1.bf16.msra.mxu0 0
          %4207 = vmatprep.subr.bf16.mxu0 0
          %4208 = vmatpush1.bf16.msra.mxu0 0
          %4209 = vmatprep.subr.bf16.mxu0 0
          %4210 = vmatpush1.bf16.msra.mxu0 0
          %4211 = vmatprep.subr.bf16.mxu0 0
          %4212 = vmatpush1.bf16.msra.mxu0 0
          %4213 = vmatprep.subr.bf16.mxu0 0
          %4214 = vmatpush1.bf16.msra.mxu0 0
          %4215 = vmatprep.subr.bf16.mxu0 0
          %4216 = vmatpush1.bf16.msra.mxu0 0
          %4217 = vmatprep.mubr.bf16.mxu0 0
          %4218 = vmatmul.mubr.bf16.gmra.mrb[0].mxu0 %v4133
          %v4219 = vpop.f32.mrb[0].mxu0
          %v4220 = vadd.f32 0.0, %v4219
          %v4221 = vpop.f32.mrb[0].mxu0
          %v4222 = vpop.f32.mrb[0].mxu0
          %v4223 = vadd.f32 0.0, %v4222
          %v4224 = vpop.f32.mrb[0].mxu0
          %4225 = vmatprep.mubr.bf16.mxu0 0
          %4226 = vmatmul.mubr.bf16.gmra.mrb[0].mxu0 %v4134
          %v4227 = vpop.f32.mrb[0].mxu0
          %v4228 = vadd.f32 0.0, %v4227
          %v4229 = vpop.f32.mrb[0].mxu0
          %v4230 = vpop.f32.mrb[0].mxu0
          %v4231 = vadd.f32 0.0, %v4230
          %v4232 = vpop.f32.mrb[0].mxu0
          %4233 = vdwg.mxu0
          %v4235 = vunpack.c.l.b16 %v4087
          %v4236 = vpack.c.b16 %v4129, %v4235
          %v4237 = vpack.c.b16 %v4131, %v4130
          %v4238 = vpack.c.b16 %v4132, %v4132
          %v4240 = vshrl.u32 %v4236, 16
          %v4242 = vrot.slane %v4240, 3
          %v4243 = vshll.u32 %v4236, 16
          %v4245 = vrot.slane %v4243, 4
          %v4246 = vor.u32 %v4242, %v4245
          %v4248 = vshrl.u32 %v4237, 16
          %v4250 = vrot.slane %v4248, 3
          %v4251 = vshll.u32 %v4237, 16
          %v4253 = vrot.slane %v4251, 4
          %v4254 = vor.u32 %v4250, %v4253
          %v4255 = vsel %vm1824, %v4246, %v4254
          %v4257 = vshrl.u32 %v4238, 16
          %v4259 = vrot.slane %v4257, 3
          %v4260 = vshll.u32 %v4238, 16
          %v4262 = vrot.slane %v4260, 4
          %v4263 = vor.u32 %v4259, %v4262
          %v4264 = vsel %vm1824, %v4254, %v4263
          %v4283 = vunpack.c.l.b16 %v4092
          %v4284 = vunpack.c.l.b16 %v4093
          %v4285 = vunpack.c.l.b16 %v4094
          %v4286 = vunpack.c.l.b16 %v4095
          %v4287 = vunpack.c.l.b16 %v4096
          %v4288 = vunpack.c.l.b16 %v4097
          %v4289 = vunpack.c.l.b16 %v4098
          %v4290 = vunpack.c.l.b16 %v4099
          %v4291 = vunpack.c.l.b16 %v4100
          %v4292 = vunpack.c.l.b16 %v4101
          %v4293 = vunpack.c.l.b16 %v4102
          %v4294 = vunpack.c.l.b16 %v4103
          %v4295 = vunpack.c.l.b16 %v4104
          %v4296 = vunpack.c.l.b16 %v4105
          %v4297 = vunpack.c.l.b16 %v4106
          %v4298 = vunpack.c.l.b16 %v4107
          %v4299 = vpack.c.b16 %v4284, %v4283
          %v4300 = vpack.c.b16 %v4286, %v4285
          %v4301 = vpack.c.b16 %v4288, %v4287
          %v4302 = vpack.c.b16 %v4290, %v4289
          %v4303 = vpack.c.b16 %v4292, %v4291
          %v4304 = vpack.c.b16 %v4294, %v4293
          %v4305 = vpack.c.b16 %v4296, %v4295
          %v4306 = vpack.c.b16 %v4298, %v4297
          %4315 = vmatprep.subr.bf16.mxu0 0
          %4316 = vmatpush1.bf16.msra.mxu0 %v4299
          %4317 = vmatprep.subr.bf16.mxu0 0
          %4318 = vmatpush1.bf16.msra.mxu0 %v4300
          %4319 = vmatprep.subr.bf16.mxu0 0
          %4320 = vmatpush1.bf16.msra.mxu0 %v4301
          %4321 = vmatprep.subr.bf16.mxu0 0
          %4322 = vmatpush1.bf16.msra.mxu0 %v4302
          %4323 = vmatprep.subr.bf16.mxu0 0
          %4324 = vmatpush1.bf16.msra.mxu0 %v4303
          %4325 = vmatprep.subr.bf16.mxu0 0
          %4326 = vmatpush1.bf16.msra.mxu0 %v4304
          %4327 = vmatprep.subr.bf16.mxu0 0
          %4328 = vmatpush1.bf16.msra.mxu0 %v4305
          %4329 = vmatprep.subr.bf16.mxu0 0
          %4330 = vmatpush1.bf16.msra.mxu0 %v4306
          %4331 = vmatprep.subr.bf16.mxu0 0
          %4332 = vmatpush1.bf16.msra.mxu0 0
          %4333 = vmatprep.subr.bf16.mxu0 0
          %4334 = vmatpush1.bf16.msra.mxu0 0
          %4335 = vmatprep.subr.bf16.mxu0 0
          %4336 = vmatpush1.bf16.msra.mxu0 0
          %4337 = vmatprep.subr.bf16.mxu0 0
          %4338 = vmatpush1.bf16.msra.mxu0 0
          %4339 = vmatprep.subr.bf16.mxu0 0
          %4340 = vmatpush1.bf16.msra.mxu0 0
          %4341 = vmatprep.subr.bf16.mxu0 0
          %4342 = vmatpush1.bf16.msra.mxu0 0
          %4343 = vmatprep.subr.bf16.mxu0 0
          %4344 = vmatpush1.bf16.msra.mxu0 0
          %4345 = vmatprep.subr.bf16.mxu0 0
          %4346 = vmatpush1.bf16.msra.mxu0 0
          %4347 = vmatprep.mubr.bf16.mxu0 0
          %4348 = vmatmul.mubr.bf16.gmra.mrb[0].mxu0 %v4255
          %v4349 = vpop.f32.mrb[0].mxu0
          %v4350 = vadd.f32 %v4220, %v4349
          %v4351 = vpop.f32.mrb[0].mxu0
          %v4352 = vpop.f32.mrb[0].mxu0
          %v4353 = vadd.f32 %v4223, %v4352
          %v4354 = vpop.f32.mrb[0].mxu0
          %4355 = vmatprep.mubr.bf16.mxu0 0
          %4356 = vmatmul.mubr.bf16.gmra.mrb[0].mxu0 %v4264
          %v4357 = vpop.f32.mrb[0].mxu0
          %v4358 = vadd.f32 %v4228, %v4357
          %v4359 = vpop.f32.mrb[0].mxu0
          %v4360 = vpop.f32.mrb[0].mxu0
          %v4361 = vadd.f32 %v4231, %v4360
          %v4362 = vpop.f32.mrb[0].mxu0
          %4363 = vdwg.mxu0
          %v4364 = vld [vmem:[#allocation3 + $0x10] sm:$0x7]
          %s4365 = scalar_lea.vmem %s7, 128
          %v4366 = vld [vmem:[%s4365] sm:$0xf]
          %v4367 = vld [vmem:[%s4365 + $0x4] sm:$0xf]
          %v4368 = vld [vmem:[%s4365 + $0x8] sm:$0xf]
          %v4369 = vld [vmem:[%s4365 + $0xc] sm:$0xf]
          %v4370 = vld [vmem:[%s4365 + $0x10] sm:$0xf]
          %v4371 = vld [vmem:[%s4365 + $0x14] sm:$0xf]
          %v4372 = vld [vmem:[%s4365 + $0x18] sm:$0xf]
          %v4373 = vld [vmem:[%s4365 + $0x1c] sm:$0xf]
          %v4374 = vld [vmem:[%s4365 + $0x20] sm:$0xf]
          %v4375 = vld [vmem:[%s4365 + $0x24] sm:$0xf]
          %v4376 = vld [vmem:[%s4365 + $0x28] sm:$0xf]
          %v4377 = vld [vmem:[%s4365 + $0x2c] sm:$0xf]
          %v4378 = vld [vmem:[%s4365 + $0x30] sm:$0xf]
          %v4379 = vld [vmem:[%s4365 + $0x34] sm:$0xf]
          %v4380 = vld [vmem:[%s4365 + $0x38] sm:$0xf]
          %v4381 = vld [vmem:[%s4365 + $0x3c] sm:$0xf]
          %v4383 = vunpack.c.l.b16 %v4364
          %v4384 = vpack.c.b16 %v4383, %v4131
          %v4386 = vshrl.u32 %v4133, 16
          %v4388 = vshll.u32 %v4133, 16
          %v4390 = vrot.slane %v4388, 1
          %v4391 = vor.u32 %v4386, %v4390
          %v4393 = vshll.u32 %v4384, 16
          %v4395 = vrot.slane %v4393, 1
          %v4396 = vsel %vm2121, %v4391, %v4395
          %v4397 = vshrl.u32 %v4384, 16
          %v4399 = vor.u32 %v4397, %v4395
          %v4418 = vunpack.c.l.b16 %v4366
          %v4419 = vunpack.c.l.b16 %v4367
          %v4420 = vunpack.c.l.b16 %v4368
          %v4421 = vunpack.c.l.b16 %v4369
          %v4422 = vunpack.c.l.b16 %v4370
          %v4423 = vunpack.c.l.b16 %v4371
          %v4424 = vunpack.c.l.b16 %v4372
          %v4425 = vunpack.c.l.b16 %v4373
          %v4426 = vunpack.c.l.b16 %v4374
          %v4427 = vunpack.c.l.b16 %v4375
          %v4428 = vunpack.c.l.b16 %v4376
          %v4429 = vunpack.c.l.b16 %v4377
          %v4430 = vunpack.c.l.b16 %v4378
          %v4431 = vunpack.c.l.b16 %v4379
          %v4432 = vunpack.c.l.b16 %v4380
          %v4433 = vunpack.c.l.b16 %v4381
          %v4434 = vpack.c.b16 %v4419, %v4418
          %v4435 = vpack.c.b16 %v4421, %v4420
          %v4436 = vpack.c.b16 %v4423, %v4422
          %v4437 = vpack.c.b16 %v4425, %v4424
          %v4438 = vpack.c.b16 %v4427, %v4426
          %v4439 = vpack.c.b16 %v4429, %v4428
          %v4440 = vpack.c.b16 %v4431, %v4430
          %v4441 = vpack.c.b16 %v4433, %v4432
          %4450 = vmatprep.subr.bf16.mxu0 0
          %4451 = vmatpush1.bf16.msra.mxu0 %v4434
          %4452 = vmatprep.subr.bf16.mxu0 0
          %4453 = vmatpush1.bf16.msra.mxu0 %v4435
          %4454 = vmatprep.subr.bf16.mxu0 0
          %4455 = vmatpush1.bf16.msra.mxu0 %v4436
          %4456 = vmatprep.subr.bf16.mxu0 0
          %4457 = vmatpush1.bf16.msra.mxu0 %v4437
          %4458 = vmatprep.subr.bf16.mxu0 0
          %4459 = vmatpush1.bf16.msra.mxu0 %v4438
          %4460 = vmatprep.subr.bf16.mxu0 0
          %4461 = vmatpush1.bf16.msra.mxu0 %v4439
          %4462 = vmatprep.subr.bf16.mxu0 0
          %4463 = vmatpush1.bf16.msra.mxu0 %v4440
          %4464 = vmatprep.subr.bf16.mxu0 0
          %4465 = vmatpush1.bf16.msra.mxu0 %v4441
          %4466 = vmatprep.subr.bf16.mxu0 0
          %4467 = vmatpush1.bf16.msra.mxu0 0
          %4468 = vmatprep.subr.bf16.mxu0 0
          %4469 = vmatpush1.bf16.msra.mxu0 0
          %4470 = vmatprep.subr.bf16.mxu0 0
          %4471 = vmatpush1.bf16.msra.mxu0 0
          %4472 = vmatprep.subr.bf16.mxu0 0
          %4473 = vmatpush1.bf16.msra.mxu0 0
          %4474 = vmatprep.subr.bf16.mxu0 0
          %4475 = vmatpush1.bf16.msra.mxu0 0
          %4476 = vmatprep.subr.bf16.mxu0 0
          %4477 = vmatpush1.bf16.msra.mxu0 0
          %4478 = vmatprep.subr.bf16.mxu0 0
          %4479 = vmatpush1.bf16.msra.mxu0 0
          %4480 = vmatprep.subr.bf16.mxu0 0
          %4481 = vmatpush1.bf16.msra.mxu0 0
          %4482 = vmatprep.mubr.bf16.mxu0 0
          %4483 = vmatmul.mubr.bf16.gmra.mrb[0].mxu0 %v4396
          %v4484 = vpop.f32.mrb[0].mxu0
          %v4485 = vadd.f32 0.0, %v4484
          %v4486 = vpop.f32.mrb[0].mxu0
          %v4487 = vpop.f32.mrb[0].mxu0
          %v4488 = vadd.f32 0.0, %v4487
          %v4489 = vpop.f32.mrb[0].mxu0
          %4490 = vmatprep.mubr.bf16.mxu0 0
          %4491 = vmatmul.mubr.bf16.gmra.mrb[0].mxu0 %v4399
          %v4492 = vpop.f32.mrb[0].mxu0
          %v4493 = vadd.f32 0.0, %v4492
          %v4494 = vpop.f32.mrb[0].mxu0
          %v4495 = vpop.f32.mrb[0].mxu0
          %v4496 = vadd.f32 0.0, %v4495
          %v4497 = vpop.f32.mrb[0].mxu0
          %4498 = vdwg.mxu0
          %v4499 = vadd.f32 %v4350, %v4485
          %v4500 = vadd.f32 %v4353, %v4488
          %v4501 = vadd.f32 %v4358, %v4493
          %v4502 = vadd.f32 %v4361, %v4496
          %v4503 = vld [vmem:[#allocation3 + $0x4] sm:$0x8]
          %v4504 = vld [vmem:[#allocation3 + $0x8] sm:$0xf]
          %v4505 = vld [vmem:[#allocation3 + $0xc] sm:$0xf]
          %v4506 = vld [vmem:[#allocation3 + $0x10] sm:$0xf]
          %v4507 = vld [vmem:[#allocation3 + $0x14] sm:$0x3]
          %s4508 = scalar_lea.vmem %s7, 192
          %v4509 = vld [vmem:[%s4508] sm:$0xf]
          %v4510 = vld [vmem:[%s4508 + $0x4] sm:$0xf]
          %v4511 = vld [vmem:[%s4508 + $0x8] sm:$0xf]
          %v4512 = vld [vmem:[%s4508 + $0xc] sm:$0xf]
          %v4513 = vld [vmem:[%s4508 + $0x10] sm:$0xf]
          %v4514 = vld [vmem:[%s4508 + $0x14] sm:$0xf]
          %v4515 = vld [vmem:[%s4508 + $0x18] sm:$0xf]
          %v4516 = vld [vmem:[%s4508 + $0x1c] sm:$0xf]
          %v4517 = vld [vmem:[%s4508 + $0x20] sm:$0xf]
          %v4518 = vld [vmem:[%s4508 + $0x24] sm:$0xf]
          %v4519 = vld [vmem:[%s4508 + $0x28] sm:$0xf]
          %v4520 = vld [vmem:[%s4508 + $0x2c] sm:$0xf]
          %v4521 = vld [vmem:[%s4508 + $0x30] sm:$0xf]
          %v4522 = vld [vmem:[%s4508 + $0x34] sm:$0xf]
          %v4523 = vld [vmem:[%s4508 + $0x38] sm:$0xf]
          %v4524 = vld [vmem:[%s4508 + $0x3c] sm:$0xf]
          %v4530 = vunpack.c.l.b16 %v4503
          %v4531 = vunpack.c.l.b16 %v4504
          %v4532 = vunpack.c.l.b16 %v4505
          %v4533 = vunpack.c.l.b16 %v4506
          %v4534 = vunpack.c.l.b16 %v4507
          %v4535 = vpack.c.b16 %v4531, %v4530
          %v4536 = vpack.c.b16 %v4533, %v4532
          %v4537 = vpack.c.b16 %v4534, %v4534
          %v4539 = vshrl.u32 %v4535, 16
          %v4541 = vrot.slane %v4539, 3
          %v4542 = vshll.u32 %v4535, 16
          %v4544 = vrot.slane %v4542, 4
          %v4545 = vor.u32 %v4541, %v4544
          %v4547 = vshrl.u32 %v4536, 16
          %v4549 = vrot.slane %v4547, 3
          %v4550 = vshll.u32 %v4536, 16
          %v4552 = vrot.slane %v4550, 4
          %v4553 = vor.u32 %v4549, %v4552
          %v4554 = vsel %vm1824, %v4545, %v4553
          %v4556 = vshrl.u32 %v4537, 16
          %v4558 = vrot.slane %v4556, 3
          %v4559 = vshll.u32 %v4537, 16
          %v4561 = vrot.slane %v4559, 4
          %v4562 = vor.u32 %v4558, %v4561
          %v4563 = vsel %vm1824, %v4553, %v4562
          %v4582 = vunpack.c.l.b16 %v4509
          %v4583 = vunpack.c.l.b16 %v4510
          %v4584 = vunpack.c.l.b16 %v4511
          %v4585 = vunpack.c.l.b16 %v4512
          %v4586 = vunpack.c.l.b16 %v4513
          %v4587 = vunpack.c.l.b16 %v4514
          %v4588 = vunpack.c.l.b16 %v4515
          %v4589 = vunpack.c.l.b16 %v4516
          %v4590 = vunpack.c.l.b16 %v4517
          %v4591 = vunpack.c.l.b16 %v4518
          %v4592 = vunpack.c.l.b16 %v4519
          %v4593 = vunpack.c.l.b16 %v4520
          %v4594 = vunpack.c.l.b16 %v4521
          %v4595 = vunpack.c.l.b16 %v4522
          %v4596 = vunpack.c.l.b16 %v4523
          %v4597 = vunpack.c.l.b16 %v4524
          %v4598 = vpack.c.b16 %v4583, %v4582
          %v4599 = vpack.c.b16 %v4585, %v4584
          %v4600 = vpack.c.b16 %v4587, %v4586
          %v4601 = vpack.c.b16 %v4589, %v4588
          %v4602 = vpack.c.b16 %v4591, %v4590
          %v4603 = vpack.c.b16 %v4593, %v4592
          %v4604 = vpack.c.b16 %v4595, %v4594
          %v4605 = vpack.c.b16 %v4597, %v4596
          %4614 = vmatprep.subr.bf16.mxu0 0
          %4615 = vmatpush1.bf16.msra.mxu0 %v4598
          %4616 = vmatprep.subr.bf16.mxu0 0
          %4617 = vmatpush1.bf16.msra.mxu0 %v4599
          %4618 = vmatprep.subr.bf16.mxu0 0
          %4619 = vmatpush1.bf16.msra.mxu0 %v4600
          %4620 = vmatprep.subr.bf16.mxu0 0
          %4621 = vmatpush1.bf16.msra.mxu0 %v4601
          %4622 = vmatprep.subr.bf16.mxu0 0
          %4623 = vmatpush1.bf16.msra.mxu0 %v4602
          %4624 = vmatprep.subr.bf16.mxu0 0
          %4625 = vmatpush1.bf16.msra.mxu0 %v4603
          %4626 = vmatprep.subr.bf16.mxu0 0
          %4627 = vmatpush1.bf16.msra.mxu0 %v4604
          %4628 = vmatprep.subr.bf16.mxu0 0
          %4629 = vmatpush1.bf16.msra.mxu0 %v4605
          %4630 = vmatprep.subr.bf16.mxu0 0
          %4631 = vmatpush1.bf16.msra.mxu0 0
          %4632 = vmatprep.subr.bf16.mxu0 0
          %4633 = vmatpush1.bf16.msra.mxu0 0
          %4634 = vmatprep.subr.bf16.mxu0 0
          %4635 = vmatpush1.bf16.msra.mxu0 0
          %4636 = vmatprep.subr.bf16.mxu0 0
          %4637 = vmatpush1.bf16.msra.mxu0 0
          %4638 = vmatprep.subr.bf16.mxu0 0
          %4639 = vmatpush1.bf16.msra.mxu0 0
          %4640 = vmatprep.subr.bf16.mxu0 0
          %4641 = vmatpush1.bf16.msra.mxu0 0
          %4642 = vmatprep.subr.bf16.mxu0 0
          %4643 = vmatpush1.bf16.msra.mxu0 0
          %4644 = vmatprep.subr.bf16.mxu0 0
          %4645 = vmatpush1.bf16.msra.mxu0 0
          %4646 = vmatprep.mubr.bf16.mxu0 0
          %4647 = vmatmul.mubr.bf16.gmra.mrb[0].mxu0 %v4554
          %v4648 = vpop.f32.mrb[0].mxu0
          %v4649 = vadd.f32 0.0, %v4648
          %v4650 = vpop.f32.mrb[0].mxu0
          %v4651 = vpop.f32.mrb[0].mxu0
          %v4652 = vadd.f32 0.0, %v4651
          %v4653 = vpop.f32.mrb[0].mxu0
          %4654 = vmatprep.mubr.bf16.mxu0 0
          %4655 = vmatmul.mubr.bf16.gmra.mrb[0].mxu0 %v4563
          %v4656 = vpop.f32.mrb[0].mxu0
          %v4657 = vadd.f32 0.0, %v4656
          %v4658 = vpop.f32.mrb[0].mxu0
          %v4659 = vpop.f32.mrb[0].mxu0
          %v4660 = vadd.f32 0.0, %v4659
          %v4661 = vpop.f32.mrb[0].mxu0
          %4662 = vdwg.mxu0
          %v4663 = vadd.f32 %v4499, %v4649
          %v4664 = vadd.f32 %v4500, %v4652
          %v4665 = vadd.f32 %v4501, %v4657
          %v4666 = vadd.f32 %v4502, %v4660
          %s4667 = scalar_lea.vmem %s7, 256
          %v4668 = vld [vmem:[%s4667] sm:$0xf]
          %v4669 = vld [vmem:[%s4667 + $0x4] sm:$0xf]
          %v4670 = vld [vmem:[%s4667 + $0x8] sm:$0xf]
          %v4671 = vld [vmem:[%s4667 + $0xc] sm:$0xf]
          %v4672 = vld [vmem:[%s4667 + $0x10] sm:$0xf]
          %v4673 = vld [vmem:[%s4667 + $0x14] sm:$0xf]
          %v4674 = vld [vmem:[%s4667 + $0x18] sm:$0xf]
          %v4675 = vld [vmem:[%s4667 + $0x1c] sm:$0xf]
          %v4676 = vld [vmem:[%s4667 + $0x20] sm:$0xf]
          %v4677 = vld [vmem:[%s4667 + $0x24] sm:$0xf]
          %v4678 = vld [vmem:[%s4667 + $0x28] sm:$0xf]
          %v4679 = vld [vmem:[%s4667 + $0x2c] sm:$0xf]
          %v4680 = vld [vmem:[%s4667 + $0x30] sm:$0xf]
          %v4681 = vld [vmem:[%s4667 + $0x34] sm:$0xf]
          %v4682 = vld [vmem:[%s4667 + $0x38] sm:$0xf]
          %v4683 = vld [vmem:[%s4667 + $0x3c] sm:$0xf]
          %v4684 = vpack.c.b16 %v4532, %v4531
          %v4685 = vpack.c.b16 %v4534, %v4533
          %v4704 = vunpack.c.l.b16 %v4668
          %v4705 = vunpack.c.l.b16 %v4669
          %v4706 = vunpack.c.l.b16 %v4670
          %v4707 = vunpack.c.l.b16 %v4671
          %v4708 = vunpack.c.l.b16 %v4672
          %v4709 = vunpack.c.l.b16 %v4673
          %v4710 = vunpack.c.l.b16 %v4674
          %v4711 = vunpack.c.l.b16 %v4675
          %v4712 = vunpack.c.l.b16 %v4676
          %v4713 = vunpack.c.l.b16 %v4677
          %v4714 = vunpack.c.l.b16 %v4678
          %v4715 = vunpack.c.l.b16 %v4679
          %v4716 = vunpack.c.l.b16 %v4680
          %v4717 = vunpack.c.l.b16 %v4681
          %v4718 = vunpack.c.l.b16 %v4682
          %v4719 = vunpack.c.l.b16 %v4683
          %v4720 = vpack.c.b16 %v4705, %v4704
          %v4721 = vpack.c.b16 %v4707, %v4706
          %v4722 = vpack.c.b16 %v4709, %v4708
          %v4723 = vpack.c.b16 %v4711, %v4710
          %v4724 = vpack.c.b16 %v4713, %v4712
          %v4725 = vpack.c.b16 %v4715, %v4714
          %v4726 = vpack.c.b16 %v4717, %v4716
          %v4727 = vpack.c.b16 %v4719, %v4718
          %4736 = vmatprep.subr.bf16.mxu0 0
          %4737 = vmatpush1.bf16.msra.mxu0 %v4720
          %4738 = vmatprep.subr.bf16.mxu0 0
          %4739 = vmatpush1.bf16.msra.mxu0 %v4721
          %4740 = vmatprep.subr.bf16.mxu0 0
          %4741 = vmatpush1.bf16.msra.mxu0 %v4722
          %4742 = vmatprep.subr.bf16.mxu0 0
          %4743 = vmatpush1.bf16.msra.mxu0 %v4723
          %4744 = vmatprep.subr.bf16.mxu0 0
          %4745 = vmatpush1.bf16.msra.mxu0 %v4724
          %4746 = vmatprep.subr.bf16.mxu0 0
          %4747 = vmatpush1.bf16.msra.mxu0 %v4725
          %4748 = vmatprep.subr.bf16.mxu0 0
          %4749 = vmatpush1.bf16.msra.mxu0 %v4726
          %4750 = vmatprep.subr.bf16.mxu0 0
          %4751 = vmatpush1.bf16.msra.mxu0 %v4727
          %4752 = vmatprep.subr.bf16.mxu0 0
          %4753 = vmatpush1.bf16.msra.mxu0 0
          %4754 = vmatprep.subr.bf16.mxu0 0
          %4755 = vmatpush1.bf16.msra.mxu0 0
          %4756 = vmatprep.subr.bf16.mxu0 0
          %4757 = vmatpush1.bf16.msra.mxu0 0
          %4758 = vmatprep.subr.bf16.mxu0 0
          %4759 = vmatpush1.bf16.msra.mxu0 0
          %4760 = vmatprep.subr.bf16.mxu0 0
          %4761 = vmatpush1.bf16.msra.mxu0 0
          %4762 = vmatprep.subr.bf16.mxu0 0
          %4763 = vmatpush1.bf16.msra.mxu0 0
          %4764 = vmatprep.subr.bf16.mxu0 0
          %4765 = vmatpush1.bf16.msra.mxu0 0
          %4766 = vmatprep.subr.bf16.mxu0 0
          %4767 = vmatpush1.bf16.msra.mxu0 0
          %4768 = vmatprep.mubr.bf16.mxu0 0
          %4769 = vmatmul.mubr.bf16.gmra.mrb[0].mxu0 %v4684
          %v4770 = vpop.f32.mrb[0].mxu0
          %v4771 = vadd.f32 0.0, %v4770
          %v4772 = vpop.f32.mrb[0].mxu0
          %v4773 = vpop.f32.mrb[0].mxu0
          %v4774 = vadd.f32 0.0, %v4773
          %v4775 = vpop.f32.mrb[0].mxu0
          %4776 = vmatprep.mubr.bf16.mxu0 0
          %4777 = vmatmul.mubr.bf16.gmra.mrb[0].mxu0 %v4685
          %v4778 = vpop.f32.mrb[0].mxu0
          %v4779 = vadd.f32 0.0, %v4778
          %v4780 = vpop.f32.mrb[0].mxu0
          %v4781 = vpop.f32.mrb[0].mxu0
          %v4782 = vadd.f32 0.0, %v4781
          %v4783 = vpop.f32.mrb[0].mxu0
          %4784 = vdwg.mxu0
          %v4785 = vadd.f32 %v4663, %v4771
          %v4786 = vadd.f32 %v4664, %v4774
          %v4787 = vadd.f32 %v4665, %v4779
          %v4788 = vadd.f32 %v4666, %v4782
          %v4789 = vld [vmem:[#allocation3 + $0x14] sm:$0x7]
          %s4790 = scalar_lea.vmem %s7, 320
          %v4791 = vld [vmem:[%s4790] sm:$0xf]
          %v4792 = vld [vmem:[%s4790 + $0x4] sm:$0xf]
          %v4793 = vld [vmem:[%s4790 + $0x8] sm:$0xf]
          %v4794 = vld [vmem:[%s4790 + $0xc] sm:$0xf]
          %v4795 = vld [vmem:[%s4790 + $0x10] sm:$0xf]
          %v4796 = vld [vmem:[%s4790 + $0x14] sm:$0xf]
          %v4797 = vld [vmem:[%s4790 + $0x18] sm:$0xf]
          %v4798 = vld [vmem:[%s4790 + $0x1c] sm:$0xf]
          %v4799 = vld [vmem:[%s4790 + $0x20] sm:$0xf]
          %v4800 = vld [vmem:[%s4790 + $0x24] sm:$0xf]
          %v4801 = vld [vmem:[%s4790 + $0x28] sm:$0xf]
          %v4802 = vld [vmem:[%s4790 + $0x2c] sm:$0xf]
          %v4803 = vld [vmem:[%s4790 + $0x30] sm:$0xf]
          %v4804 = vld [vmem:[%s4790 + $0x34] sm:$0xf]
          %v4805 = vld [vmem:[%s4790 + $0x38] sm:$0xf]
          %v4806 = vld [vmem:[%s4790 + $0x3c] sm:$0xf]
          %v4808 = vunpack.c.l.b16 %v4789
          %v4809 = vpack.c.b16 %v4808, %v4533
          %v4811 = vshrl.u32 %v4684, 16
          %v4813 = vshll.u32 %v4684, 16
          %v4815 = vrot.slane %v4813, 1
          %v4816 = vor.u32 %v4811, %v4815
          %v4818 = vshll.u32 %v4809, 16
          %v4820 = vrot.slane %v4818, 1
          %v4821 = vsel %vm2121, %v4816, %v4820
          %v4822 = vshrl.u32 %v4809, 16
          %v4824 = vor.u32 %v4822, %v4820
          %v4843 = vunpack.c.l.b16 %v4791
          %v4844 = vunpack.c.l.b16 %v4792
          %v4845 = vunpack.c.l.b16 %v4793
          %v4846 = vunpack.c.l.b16 %v4794
          %v4847 = vunpack.c.l.b16 %v4795
          %v4848 = vunpack.c.l.b16 %v4796
          %v4849 = vunpack.c.l.b16 %v4797
          %v4850 = vunpack.c.l.b16 %v4798
          %v4851 = vunpack.c.l.b16 %v4799
          %v4852 = vunpack.c.l.b16 %v4800
          %v4853 = vunpack.c.l.b16 %v4801
          %v4854 = vunpack.c.l.b16 %v4802
          %v4855 = vunpack.c.l.b16 %v4803
          %v4856 = vunpack.c.l.b16 %v4804
          %v4857 = vunpack.c.l.b16 %v4805
          %v4858 = vunpack.c.l.b16 %v4806
          %v4859 = vpack.c.b16 %v4844, %v4843
          %v4860 = vpack.c.b16 %v4846, %v4845
          %v4861 = vpack.c.b16 %v4848, %v4847
          %v4862 = vpack.c.b16 %v4850, %v4849
          %v4863 = vpack.c.b16 %v4852, %v4851
          %v4864 = vpack.c.b16 %v4854, %v4853
          %v4865 = vpack.c.b16 %v4856, %v4855
          %v4866 = vpack.c.b16 %v4858, %v4857
          %4875 = vmatprep.subr.bf16.mxu0 0
          %4876 = vmatpush1.bf16.msra.mxu0 %v4859
          %4877 = vmatprep.subr.bf16.mxu0 0
          %4878 = vmatpush1.bf16.msra.mxu0 %v4860
          %4879 = vmatprep.subr.bf16.mxu0 0
          %4880 = vmatpush1.bf16.msra.mxu0 %v4861
          %4881 = vmatprep.subr.bf16.mxu0 0
          %4882 = vmatpush1.bf16.msra.mxu0 %v4862
          %4883 = vmatprep.subr.bf16.mxu0 0
          %4884 = vmatpush1.bf16.msra.mxu0 %v4863
          %4885 = vmatprep.subr.bf16.mxu0 0
          %4886 = vmatpush1.bf16.msra.mxu0 %v4864
          %4887 = vmatprep.subr.bf16.mxu0 0
          %4888 = vmatpush1.bf16.msra.mxu0 %v4865
          %4889 = vmatprep.subr.bf16.mxu0 0
          %4890 = vmatpush1.bf16.msra.mxu0 %v4866
          %4891 = vmatprep.subr.bf16.mxu0 0
          %4892 = vmatpush1.bf16.msra.mxu0 0
          %4893 = vmatprep.subr.bf16.mxu0 0
          %4894 = vmatpush1.bf16.msra.mxu0 0
          %4895 = vmatprep.subr.bf16.mxu0 0
          %4896 = vmatpush1.bf16.msra.mxu0 0
          %4897 = vmatprep.subr.bf16.mxu0 0
          %4898 = vmatpush1.bf16.msra.mxu0 0
          %4899 = vmatprep.subr.bf16.mxu0 0
          %4900 = vmatpush1.bf16.msra.mxu0 0
          %4901 = vmatprep.subr.bf16.mxu0 0
          %4902 = vmatpush1.bf16.msra.mxu0 0
          %4903 = vmatprep.subr.bf16.mxu0 0
          %4904 = vmatpush1.bf16.msra.mxu0 0
          %4905 = vmatprep.subr.bf16.mxu0 0
          %4906 = vmatpush1.bf16.msra.mxu0 0
          %4907 = vmatprep.mubr.bf16.mxu0 0
          %4908 = vmatmul.mubr.bf16.gmra.mrb[0].mxu0 %v4821
          %v4909 = vpop.f32.mrb[0].mxu0
          %v4910 = vadd.f32 0.0, %v4909
          %v4911 = vpop.f32.mrb[0].mxu0
          %v4912 = vpop.f32.mrb[0].mxu0
          %v4913 = vadd.f32 0.0, %v4912
          %v4914 = vpop.f32.mrb[0].mxu0
          %4915 = vmatprep.mubr.bf16.mxu0 0
          %4916 = vmatmul.mubr.bf16.gmra.mrb[0].mxu0 %v4824
          %v4917 = vpop.f32.mrb[0].mxu0
          %v4918 = vadd.f32 0.0, %v4917
          %v4919 = vpop.f32.mrb[0].mxu0
          %v4920 = vpop.f32.mrb[0].mxu0
          %v4921 = vadd.f32 0.0, %v4920
          %v4922 = vpop.f32.mrb[0].mxu0
          %4923 = vdwg.mxu0
          %v4924 = vadd.f32 %v4785, %v4910
          %v4925 = vadd.f32 %v4786, %v4913
          %v4926 = vadd.f32 %v4787, %v4918
          %v4927 = vadd.f32 %v4788, %v4921
          %v4928 = vld [vmem:[#allocation3 + $0x8] sm:$0x8]
          %v4929 = vld [vmem:[#allocation3 + $0xc] sm:$0xf]
          %v4930 = vld [vmem:[#allocation3 + $0x10] sm:$0xf]
          %v4931 = vld [vmem:[#allocation3 + $0x14] sm:$0xf]
          %v4932 = vld [vmem:[#allocation3 + $0x18] sm:$0x3]
          %s4933 = scalar_lea.vmem %s7, 384
          %v4934 = vld [vmem:[%s4933] sm:$0xf]
          %v4935 = vld [vmem:[%s4933 + $0x4] sm:$0xf]
          %v4936 = vld [vmem:[%s4933 + $0x8] sm:$0xf]
          %v4937 = vld [vmem:[%s4933 + $0xc] sm:$0xf]
          %v4938 = vld [vmem:[%s4933 + $0x10] sm:$0xf]
          %v4939 = vld [vmem:[%s4933 + $0x14] sm:$0xf]
          %v4940 = vld [vmem:[%s4933 + $0x18] sm:$0xf]
          %v4941 = vld [vmem:[%s4933 + $0x1c] sm:$0xf]
          %v4942 = vld [vmem:[%s4933 + $0x20] sm:$0xf]
          %v4943 = vld [vmem:[%s4933 + $0x24] sm:$0xf]
          %v4944 = vld [vmem:[%s4933 + $0x28] sm:$0xf]
          %v4945 = vld [vmem:[%s4933 + $0x2c] sm:$0xf]
          %v4946 = vld [vmem:[%s4933 + $0x30] sm:$0xf]
          %v4947 = vld [vmem:[%s4933 + $0x34] sm:$0xf]
          %v4948 = vld [vmem:[%s4933 + $0x38] sm:$0xf]
          %v4949 = vld [vmem:[%s4933 + $0x3c] sm:$0xf]
          %v4955 = vunpack.c.l.b16 %v4928
          %v4956 = vunpack.c.l.b16 %v4929
          %v4957 = vunpack.c.l.b16 %v4930
          %v4958 = vunpack.c.l.b16 %v4931
          %v4959 = vunpack.c.l.b16 %v4932
          %v4960 = vpack.c.b16 %v4956, %v4955
          %v4961 = vpack.c.b16 %v4958, %v4957
          %v4962 = vpack.c.b16 %v4959, %v4959
          %v4964 = vshrl.u32 %v4960, 16
          %v4966 = vrot.slane %v4964, 3
          %v4967 = vshll.u32 %v4960, 16
          %v4969 = vrot.slane %v4967, 4
          %v4970 = vor.u32 %v4966, %v4969
          %v4972 = vshrl.u32 %v4961, 16
          %v4974 = vrot.slane %v4972, 3
          %v4975 = vshll.u32 %v4961, 16
          %v4977 = vrot.slane %v4975, 4
          %v4978 = vor.u32 %v4974, %v4977
          %v4979 = vsel %vm1824, %v4970, %v4978
          %v4981 = vshrl.u32 %v4962, 16
          %v4983 = vrot.slane %v4981, 3
          %v4984 = vshll.u32 %v4962, 16
          %v4986 = vrot.slane %v4984, 4
          %v4987 = vor.u32 %v4983, %v4986
          %v4988 = vsel %vm1824, %v4978, %v4987
          %v5007 = vunpack.c.l.b16 %v4934
          %v5008 = vunpack.c.l.b16 %v4935
          %v5009 = vunpack.c.l.b16 %v4936
          %v5010 = vunpack.c.l.b16 %v4937
          %v5011 = vunpack.c.l.b16 %v4938
          %v5012 = vunpack.c.l.b16 %v4939
          %v5013 = vunpack.c.l.b16 %v4940
          %v5014 = vunpack.c.l.b16 %v4941
          %v5015 = vunpack.c.l.b16 %v4942
          %v5016 = vunpack.c.l.b16 %v4943
          %v5017 = vunpack.c.l.b16 %v4944
          %v5018 = vunpack.c.l.b16 %v4945
          %v5019 = vunpack.c.l.b16 %v4946
          %v5020 = vunpack.c.l.b16 %v4947
          %v5021 = vunpack.c.l.b16 %v4948
          %v5022 = vunpack.c.l.b16 %v4949
          %v5023 = vpack.c.b16 %v5008, %v5007
          %v5024 = vpack.c.b16 %v5010, %v5009
          %v5025 = vpack.c.b16 %v5012, %v5011
          %v5026 = vpack.c.b16 %v5014, %v5013
          %v5027 = vpack.c.b16 %v5016, %v5015
          %v5028 = vpack.c.b16 %v5018, %v5017
          %v5029 = vpack.c.b16 %v5020, %v5019
          %v5030 = vpack.c.b16 %v5022, %v5021
          %5039 = vmatprep.subr.bf16.mxu0 0
          %5040 = vmatpush1.bf16.msra.mxu0 %v5023
          %5041 = vmatprep.subr.bf16.mxu0 0
          %5042 = vmatpush1.bf16.msra.mxu0 %v5024
          %5043 = vmatprep.subr.bf16.mxu0 0
          %5044 = vmatpush1.bf16.msra.mxu0 %v5025
          %5045 = vmatprep.subr.bf16.mxu0 0
          %5046 = vmatpush1.bf16.msra.mxu0 %v5026
          %5047 = vmatprep.subr.bf16.mxu0 0
          %5048 = vmatpush1.bf16.msra.mxu0 %v5027
          %5049 = vmatprep.subr.bf16.mxu0 0
          %5050 = vmatpush1.bf16.msra.mxu0 %v5028
          %5051 = vmatprep.subr.bf16.mxu0 0
          %5052 = vmatpush1.bf16.msra.mxu0 %v5029
          %5053 = vmatprep.subr.bf16.mxu0 0
          %5054 = vmatpush1.bf16.msra.mxu0 %v5030
          %5055 = vmatprep.subr.bf16.mxu0 0
          %5056 = vmatpush1.bf16.msra.mxu0 0
          %5057 = vmatprep.subr.bf16.mxu0 0
          %5058 = vmatpush1.bf16.msra.mxu0 0
          %5059 = vmatprep.subr.bf16.mxu0 0
          %5060 = vmatpush1.bf16.msra.mxu0 0
          %5061 = vmatprep.subr.bf16.mxu0 0
          %5062 = vmatpush1.bf16.msra.mxu0 0
          %5063 = vmatprep.subr.bf16.mxu0 0
          %5064 = vmatpush1.bf16.msra.mxu0 0
          %5065 = vmatprep.subr.bf16.mxu0 0
          %5066 = vmatpush1.bf16.msra.mxu0 0
          %5067 = vmatprep.subr.bf16.mxu0 0
          %5068 = vmatpush1.bf16.msra.mxu0 0
          %5069 = vmatprep.subr.bf16.mxu0 0
          %5070 = vmatpush1.bf16.msra.mxu0 0
          %5071 = vmatprep.mubr.bf16.mxu0 0
          %5072 = vmatmul.mubr.bf16.gmra.mrb[0].mxu0 %v4979
          %v5073 = vpop.f32.mrb[0].mxu0
          %v5074 = vadd.f32 0.0, %v5073
          %v5075 = vpop.f32.mrb[0].mxu0
          %v5076 = vpop.f32.mrb[0].mxu0
          %v5077 = vadd.f32 0.0, %v5076
          %v5078 = vpop.f32.mrb[0].mxu0
          %5079 = vmatprep.mubr.bf16.mxu0 0
          %5080 = vmatmul.mubr.bf16.gmra.mrb[0].mxu0 %v4988
          %v5081 = vpop.f32.mrb[0].mxu0
          %v5082 = vadd.f32 0.0, %v5081
          %v5083 = vpop.f32.mrb[0].mxu0
          %v5084 = vpop.f32.mrb[0].mxu0
          %v5085 = vadd.f32 0.0, %v5084
          %v5086 = vpop.f32.mrb[0].mxu0
          %5087 = vdwg.mxu0
          %v5088 = vadd.f32 %v4924, %v5074
          %v5089 = vadd.f32 %v4925, %v5077
          %v5090 = vadd.f32 %v4926, %v5082
          %v5091 = vadd.f32 %v4927, %v5085
          %s5092 = scalar_lea.vmem %s7, 448
          %v5093 = vld [vmem:[%s5092] sm:$0xf]
          %v5094 = vld [vmem:[%s5092 + $0x4] sm:$0xf]
          %v5095 = vld [vmem:[%s5092 + $0x8] sm:$0xf]
          %v5096 = vld [vmem:[%s5092 + $0xc] sm:$0xf]
          %v5097 = vld [vmem:[%s5092 + $0x10] sm:$0xf]
          %v5098 = vld [vmem:[%s5092 + $0x14] sm:$0xf]
          %v5099 = vld [vmem:[%s5092 + $0x18] sm:$0xf]
          %v5100 = vld [vmem:[%s5092 + $0x1c] sm:$0xf]
          %v5101 = vld [vmem:[%s5092 + $0x20] sm:$0xf]
          %v5102 = vld [vmem:[%s5092 + $0x24] sm:$0xf]
          %v5103 = vld [vmem:[%s5092 + $0x28] sm:$0xf]
          %v5104 = vld [vmem:[%s5092 + $0x2c] sm:$0xf]
          %v5105 = vld [vmem:[%s5092 + $0x30] sm:$0xf]
          %v5106 = vld [vmem:[%s5092 + $0x34] sm:$0xf]
          %v5107 = vld [vmem:[%s5092 + $0x38] sm:$0xf]
          %v5108 = vld [vmem:[%s5092 + $0x3c] sm:$0xf]
          %v5109 = vpack.c.b16 %v4957, %v4956
          %v5110 = vpack.c.b16 %v4959, %v4958
          %v5129 = vunpack.c.l.b16 %v5093
          %v5130 = vunpack.c.l.b16 %v5094
          %v5131 = vunpack.c.l.b16 %v5095
          %v5132 = vunpack.c.l.b16 %v5096
          %v5133 = vunpack.c.l.b16 %v5097
          %v5134 = vunpack.c.l.b16 %v5098
          %v5135 = vunpack.c.l.b16 %v5099
          %v5136 = vunpack.c.l.b16 %v5100
          %v5137 = vunpack.c.l.b16 %v5101
          %v5138 = vunpack.c.l.b16 %v5102
          %v5139 = vunpack.c.l.b16 %v5103
          %v5140 = vunpack.c.l.b16 %v5104
          %v5141 = vunpack.c.l.b16 %v5105
          %v5142 = vunpack.c.l.b16 %v5106
          %v5143 = vunpack.c.l.b16 %v5107
          %v5144 = vunpack.c.l.b16 %v5108
          %v5145 = vpack.c.b16 %v5130, %v5129
          %v5146 = vpack.c.b16 %v5132, %v5131
          %v5147 = vpack.c.b16 %v5134, %v5133
          %v5148 = vpack.c.b16 %v5136, %v5135
          %v5149 = vpack.c.b16 %v5138, %v5137
          %v5150 = vpack.c.b16 %v5140, %v5139
          %v5151 = vpack.c.b16 %v5142, %v5141
          %v5152 = vpack.c.b16 %v5144, %v5143
          %5161 = vmatprep.subr.bf16.mxu0 0
          %5162 = vmatpush1.bf16.msra.mxu0 %v5145
          %5163 = vmatprep.subr.bf16.mxu0 0
          %5164 = vmatpush1.bf16.msra.mxu0 %v5146
          %5165 = vmatprep.subr.bf16.mxu0 0
          %5166 = vmatpush1.bf16.msra.mxu0 %v5147
          %5167 = vmatprep.subr.bf16.mxu0 0
          %5168 = vmatpush1.bf16.msra.mxu0 %v5148
          %5169 = vmatprep.subr.bf16.mxu0 0
          %5170 = vmatpush1.bf16.msra.mxu0 %v5149
          %5171 = vmatprep.subr.bf16.mxu0 0
          %5172 = vmatpush1.bf16.msra.mxu0 %v5150
          %5173 = vmatprep.subr.bf16.mxu0 0
          %5174 = vmatpush1.bf16.msra.mxu0 %v5151
          %5175 = vmatprep.subr.bf16.mxu0 0
          %5176 = vmatpush1.bf16.msra.mxu0 %v5152
          %5177 = vmatprep.subr.bf16.mxu0 0
          %5178 = vmatpush1.bf16.msra.mxu0 0
          %5179 = vmatprep.subr.bf16.mxu0 0
          %5180 = vmatpush1.bf16.msra.mxu0 0
          %5181 = vmatprep.subr.bf16.mxu0 0
          %5182 = vmatpush1.bf16.msra.mxu0 0
          %5183 = vmatprep.subr.bf16.mxu0 0
          %5184 = vmatpush1.bf16.msra.mxu0 0
          %5185 = vmatprep.subr.bf16.mxu0 0
          %5186 = vmatpush1.bf16.msra.mxu0 0
          %5187 = vmatprep.subr.bf16.mxu0 0
          %5188 = vmatpush1.bf16.msra.mxu0 0
          %5189 = vmatprep.subr.bf16.mxu0 0
          %5190 = vmatpush1.bf16.msra.mxu0 0
          %5191 = vmatprep.subr.bf16.mxu0 0
          %5192 = vmatpush1.bf16.msra.mxu0 0
          %5193 = vmatprep.mubr.bf16.mxu0 0
          %5194 = vmatmul.mubr.bf16.gmra.mrb[0].mxu0 %v5109
          %v5195 = vpop.f32.mrb[0].mxu0
          %v5196 = vadd.f32 0.0, %v5195
          %v5197 = vpop.f32.mrb[0].mxu0
          %v5198 = vpop.f32.mrb[0].mxu0
          %v5199 = vadd.f32 0.0, %v5198
          %v5200 = vpop.f32.mrb[0].mxu0
          %5201 = vmatprep.mubr.bf16.mxu0 0
          %5202 = vmatmul.mubr.bf16.gmra.mrb[0].mxu0 %v5110
          %v5203 = vpop.f32.mrb[0].mxu0
          %v5204 = vadd.f32 0.0, %v5203
          %v5205 = vpop.f32.mrb[0].mxu0
          %v5206 = vpop.f32.mrb[0].mxu0
          %v5207 = vadd.f32 0.0, %v5206
          %v5208 = vpop.f32.mrb[0].mxu0
          %5209 = vdwg.mxu0
          %v5210 = vadd.f32 %v5088, %v5196
          %v5211 = vadd.f32 %v5089, %v5199
          %v5212 = vadd.f32 %v5090, %v5204
          %v5213 = vadd.f32 %v5091, %v5207
          %v5214 = vld [vmem:[#allocation3 + $0x18] sm:$0x7]
          %s5215 = scalar_lea.vmem %s7, 512
          %v5216 = vld [vmem:[%s5215] sm:$0xf]
          %v5217 = vld [vmem:[%s5215 + $0x4] sm:$0xf]
          %v5218 = vld [vmem:[%s5215 + $0x8] sm:$0xf]
          %v5219 = vld [vmem:[%s5215 + $0xc] sm:$0xf]
          %v5220 = vld [vmem:[%s5215 + $0x10] sm:$0xf]
          %v5221 = vld [vmem:[%s5215 + $0x14] sm:$0xf]
          %v5222 = vld [vmem:[%s5215 + $0x18] sm:$0xf]
          %v5223 = vld [vmem:[%s5215 + $0x1c] sm:$0xf]
          %v5224 = vld [vmem:[%s5215 + $0x20] sm:$0xf]
          %v5225 = vld [vmem:[%s5215 + $0x24] sm:$0xf]
          %v5226 = vld [vmem:[%s5215 + $0x28] sm:$0xf]
          %v5227 = vld [vmem:[%s5215 + $0x2c] sm:$0xf]
          %v5228 = vld [vmem:[%s5215 + $0x30] sm:$0xf]
          %v5229 = vld [vmem:[%s5215 + $0x34] sm:$0xf]
          %v5230 = vld [vmem:[%s5215 + $0x38] sm:$0xf]
          %v5231 = vld [vmem:[%s5215 + $0x3c] sm:$0xf]
          %v5233 = vunpack.c.l.b16 %v5214
          %v5234 = vpack.c.b16 %v5233, %v4958
          %v5236 = vshrl.u32 %v5109, 16
          %v5238 = vshll.u32 %v5109, 16
          %v5240 = vrot.slane %v5238, 1
          %v5241 = vor.u32 %v5236, %v5240
          %v5243 = vshll.u32 %v5234, 16
          %v5245 = vrot.slane %v5243, 1
          %v5246 = vsel %vm2121, %v5241, %v5245
          %v5247 = vshrl.u32 %v5234, 16
          %v5249 = vor.u32 %v5247, %v5245
          %v5268 = vunpack.c.l.b16 %v5216
          %v5269 = vunpack.c.l.b16 %v5217
          %v5270 = vunpack.c.l.b16 %v5218
          %v5271 = vunpack.c.l.b16 %v5219
          %v5272 = vunpack.c.l.b16 %v5220
          %v5273 = vunpack.c.l.b16 %v5221
          %v5274 = vunpack.c.l.b16 %v5222
          %v5275 = vunpack.c.l.b16 %v5223
          %v5276 = vunpack.c.l.b16 %v5224
          %v5277 = vunpack.c.l.b16 %v5225
          %v5278 = vunpack.c.l.b16 %v5226
          %v5279 = vunpack.c.l.b16 %v5227
          %v5280 = vunpack.c.l.b16 %v5228
          %v5281 = vunpack.c.l.b16 %v5229
          %v5282 = vunpack.c.l.b16 %v5230
          %v5283 = vunpack.c.l.b16 %v5231
          %v5284 = vpack.c.b16 %v5269, %v5268
          %v5285 = vpack.c.b16 %v5271, %v5270
          %v5286 = vpack.c.b16 %v5273, %v5272
          %v5287 = vpack.c.b16 %v5275, %v5274
          %v5288 = vpack.c.b16 %v5277, %v5276
          %v5289 = vpack.c.b16 %v5279, %v5278
          %v5290 = vpack.c.b16 %v5281, %v5280
          %v5291 = vpack.c.b16 %v5283, %v5282
          %5300 = vmatprep.subr.bf16.mxu0 0
          %5301 = vmatpush1.bf16.msra.mxu0 %v5284
          %5302 = vmatprep.subr.bf16.mxu0 0
          %5303 = vmatpush1.bf16.msra.mxu0 %v5285
          %5304 = vmatprep.subr.bf16.mxu0 0
          %5305 = vmatpush1.bf16.msra.mxu0 %v5286
          %5306 = vmatprep.subr.bf16.mxu0 0
          %5307 = vmatpush1.bf16.msra.mxu0 %v5287
          %5308 = vmatprep.subr.bf16.mxu0 0
          %5309 = vmatpush1.bf16.msra.mxu0 %v5288
          %5310 = vmatprep.subr.bf16.mxu0 0
          %5311 = vmatpush1.bf16.msra.mxu0 %v5289
          %5312 = vmatprep.subr.bf16.mxu0 0
          %5313 = vmatpush1.bf16.msra.mxu0 %v5290
          %5314 = vmatprep.subr.bf16.mxu0 0
          %5315 = vmatpush1.bf16.msra.mxu0 %v5291
          %5316 = vmatprep.subr.bf16.mxu0 0
          %5317 = vmatpush1.bf16.msra.mxu0 0
          %5318 = vmatprep.subr.bf16.mxu0 0
          %5319 = vmatpush1.bf16.msra.mxu0 0
          %5320 = vmatprep.subr.bf16.mxu0 0
          %5321 = vmatpush1.bf16.msra.mxu0 0
          %5322 = vmatprep.subr.bf16.mxu0 0
          %5323 = vmatpush1.bf16.msra.mxu0 0
          %5324 = vmatprep.subr.bf16.mxu0 0
          %5325 = vmatpush1.bf16.msra.mxu0 0
          %5326 = vmatprep.subr.bf16.mxu0 0
          %5327 = vmatpush1.bf16.msra.mxu0 0
          %5328 = vmatprep.subr.bf16.mxu0 0
          %5329 = vmatpush1.bf16.msra.mxu0 0
          %5330 = vmatprep.subr.bf16.mxu0 0
          %5331 = vmatpush1.bf16.msra.mxu0 0
          %5332 = vmatprep.mubr.bf16.mxu0 0
          %5333 = vmatmul.mubr.bf16.gmra.mrb[0].mxu0 %v5246
          %v5334 = vpop.f32.mrb[0].mxu0
          %v5335 = vadd.f32 0.0, %v5334
          %v5336 = vpop.f32.mrb[0].mxu0
          %v5337 = vpop.f32.mrb[0].mxu0
          %v5338 = vadd.f32 0.0, %v5337
          %v5339 = vpop.f32.mrb[0].mxu0
          %5340 = vmatprep.mubr.bf16.mxu0 0
          %5341 = vmatmul.mubr.bf16.gmra.mrb[0].mxu0 %v5249
          %v5342 = vpop.f32.mrb[0].mxu0
          %v5343 = vadd.f32 0.0, %v5342
          %v5344 = vpop.f32.mrb[0].mxu0
          %v5345 = vpop.f32.mrb[0].mxu0
          %v5346 = vadd.f32 0.0, %v5345
          %v5347 = vpop.f32.mrb[0].mxu0
          %5348 = vdwg.mxu0
          %v5349 = vadd.f32 %v5210, %v5335
          %v5350 = vadd.f32 %v5211, %v5338
          %v5351 = vadd.f32 %v5212, %v5343
          %v5352 = vadd.f32 %v5213, %v5346
          %v5354 = vlaneseq
          %v5355 = vshrl.u32 %v5354, 7
          %v5356 = vsub.s32 0, %v5355
          %v5357 = vrot.slane %v469, %v5356
          %v5359 = vmul.f32 %v5349, %v5357
          %v5360 = vmul.f32 %v5350, %v5357
          %v5361 = vmul.f32 %v5351, %v5357
          %v5362 = vmul.f32 %v5352, %v5357
          %v5364 = vlaneseq
          %v5365 = vshrl.u32 %v5364, 7
          %v5366 = vsub.s32 0, %v5365
          %v5367 = vrot.slane %v470, %v5366
          %v5369 = vadd.f32 %v5359, %v5367
          %v5370 = vadd.f32 %v5360, %v5367
          %v5371 = vadd.f32 %v5361, %v5367
          %v5372 = vadd.f32 %v5362, %v5367
          %v5373 = vmax.f32 %v5369, 0.0
          %v5374 = vmax.f32 %v5370, 0.0
          %v5375 = vmax.f32 %v5371, 0.0
          %v5376 = vmax.f32 %v5372, 0.0
          %v5377 = vadd.f32 %v5373, %v5374
          %v5378 = vadd.f32 %v5377, %v5375
          %v5379 = vadd.f32 %v5378, %v5376
          %vm5380 = vcmask 1043456
          %v5381 = vsel %vm5380, %v5379, 0.0
          %v5382 = vrot.slane %v5381, 4
          %v5383 = vadd.f32 %v5381, %v5382
          %v5384 = vrot.slane %v5383, 2
          %v5385 = vadd.f32 %v5383, %v5384
          %v5386 = vrot.slane %v5385, 1
          %v5387 = vadd.f32 %v5385, %v5386
          %v5388 = vmul.f32 %v5387, 0.0625
          %s5389 = scalar_lea.vmem [#allocation6], %s472
          %5390 = vst [vmem:[%s5389] sm:$0x1] %v5388
        $region73: #{mnistnet_forward.1} parent=67 // loop_footer
          %s476 = sadd.s32 1, %s472
        $region74: #{mnistnet_forward.1} parent=67 // loop_footer_branch
          %471 = sbr.rel target = $region70
        $region75: #{mnistnet_forward.1} parent=67 // loop_exit
          _
        %v5391 = vld [vmem:[#allocation6] sm:$0xff]
        %v5392 = vpack.c.bf16 %v5391, %v5391
        %v5393 = vld [vmem:[%s10] sm:$0xf]
        %v5394 = vld [vmem:[%s10 + $0x4] sm:$0xf]
        %v5395 = vld [vmem:[%s10 + $0x8] sm:$0xf]
        %v5396 = vld [vmem:[%s10 + $0xc] sm:$0xf]
        %v5397 = vld [vmem:[%s10 + $0x10] sm:$0xf]
        %v5398 = vld [vmem:[%s10 + $0x14] sm:$0xf]
        %v5399 = vld [vmem:[%s10 + $0x18] sm:$0xf]
        %v5400 = vld [vmem:[%s10 + $0x1c] sm:$0xf]
        %v5401 = vld [vmem:[%s10 + $0x20] sm:$0xf]
        %v5402 = vld [vmem:[%s10 + $0x24] sm:$0xf]
        %v5403 = vld [vmem:[%s10 + $0x28] sm:$0xf]
        %v5404 = vld [vmem:[%s10 + $0x2c] sm:$0xf]
        %v5405 = vld [vmem:[%s10 + $0x30] sm:$0xf]
        %v5406 = vld [vmem:[%s10 + $0x34] sm:$0xf]
        %v5407 = vld [vmem:[%s10 + $0x38] sm:$0xf]
        %v5408 = vld [vmem:[%s10 + $0x3c] sm:$0xf]
        %v5409 = vld [vmem:[%s11] sm:$0x1]
        %v5411 = vlaneseq
        %v5412 = vshrl.u32 %v5411, 7
        %v5413 = vsub.s32 0, %v5412
        %v5414 = vrot.slane %v5409, %v5413
        %v5432 = vunpack.c.l.b16 %v5393
        %v5433 = vunpack.c.l.b16 %v5394
        %v5434 = vunpack.c.l.b16 %v5395
        %v5435 = vunpack.c.l.b16 %v5396
        %v5436 = vunpack.c.l.b16 %v5397
        %v5437 = vunpack.c.l.b16 %v5398
        %v5438 = vunpack.c.l.b16 %v5399
        %v5439 = vunpack.c.l.b16 %v5400
        %v5440 = vunpack.c.l.b16 %v5401
        %v5441 = vunpack.c.l.b16 %v5402
        %v5442 = vunpack.c.l.b16 %v5403
        %v5443 = vunpack.c.l.b16 %v5404
        %v5444 = vunpack.c.l.b16 %v5405
        %v5445 = vunpack.c.l.b16 %v5406
        %v5446 = vunpack.c.l.b16 %v5407
        %v5447 = vunpack.c.l.b16 %v5408
        %v5448 = vpack.c.b16 %v5433, %v5432
        %v5449 = vpack.c.b16 %v5435, %v5434
        %v5450 = vpack.c.b16 %v5437, %v5436
        %v5451 = vpack.c.b16 %v5439, %v5438
        %v5452 = vpack.c.b16 %v5441, %v5440
        %v5453 = vpack.c.b16 %v5443, %v5442
        %v5454 = vpack.c.b16 %v5445, %v5444
        %v5455 = vpack.c.b16 %v5447, %v5446
        %5464 = vmatprep.subr.bf16.mxu0 0
        %5465 = vmatpush1.bf16.msra.mxu0 %v5448
        %5466 = vmatprep.subr.bf16.mxu0 0
        %5467 = vmatpush1.bf16.msra.mxu0 %v5449
        %5468 = vmatprep.subr.bf16.mxu0 0
        %5469 = vmatpush1.bf16.msra.mxu0 %v5450
        %5470 = vmatprep.subr.bf16.mxu0 0
        %5471 = vmatpush1.bf16.msra.mxu0 %v5451
        %5472 = vmatprep.subr.bf16.mxu0 0
        %5473 = vmatpush1.bf16.msra.mxu0 %v5452
        %5474 = vmatprep.subr.bf16.mxu0 0
        %5475 = vmatpush1.bf16.msra.mxu0 %v5453
        %5476 = vmatprep.subr.bf16.mxu0 0
        %5477 = vmatpush1.bf16.msra.mxu0 %v5454
        %5478 = vmatprep.subr.bf16.mxu0 0
        %5479 = vmatpush1.bf16.msra.mxu0 %v5455
        %5480 = vmatprep.subr.bf16.mxu0 0
        %5481 = vmatpush1.bf16.msra.mxu0 0
        %5482 = vmatprep.subr.bf16.mxu0 0
        %5483 = vmatpush1.bf16.msra.mxu0 0
        %5484 = vmatprep.subr.bf16.mxu0 0
        %5485 = vmatpush1.bf16.msra.mxu0 0
        %5486 = vmatprep.subr.bf16.mxu0 0
        %5487 = vmatpush1.bf16.msra.mxu0 0
        %5488 = vmatprep.subr.bf16.mxu0 0
        %5489 = vmatpush1.bf16.msra.mxu0 0
        %5490 = vmatprep.subr.bf16.mxu0 0
        %5491 = vmatpush1.bf16.msra.mxu0 0
        %5492 = vmatprep.subr.bf16.mxu0 0
        %5493 = vmatpush1.bf16.msra.mxu0 0
        %5494 = vmatprep.subr.bf16.mxu0 0
        %5495 = vmatpush1.bf16.msra.mxu0 0
        %5496 = vmatprep.mubr.bf16.mxu0 0
        %5497 = vmatmul.mubr.bf16.gmra.mrb[0].mxu0 %v5392
        %v5498 = vpop.f32.mrb[0].mxu0
        %v5499 = vadd.f32 %v5414, %v5498
        %v5500 = vpop.f32.mrb[0].mxu0
        %v5501 = vpop.f32.mrb[0].mxu0
        %v5502 = vpop.f32.mrb[0].mxu0
        %5503 = vdwg.mxu0
        %5504 = vmax.xlane.f32.xlu0 %v5499
        %v5505 = vpop.xlane.xlu0 %5504
        %v5506 = vsub.f32 %v5499, %v5505
        %v5507 = vmul.f32 %v5506, 1.442695
        %v5508 = vpow.pop %v5507
        %5509 = vadd.xlane.f32.xlu0 %v5508
        %v5510 = vpop.xlane.xlu0 %5509
        %v5511 = vlog2.pop %v5510
        %v5512 = vmul.f32 %v5511, 0.6931472
        %v5513 = vsub.f32 %v5506, %v5512
        %5514 = vst [vmem:[%s409] sm:$0xff] %v5513
        %s5515 = sand.u32 %s291, 1
        %s5516 = scalar_lea.sflag [#allocation8], %s5515
        %s5517 = sand.u32 %s291, 1
        %s5518 = smul.addr %s5517, 8
        %s5519 = scalar_lea.vmem [#allocation7], %s5518
        // Predicated region
        $region83: #{mnistnet_forward.1} parent=67 // pred_check
          %p5520 = pneg %p301
        $region84: #{mnistnet_forward.1} parent=67 // pred_check_branch
          %5522 = sbr.rel (%p5520) target = $region86
        $region85: #{mnistnet_forward.1} parent=67 // pred_region
          %s5524 = ssub.s32 128, 128
          %5525 = vsyncadd %s5516, %s5524
          %s5526 = smul.addr %s26, 128
          %s5527 = scalar_lea.hbm %s12, %s5526
          %s5529 = sshll.u32 %s5519, 4
          %s5530 = int_to_ptr.vmem [resolvable:$true] %s5529
          %5532 = dma.vmem_to_hbm [thread:$0]  %s5530, 128, %s5527, %s5516
        $region86: #{mnistnet_forward.1} parent=67 // pred_fallthru
          _
      $region68: #{mnistnet_forward.1} parent=5 // pred_fallthru
        _
      %p5533 = scmp.le.s32.totalorder 2, %s21
      // Predicated region
      $region87: #{mnistnet_forward.1} parent=5 // pred_check
        %p5534 = pneg %p5533
      $region88: #{mnistnet_forward.1} parent=5 // pred_check_branch
        %5536 = sbr.rel (%p5534) target = $region90
      $region89: #{mnistnet_forward.1} parent=5 // pred_region
        %s5537 = ssub.s32 %s21, 2
        // Predicated region
        $region91: #{mnistnet_forward.1} parent=89 // pred_check
          %p5538 = pneg %p307
        $region92: #{mnistnet_forward.1} parent=89 // pred_check_branch
          %5540 = sbr.rel (%p5538) target = $region94
        $region93: #{mnistnet_forward.1} parent=89 // pred_region
          %s5541 = sand.u32 %s292, 1
          %s5542 = scalar_lea.sflag [#allocation8], %s5541
          %s5543 = sand.u32 %s292, 1
          %s5544 = smul.addr %s5543, 8
          %s5545 = scalar_lea.vmem [#allocation7], %s5544
          %5546 = dma.done %s5542, 128
        $region94: #{mnistnet_forward.1} parent=89 // pred_fallthru
          _
      $region90: #{mnistnet_forward.1} parent=5 // pred_fallthru
        _
    $region6: #{mnistnet_forward.1} parent=1 // loop_footer
      %s25 = sadd.s32 1, %s21
    $region7: #{mnistnet_forward.1} parent=1 // loop_footer_branch
      %20 = sbr.rel target = $region3
    $region8: #{mnistnet_forward.1} parent=1 // loop_exit
      _
    %5547 = vsyncpa [#allocation8], 1
    %s5548 = scalar_lea.sflag [#allocation8], 1
    %5549 = vsyncpa %s5548, 1

</llo_original>
